<compile_context>
chip_gen: v6e
topology: v6e:2x2x1
jax: 0.10.0
libtpu: 0.0.40
codegen_flags: <defaults>
</compile_context>

<pallas_src>
import functools

import jax
import jax.numpy as jnp
from jax.experimental import pallas as pl
from jax.experimental.pallas import tpu as pltpu

LANE = 128


def _round_up(x, m):
    return ((x + m - 1) // m) * m


@functools.lru_cache(maxsize=None)
def _vmem_limit_bytes():
    """Per-generation VMEM budget: 3/4 of physical, capped at 96 MiB.

    v7x (64 MiB physical) -> 48 MiB; v5e/v6e (128 MiB) -> 96 MiB.
    Conservative 64 MiB fallback if the query is unavailable."""
    cap = 64 * 1024 * 1024
    try:
        info = pltpu.get_tpu_info()
        cap = int(getattr(info, "vmem_capacity_bytes", cap) or cap)
    except Exception:
        pass
    return int(min(cap * 3 // 4, 96 * 1024 * 1024))


# ----------------------------- Pallas kernels ------------------------------

def _mm_bn_split_kernel(x_ref, w_ref, s_ref, b_ref, o1_ref, o2_ref, *, n1):
    """(tm,K) @ (K, n1+n2) on the MXU; fused BN affine + ReLU; two outputs.

    n1 is a multiple of 128, so the column split is lane-tile aligned."""
    acc = jnp.dot(x_ref[...], w_ref[...], preferred_element_type=jnp.float32)
    y = jnp.maximum(acc * s_ref[...] + b_ref[...], 0.0)
    o1_ref[...] = y[:, :n1].astype(o1_ref.dtype)
    o2_ref[...] = y[:, n1:].astype(o2_ref.dtype)


def _dual_mm_bn_res_relu_kernel(a_ref, b_ref, r_ref, wa_ref, wb_ref,
                                s_ref, bias_ref, o_ref):
    """Final 1x1 conv without materializing the channel concat:
       acc = a @ Wa + b @ Wb ; out = relu(acc*scale + bias + residual)."""
    acc = jnp.dot(a_ref[...], wa_ref[...], preferred_element_type=jnp.float32)
    acc = acc + jnp.dot(b_ref[...], wb_ref[...],
                        preferred_element_type=jnp.float32)
    y = acc * s_ref[...] + bias_ref[...] + r_ref[...].astype(jnp.float32)
    o_ref[...] = jnp.maximum(y, 0.0).astype(o_ref.dtype)


def _conv3x3_bn_kernel(xp_ref, w_ref, s_ref, b_ref, o_ref,
                       *, row_tile, Wo, relu):
    """3x3, pad=1, stride=1 conv for one (batch, row-block) grid point.

    xp_ref is the whole spatially padded (H+2, W+2, Cp) image for this batch
    element, kept resident in VMEM by a constant index_map across the
    row-block axis (pipelined by BlockSpec -- no manual DMA, no exposed
    latency).  The kernel builds one (rt*Wo, 9*Cp) im2col patch in VMEM and
    runs a single deep-K MXU dot.  BN affine and ReLU are fused."""
    i = pl.program_id(1)
    row0 = i * row_tile

    taps = []
    for kh in range(3):
        for kw in range(3):
            taps.append(xp_ref[pl.ds(row0 + kh, row_tile), pl.ds(kw, Wo), :])
    patch = jnp.concatenate(taps, axis=-1)               # (rt, Wo, 9*Cp)
    patch = patch.reshape(row_tile * Wo, patch.shape[-1])

    acc = jnp.dot(patch, w_ref[...], preferred_element_type=jnp.float32)
    y = acc * s_ref[...] + b_ref[...]
    if relu:
        y = jnp.maximum(y, 0.0)
    o_ref[...] = y.astype(o_ref.dtype)


# --------------------------- tiling helpers ---------------------------------

def _pick_tm(M, cap):
    """Largest row tile <= cap that is a multiple of 8 and divides M."""
    best = None
    t = 8
    while t <= min(cap, M):
        if M % t == 0:
            best = t
        t += 8
    return best


def _matmul_rows(M, cap=1024):
    """Return (tm, M_padded).  Prefer >=2 grid programs (v7x second core)."""
    tm = _pick_tm(M, cap)
    if tm is None:                       # M not a multiple of 8 -> pad rows
        tm = min(cap, 256)
        return tm, _round_up(M, tm)
    if M // tm < 2:
        for t in range(tm - 8, 0, -8):
            if M % t == 0 and M // t >= 2:
                tm = t
                break
    return tm, M


def _pick_row_tile(Ho, Wo, N, cap_rows=2048):
    """Largest row tile dividing Ho with lane/sublane-friendly output rows.

    When N == 1 avoid collapsing to a single program so v7x's second
    TensorCore gets work."""
    best = 0
    for rt in range(1, Ho + 1):
        if Ho % rt != 0 or (rt * Wo) % 8 != 0 or rt * Wo > cap_rows:
            continue
        if N == 1 and rt == Ho and best > 0:
            continue
        best = rt
    return best if best > 0 else Ho


def _pad2d(a, rows, cols):
    r, c = a.shape
    if rows == r and cols == c:
        return a
    return jnp.pad(a, ((0, rows - r), (0, cols - c)))


def _pad1d(a, n):
    if a.shape[0] == n:
        return a
    return jnp.pad(a, (0, n - a.shape[0]))


def _pad_w3(w9, cin_p, cout_p):
    _, cin, cout = w9.shape
    if cin == cin_p and cout == cout_p:
        return w9
    return jnp.pad(w9, ((0, 0), (0, cin_p - cin), (0, cout_p - cout)))


# --------------------------- kernel wrappers ---------------------------------

def matmul_bn_split(x, w, scale, bias, n1, *, out_dtype=jnp.bfloat16):
    """y = relu((x @ w) * scale + bias); returns (y[:, :n1], y[:, n1:]).

    `w` / `scale` / `bias` are already lane-padded; n1 % 128 == 0."""
    M, K = x.shape
    Nout = w.shape[1]
    n2 = Nout - n1
    tm, Mp = _matmul_rows(M)
    grid = (Mp // tm,)

    xb = _pad2d(x.astype(jnp.bfloat16), Mp, K)
    wb = w.astype(jnp.bfloat16)
    s2 = scale.reshape(1, Nout).astype(jnp.float32)
    b2 = bias.reshape(1, Nout).astype(jnp.float32)

    cost = pl.CostEstimate(
        flops=2 * Mp * K * Nout, transcendentals=0,
        bytes_accessed=Mp * K * 2 + K * Nout * 2 + Mp * Nout * 2)

    o1, o2 = pl.pallas_call(
        functools.partial(_mm_bn_split_kernel, n1=n1),
        grid=grid,
        in_specs=[pl.BlockSpec((tm, K), lambda i: (i, 0)),
                  pl.BlockSpec((K, Nout), lambda i: (0, 0)),
                  pl.BlockSpec((1, Nout), lambda i: (0, 0)),
                  pl.BlockSpec((1, Nout), lambda i: (0, 0))],
        out_specs=(pl.BlockSpec((tm, n1), lambda i: (i, 0)),
                   pl.BlockSpec((tm, n2), lambda i: (i, 0))),
        out_shape=(jax.ShapeDtypeStruct((Mp, n1), out_dtype),
                   jax.ShapeDtypeStruct((Mp, n2), out_dtype)),
        compiler_params=pltpu.CompilerParams(
            dimension_semantics=("parallel",),
            vmem_limit_bytes=_vmem_limit_bytes()),
        cost_estimate=cost,
    )(xb, wb, s2, b2)
    if Mp != M:
        o1, o2 = o1[:M], o2[:M]
    return o1, o2


def dual_matmul_bn_res_relu(a, b, wa, wb, scale, bias, residual,
                            out_dtype=jnp.float32):
    """relu((a @ wa + b @ wb) * scale + bias + residual) -- concat-free.

    Weights/scale/bias are lane-padded; the residual is lane-padded here."""
    M, Ka = a.shape
    Kb = b.shape[1]
    Nout = wa.shape[1]
    assert wb.shape[1] == Nout and b.shape[0] == M and residual.shape[0] == M
    tm, Mp = _matmul_rows(M)
    grid = (Mp // tm,)

    ab = _pad2d(a.astype(jnp.bfloat16), Mp, Ka)
    bb = _pad2d(b.astype(jnp.bfloat16), Mp, Kb)
    rr = _pad2d(residual.astype(jnp.float32), Mp, Nout)
    wab = wa.astype(jnp.bfloat16)
    wbb = wb.astype(jnp.bfloat16)
    s2 = scale.reshape(1, Nout).astype(jnp.float32)
    b2 = bias.reshape(1, Nout).astype(jnp.float32)

    cost = pl.CostEstimate(
        flops=2 * Mp * (Ka + Kb) * Nout, transcendentals=0,
        bytes_accessed=(Mp * (Ka + Kb) + (Ka + Kb) * Nout) * 2
        + Mp * Nout * 4 * 2)

    out = pl.pallas_call(
        _dual_mm_bn_res_relu_kernel,
        grid=grid,
        in_specs=[pl.BlockSpec((tm, Ka), lambda i: (i, 0)),
                  pl.BlockSpec((tm, Kb), lambda i: (i, 0)),
                  pl.BlockSpec((tm, Nout), lambda i: (i, 0)),
                  pl.BlockSpec((Ka, Nout), lambda i: (0, 0)),
                  pl.BlockSpec((Kb, Nout), lambda i: (0, 0)),
                  pl.BlockSpec((1, Nout), lambda i: (0, 0)),
                  pl.BlockSpec((1, Nout), lambda i: (0, 0))],
        out_specs=pl.BlockSpec((tm, Nout), lambda i: (i, 0)),
        out_shape=jax.ShapeDtypeStruct((Mp, Nout), out_dtype),
        compiler_params=pltpu.CompilerParams(
            dimension_semantics=("parallel",),
            vmem_limit_bytes=_vmem_limit_bytes()),
        cost_estimate=cost,
    )(ab, bb, rr, wab, wbb, s2, b2)
    return out[:M] if Mp != M else out


def conv3x3_bn(x_nhwc, w9, scale, bias, *, relu=True, out_dtype=jnp.bfloat16):
    """3x3 / pad=1 / stride=1 conv + fused BN affine (+ReLU).

    x_nhwc: (N,H,W,Cp) lane-padded channels; w9: (9, Cp, Coutp), (kh,kw) order,
    lane-padded Cout.  Returns the flattened (N*H*W, Coutp) activation."""
    N, H, W, Cp = x_nhwc.shape
    Coutp = w9.shape[-1]
    Ho, Wo = H, W
    rt = _pick_row_tile(Ho, Wo, N)
    nrb = Ho // rt
    # TODO(synk): pad odd spatial sizes instead of asserting.
    assert (rt * Wo) % 8 == 0 or N * nrb == 1
    M2 = N * Ho * Wo

    xp = jnp.pad(x_nhwc.astype(jnp.bfloat16), ((0, 0), (1, 1), (1, 1), (0, 0)))
    wk = w9.reshape(9 * Cp, Coutp).astype(jnp.bfloat16)
    s2 = scale.reshape(1, Coutp).astype(jnp.float32)
    b2 = bias.reshape(1, Coutp).astype(jnp.float32)

    cost = pl.CostEstimate(
        flops=2 * M2 * 9 * Cp * Coutp, transcendentals=0,
        bytes_accessed=xp.size * 2 + wk.size * 2 + M2 * Coutp * 2)

    kernel = functools.partial(_conv3x3_bn_kernel,
                               row_tile=rt, Wo=Wo, relu=relu)
    out = pl.pallas_call(
        kernel,
        grid=(N, nrb),
        in_specs=[
            # Whole padded image per batch element; constant index across the
            # row-block axis -> resident in VMEM, pipelined, no halo re-read.
            pl.BlockSpec((None, H + 2, W + 2, Cp), lambda n, i: (n, 0, 0, 0)),
            # TODO(synk): pipeline_mode=pl.Buffered(1) on these constant-index
            # blocks would reclaim their second VMEM buffer at real AIR sizes.
            pl.BlockSpec((9 * Cp, Coutp), lambda n, i: (0, 0)),
            pl.BlockSpec((1, Coutp), lambda n, i: (0, 0)),
            pl.BlockSpec((1, Coutp), lambda n, i: (0, 0)),
        ],
        out_specs=pl.BlockSpec((rt * Wo, Coutp), lambda n, i: (n * nrb + i, 0)),
        out_shape=jax.ShapeDtypeStruct((M2, Coutp), out_dtype),
        compiler_params=pltpu.CompilerParams(
            dimension_semantics=("parallel", "parallel"),
            vmem_limit_bytes=_vmem_limit_bytes()),
        cost_estimate=cost,
    )(xp, wk, s2, b2)
    return out


# ------------------------------ param helpers --------------------------------

def w1x1(w):   # torch (Cout, Cin, 1, 1) -> (Cin, Cout)
    return jnp.transpose(w[:, :, 0, 0], (1, 0))


def w3x3(w):   # torch (Cout, Cin, 3, 3) -> (9, Cin, Cout), (kh, kw) order
    Cout, Cin, _, _ = w.shape
    return jnp.transpose(w, (2, 3, 1, 0)).reshape(9, Cin, Cout)


def bn_fold(gamma, beta, mean, var, eps=1e-5):
    scale = gamma / jnp.sqrt(var + eps)
    return scale, beta - mean * scale


# ------------------------------ forward pass ---------------------------------

def air_bottleneck_forward(x_nhwc, p, stride=1):
    """Pallas-backed AIRBottleneck forward (eval-mode BN, identity residual).

    bn_concat is applied SPLIT across the two 3x3-conv epilogues before the
    (virtual) concat; this is algebraically identical to the reference because
    the folded BN is a per-channel affine.  All output channels are padded to
    128 lanes; the zero channels are carried between stages and sliced once at
    the end."""
    assert stride == 1, "identity residual requires stride==1 (no downsample)"
    N, H, W, Cin = x_nhwc.shape
    planes = p["conv1_1"].shape[0]
    half = p["conv2_1"].shape[0]
    assert Cin == 4 * planes, "identity residual requires inplanes == 4*planes"
    M = N * H * W
    x_flat = x_nhwc.reshape(M, Cin)

    Pp = _round_up(planes, LANE)
    Hp = _round_up(half, LANE)
    Np = _round_up(4 * planes, LANE)

    # --- fused conv1_1 || conv2_1 (1x1) + bn1_1/bn2_1 + relu: one matmul,
    #     two lane-padded outputs written straight from the kernel -----------
    s11, b11 = bn_fold(*p["bn1_1"])
    s21, b21 = bn_fold(*p["bn2_1"])
    w12 = jnp.concatenate([_pad2d(w1x1(p["conv1_1"]), Cin, Pp),
                           _pad2d(w1x1(p["conv2_1"]), Cin, Hp)], axis=1)
    s12 = jnp.concatenate([_pad1d(s11, Pp), _pad1d(s21, Hp)])
    b12 = jnp.concatenate([_pad1d(b11, Pp), _pad1d(b21, Hp)])
    b1, b2 = matmul_bn_split(x_flat, w12, s12, b12, Pp)   # (M,Pp),(M,Hp) bf16
    b1 = b1.reshape(N, H, W, Pp)
    b2 = b2.reshape(N, H, W, Hp)

    sC, bC = bn_fold(*p["bn_concat"])

    # --- branch 1: conv1_2 (3x3); bn_concat[:planes] + relu fused ------------
    b1f = conv3x3_bn(b1, _pad_w3(w3x3(p["conv1_2"]), Pp, Pp),
                     _pad1d(sC[:planes], Pp), _pad1d(bC[:planes], Pp),
                     relu=True)                           # (M, Pp)

    # --- branch 2: conv2_2 (3x3) + bn2_2 + relu ------------------------------
    s22, b22 = bn_fold(*p["bn2_2"])
    b2m = conv3x3_bn(b2, _pad_w3(w3x3(p["conv2_2"]), Hp, Hp),
                     _pad1d(s22, Hp), _pad1d(b22, Hp), relu=True)
    # --- branch 2: conv2_3 (3x3); bn_concat[planes:] + relu fused ------------
    b2f = conv3x3_bn(b2m.reshape(N, H, W, Hp), _pad_w3(w3x3(p["conv2_3"]), Hp, Hp),
                     _pad1d(sC[planes:], Hp), _pad1d(bC[planes:], Hp),
                     relu=True)                           # (M, Hp)

    # --- final 1x1 conv + bn + residual + relu, concat-free ------------------
    s, b = bn_fold(*p["bn"])
    wc = w1x1(p["conv"])                                  # (planes+half, 4p)
    wa = _pad2d(wc[:planes], Pp, Np)
    wb = _pad2d(wc[planes:], Hp, Np)
    out = dual_matmul_bn_res_relu(b1f, b2f, wa, wb,
                                  _pad1d(s, Np), _pad1d(b, Np), x_flat)
    out = out[:, :4 * planes]
    return out.reshape(N, H, W, 4 * planes)


# --------------------------- reference (pure JAX) ----------------------------

def _conv_ref(x, w, stride, pad):
    w_hwio = jnp.transpose(w, (2, 3, 1, 0))
    return jax.lax.conv_general_dilated(
        x, w_hwio, window_strides=(stride, stride),
        padding=[(pad, pad), (pad, pad)],
        dimension_numbers=("NHWC", "HWIO", "NHWC"))


def _bn_ref(x, gamma, beta, mean, var, eps=1e-5):
    return (x - mean) / jnp.sqrt(var + eps) * gamma + beta


def air_bottleneck_ref(x, p, stride=1):
    relu = lambda t: jnp.maximum(t, 0.0)
    b1 = relu(_bn_ref(_conv_ref(x, p["conv1_1"], 1, 0), *p["bn1_1"]))
    b1 = _conv_ref(b1, p["conv1_2"], stride, 1)
    b2 = relu(_bn_ref(_conv_ref(x, p["conv2_1"], 1, 0), *p["bn2_1"]))
    b2 = relu(_bn_ref(_conv_ref(b2, p["conv2_2"], stride, 1), *p["bn2_2"]))
    b2 = _conv_ref(b2, p["conv2_3"], 1, 1)
    out = jnp.concatenate([b1, b2], axis=-1)
    out = relu(_bn_ref(out, *p["bn_concat"]))
    out = _bn_ref(_conv_ref(out, p["conv"], 1, 0), *p["bn"])
    out = out + x
    return relu(out)


# --------------------------------- main ---------------------------------------

def make_params(key, inplanes, planes):
    half = int(planes * 0.5)
    ks = iter(jax.random.split(key, 32))

    def conv(shape):
        return 0.1 * jax.random.normal(next(ks), shape, jnp.float32)

    def bn(c):
        gamma = 1.0 + 0.1 * jax.random.normal(next(ks), (c,), jnp.float32)
        beta = 0.1 * jax.random.normal(next(ks), (c,), jnp.float32)
        mean = 0.1 * jax.random.normal(next(ks), (c,), jnp.float32)
        var = 0.5 + 0.5 * jnp.abs(jax.random.normal(next(ks), (c,), jnp.float32))
        return (gamma, beta, mean, var)

    return {
        "conv1_1": conv((planes, inplanes, 1, 1)), "bn1_1": bn(planes),
        "conv1_2": conv((planes, planes, 3, 3)),
        "conv2_1": conv((half, inplanes, 1, 1)),   "bn2_1": bn(half),
        "conv2_2": conv((half, half, 3, 3)),       "bn2_2": bn(half),
        "conv2_3": conv((half, half, 3, 3)),
        "bn_concat": bn(planes + half),
        "conv": conv((4 * planes, planes + half, 1, 1)), "bn": bn(4 * planes),
    }


if __name__ == "__main__":
    key = jax.random.PRNGKey(0)
    k_x, k_p = jax.random.split(key)

    batch, inplanes, planes, hw, stride = 2, 16, 4, 16, 1  # inplanes == 4*planes
    x_nhwc = jax.random.normal(k_x, (batch, hw, hw, inplanes), jnp.float32)
    params = make_params(k_p, inplanes, planes)

    fwd = jax.jit(functools.partial(air_bottleneck_forward, stride=stride))
    out = jax.block_until_ready(fwd(x_nhwc, params))

    ref = air_bottleneck_ref(x_nhwc, params, stride=stride)
    assert out.shape == (batch, hw, hw, 4 * planes)
    max_err = float(jnp.max(jnp.abs(out - ref)))
    # bf16 MXU path with f32 accumulation vs. an all-f32 reference.
    assert jnp.allclose(out, ref, atol=3e-2, rtol=3e-2), max_err

    print("KERNEL_OK")
</pallas_src>

<mosaic_0001>
module attributes {stable_mosaic.version = 11 : i64} {
  func.func @_mm_bn_split_kernel(%arg0: i32, %arg1: memref<256x16xbf16, #tpu.memory_space<vmem>>, %arg2: memref<16x256xbf16, #tpu.memory_space<vmem>>, %arg3: memref<1x256xf32, #tpu.memory_space<vmem>>, %arg4: memref<1x256xf32, #tpu.memory_space<vmem>>, %arg5: memref<256x128xbf16, #tpu.memory_space<vmem>>, %arg6: memref<256x128xbf16, #tpu.memory_space<vmem>>) attributes {dimension_semantics = [#tpu.dimension_semantics<parallel>], iteration_bounds = array<i64: 2>, scalar_prefetch = 0 : i64, scratch_operands = 0 : i64, tpu.core_type = #tpu.core_type<tc>, window_params = [{transform_indices = @transform_0, window_bounds = array<i64: 256, 16>}, {pipeline_mode = #tpu.pipeline_mode<synchronous>, transform_indices = @transform_1, window_bounds = array<i64: 16, 256>}, {pipeline_mode = #tpu.pipeline_mode<synchronous>, transform_indices = @transform_2, window_bounds = array<i64: 1, 256>}, {pipeline_mode = #tpu.pipeline_mode<synchronous>, transform_indices = @transform_3, window_bounds = array<i64: 1, 256>}, {transform_indices = @transform_4, window_bounds = array<i64: 256, 128>}, {transform_indices = @transform_5, window_bounds = array<i64: 256, 128>}]} {
    %c0 = arith.constant 0 : index
    %c0_0 = arith.constant 0 : index
    %0 = vector.load %arg1[%c0, %c0_0] : memref<256x16xbf16, #tpu.memory_space<vmem>>, vector<256x16xbf16>
    %c0_1 = arith.constant 0 : index
    %c0_2 = arith.constant 0 : index
    %1 = vector.load %arg2[%c0_1, %c0_2] : memref<16x256xbf16, #tpu.memory_space<vmem>>, vector<16x256xbf16>
    %cst = arith.constant dense<0.000000e+00> : vector<256x256xf32>
    %2 = tpu.matmul %0, %1, %cst {dimension_numbers = #tpu.dot_dimension_numbers<[1], [0], [0], [1], [0, 0, 1, 1], [], []>} : vector<256x16xbf16>, vector<16x256xbf16>, vector<256x256xf32> -> vector<256x256xf32>
    %c0_3 = arith.constant 0 : index
    %c0_4 = arith.constant 0 : index
    %3 = vector.load %arg3[%c0_3, %c0_4] : memref<1x256xf32, #tpu.memory_space<vmem>>, vector<1x256xf32>
    %4 = vector.broadcast %3 : vector<1x256xf32> to vector<256x256xf32>
    %5 = arith.mulf %2, %4 : vector<256x256xf32>
    %c0_5 = arith.constant 0 : index
    %c0_6 = arith.constant 0 : index
    %6 = vector.load %arg4[%c0_5, %c0_6] : memref<1x256xf32, #tpu.memory_space<vmem>>, vector<1x256xf32>
    %7 = vector.broadcast %6 : vector<1x256xf32> to vector<256x256xf32>
    %8 = arith.addf %5, %7 : vector<256x256xf32>
    %cst_7 = arith.constant 0.000000e+00 : f32
    %9 = vector.broadcast %cst_7 : f32 to vector<256x256xf32>
    %10 = arith.maximumf %8, %9 : vector<256x256xf32>
    %11 = vector.extract_strided_slice %10 {offsets = [0, 0], sizes = [256, 128], strides = [1, 1]} : vector<256x256xf32> to vector<256x128xf32>
    %12 = arith.truncf %11 : vector<256x128xf32> to vector<256x128xbf16>
    %c0_8 = arith.constant 0 : index
    %c0_9 = arith.constant 0 : index
    %13 = vector.load %arg5[%c0_8, %c0_9] : memref<256x128xbf16, #tpu.memory_space<vmem>>, vector<256x128xbf16>
    tpu.vector_store %arg5[%c0_8, %c0_9], %12 {strides = array<i32>} : memref<256x128xbf16, #tpu.memory_space<vmem>>, vector<256x128xbf16>,
    %14 = vector.extract_strided_slice %10 {offsets = [0, 128], sizes = [256, 128], strides = [1, 1]} : vector<256x256xf32> to vector<256x128xf32>
    %15 = arith.truncf %14 : vector<256x128xf32> to vector<256x128xbf16>
    %c0_10 = arith.constant 0 : index
    %c0_11 = arith.constant 0 : index
    %16 = vector.load %arg6[%c0_10, %c0_11] : memref<256x128xbf16, #tpu.memory_space<vmem>>, vector<256x128xbf16>
    tpu.vector_store %arg6[%c0_10, %c0_11], %15 {strides = array<i32>} : memref<256x128xbf16, #tpu.memory_space<vmem>>, vector<256x128xbf16>,
    return
  }
  func.func @transform_0(%arg0: i32) -> (i32, i32) {
    %c0_i32 = arith.constant 0 : i32
    %c0_i32_0 = arith.constant 0 : i32
    return %arg0, %c0_i32 : i32, i32
  }
  func.func @transform_1(%arg0: i32) -> (i32, i32) {
    %c0_i32 = arith.constant 0 : i32
    %c0_i32_0 = arith.constant 0 : i32
    %c0_i32_1 = arith.constant 0 : i32
    return %c0_i32, %c0_i32_0 : i32, i32
  }
  func.func @transform_2(%arg0: i32) -> (i32, i32) {
    %c0_i32 = arith.constant 0 : i32
    %c0_i32_0 = arith.constant 0 : i32
    %c0_i32_1 = arith.constant 0 : i32
    return %c0_i32, %c0_i32_0 : i32, i32
  }
  func.func @transform_3(%arg0: i32) -> (i32, i32) {
    %c0_i32 = arith.constant 0 : i32
    %c0_i32_0 = arith.constant 0 : i32
    %c0_i32_1 = arith.constant 0 : i32
    return %c0_i32, %c0_i32_0 : i32, i32
  }
  func.func @transform_4(%arg0: i32) -> (i32, i32) {
    %c0_i32 = arith.constant 0 : i32
    %c0_i32_0 = arith.constant 0 : i32
    return %arg0, %c0_i32 : i32, i32
  }
  func.func @transform_5(%arg0: i32) -> (i32, i32) {
    %c0_i32 = arith.constant 0 : i32
    %c0_i32_0 = arith.constant 0 : i32
    return %arg0, %c0_i32 : i32, i32
  }
}

module attributes {stable_mosaic.version = 11 : i64} {
  func.func @_conv3x3_bn_kernel(%arg0: i32, %arg1: i32, %arg2: memref<1x18x18x128xbf16, #tpu.memory_space<vmem>>, %arg3: memref<1152x128xbf16, #tpu.memory_space<vmem>>, %arg4: memref<1x128xf32, #tpu.memory_space<vmem>>, %arg5: memref<1x128xf32, #tpu.memory_space<vmem>>, %arg6: memref<256x128xbf16, #tpu.memory_space<vmem>>) attributes {dimension_semantics = [#tpu.dimension_semantics<parallel>, #tpu.dimension_semantics<parallel>], iteration_bounds = array<i64: 2, 1>, scalar_prefetch = 0 : i64, scratch_operands = 0 : i64, tpu.core_type = #tpu.core_type<tc>, window_params = [{transform_indices = @transform_0, window_bounds = array<i64: 1, 18, 18, 128>}, {pipeline_mode = #tpu.pipeline_mode<synchronous>, transform_indices = @transform_1, window_bounds = array<i64: 1152, 128>}, {pipeline_mode = #tpu.pipeline_mode<synchronous>, transform_indices = @transform_2, window_bounds = array<i64: 1, 128>}, {pipeline_mode = #tpu.pipeline_mode<synchronous>, transform_indices = @transform_3, window_bounds = array<i64: 1, 128>}, {transform_indices = @transform_4, window_bounds = array<i64: 256, 128>}]} {
    %c16_i32 = arith.constant 16 : i32
    %0 = arith.muli %arg1, %c16_i32 : i32
    %c0_i32 = arith.constant 0 : i32
    %1 = arith.addi %0, %c0_i32 : i32
    %c0 = arith.constant 0 : index
    %2 = arith.index_cast %1 : i32 to index
    %c0_0 = arith.constant 0 : index
    %c0_1 = arith.constant 0 : index
    %3 = vector.load %arg2[%c0, %2, %c0_0, %c0_1] : memref<1x18x18x128xbf16, #tpu.memory_space<vmem>>, vector<1x16x16x128xbf16>
    %4 = vector.shape_cast %3 : vector<1x16x16x128xbf16> to vector<16x16x128xbf16>
    %c0_i32_2 = arith.constant 0 : i32
    %5 = arith.addi %0, %c0_i32_2 : i32
    %c0_3 = arith.constant 0 : index
    %6 = arith.index_cast %5 : i32 to index
    %c1 = arith.constant 1 : index
    %c0_4 = arith.constant 0 : index
    %7 = vector.load %arg2[%c0_3, %6, %c1, %c0_4] : memref<1x18x18x128xbf16, #tpu.memory_space<vmem>>, vector<1x16x16x128xbf16>
    %8 = vector.shape_cast %7 : vector<1x16x16x128xbf16> to vector<16x16x128xbf16>
    %c0_i32_5 = arith.constant 0 : i32
    %9 = arith.addi %0, %c0_i32_5 : i32
    %c0_6 = arith.constant 0 : index
    %10 = arith.index_cast %9 : i32 to index
    %c2 = arith.constant 2 : index
    %c0_7 = arith.constant 0 : index
    %11 = vector.load %arg2[%c0_6, %10, %c2, %c0_7] : memref<1x18x18x128xbf16, #tpu.memory_space<vmem>>, vector<1x16x16x128xbf16>
    %12 = vector.shape_cast %11 : vector<1x16x16x128xbf16> to vector<16x16x128xbf16>
    %c1_i32 = arith.constant 1 : i32
    %13 = arith.addi %0, %c1_i32 : i32
    %c0_8 = arith.constant 0 : index
    %14 = arith.index_cast %13 : i32 to index
    %c0_9 = arith.constant 0 : index
    %c0_10 = arith.constant 0 : index
    %15 = vector.load %arg2[%c0_8, %14, %c0_9, %c0_10] : memref<1x18x18x128xbf16, #tpu.memory_space<vmem>>, vector<1x16x16x128xbf16>
    %16 = vector.shape_cast %15 : vector<1x16x16x128xbf16> to vector<16x16x128xbf16>
    %c1_i32_11 = arith.constant 1 : i32
    %17 = arith.addi %0, %c1_i32_11 : i32
    %c0_12 = arith.constant 0 : index
    %18 = arith.index_cast %17 : i32 to index
    %c1_13 = arith.constant 1 : index
    %c0_14 = arith.constant 0 : index
    %19 = vector.load %arg2[%c0_12, %18, %c1_13, %c0_14] : memref<1x18x18x128xbf16, #tpu.memory_space<vmem>>, vector<1x16x16x128xbf16>
    %20 = vector.shape_cast %19 : vector<1x16x16x128xbf16> to vector<16x16x128xbf16>
    %c1_i32_15 = arith.constant 1 : i32
    %21 = arith.addi %0, %c1_i32_15 : i32
    %c0_16 = arith.constant 0 : index
    %22 = arith.index_cast %21 : i32 to index
    %c2_17 = arith.constant 2 : index
    %c0_18 = arith.constant 0 : index
    %23 = vector.load %arg2[%c0_16, %22, %c2_17, %c0_18] : memref<1x18x18x128xbf16, #tpu.memory_space<vmem>>, vector<1x16x16x128xbf16>
    %24 = vector.shape_cast %23 : vector<1x16x16x128xbf16> to vector<16x16x128xbf16>
    %c2_i32 = arith.constant 2 : i32
    %25 = arith.addi %0, %c2_i32 : i32
    %c0_19 = arith.constant 0 : index
    %26 = arith.index_cast %25 : i32 to index
    %c0_20 = arith.constant 0 : index
    %c0_21 = arith.constant 0 : index
    %27 = vector.load %arg2[%c0_19, %26, %c0_20, %c0_21] : memref<1x18x18x128xbf16, #tpu.memory_space<vmem>>, vector<1x16x16x128xbf16>
    %28 = vector.shape_cast %27 : vector<1x16x16x128xbf16> to vector<16x16x128xbf16>
    %c2_i32_22 = arith.constant 2 : i32
    %29 = arith.addi %0, %c2_i32_22 : i32
    %c0_23 = arith.constant 0 : index
    %30 = arith.index_cast %29 : i32 to index
    %c1_24 = arith.constant 1 : index
    %c0_25 = arith.constant 0 : index
    %31 = vector.load %arg2[%c0_23, %30, %c1_24, %c0_25] : memref<1x18x18x128xbf16, #tpu.memory_space<vmem>>, vector<1x16x16x128xbf16>
    %32 = vector.shape_cast %31 : vector<1x16x16x128xbf16> to vector<16x16x128xbf16>
    %c2_i32_26 = arith.constant 2 : i32
    %33 = arith.addi %0, %c2_i32_26 : i32
    %c0_27 = arith.constant 0 : index
    %34 = arith.index_cast %33 : i32 to index
    %c2_28 = arith.constant 2 : index
    %c0_29 = arith.constant 0 : index
    %35 = vector.load %arg2[%c0_27, %34, %c2_28, %c0_29] : memref<1x18x18x128xbf16, #tpu.memory_space<vmem>>, vector<1x16x16x128xbf16>
    %36 = vector.shape_cast %35 : vector<1x16x16x128xbf16> to vector<16x16x128xbf16>
    %37 = tpu.concatenate %4, %8, %12, %16, %20, %24, %28, %32, %36 in 2 : vector<16x16x128xbf16>, vector<16x16x128xbf16>, vector<16x16x128xbf16>, vector<16x16x128xbf16>, vector<16x16x128xbf16>, vector<16x16x128xbf16>, vector<16x16x128xbf16>, vector<16x16x128xbf16>, vector<16x16x128xbf16> -> vector<16x16x1152xbf16>
    %38 = vector.shape_cast %37 : vector<16x16x1152xbf16> to vector<256x1152xbf16>
    %c0_30 = arith.constant 0 : index
    %c0_31 = arith.constant 0 : index
    %39 = vector.load %arg3[%c0_30, %c0_31] : memref<1152x128xbf16, #tpu.memory_space<vmem>>, vector<1152x128xbf16>
    %cst = arith.constant dense<0.000000e+00> : vector<256x128xf32>
    %40 = tpu.matmul %38, %39, %cst {dimension_numbers = #tpu.dot_dimension_numbers<[1], [0], [0], [1], [0, 0, 1, 1], [], []>} : vector<256x1152xbf16>, vector<1152x128xbf16>, vector<256x128xf32> -> vector<256x128xf32>
    %c0_32 = arith.constant 0 : index
    %c0_33 = arith.constant 0 : index
    %41 = vector.load %arg4[%c0_32, %c0_33] : memref<1x128xf32, #tpu.memory_space<vmem>>, vector<1x128xf32>
    %42 = vector.broadcast %41 : vector<1x128xf32> to vector<256x128xf32>
    %43 = arith.mulf %40, %42 : vector<256x128xf32>
    %c0_34 = arith.constant 0 : index
    %c0_35 = arith.constant 0 : index
    %44 = vector.load %arg5[%c0_34, %c0_35] : memref<1x128xf32, #tpu.memory_space<vmem>>, vector<1x128xf32>
    %45 = vector.broadcast %44 : vector<1x128xf32> to vector<256x128xf32>
    %46 = arith.addf %43, %45 : vector<256x128xf32>
    %cst_36 = arith.constant 0.000000e+00 : f32
    %47 = vector.broadcast %cst_36 : f32 to vector<256x128xf32>
    %48 = arith.maximumf %46, %47 : vector<256x128xf32>
    %49 = arith.truncf %48 : vector<256x128xf32> to vector<256x128xbf16>
    %c0_37 = arith.constant 0 : index
    %c0_38 = arith.constant 0 : index
    %50 = vector.load %arg6[%c0_37, %c0_38] : memref<256x128xbf16, #tpu.memory_space<vmem>>, vector<256x128xbf16>
    tpu.vector_store %arg6[%c0_37, %c0_38], %49 {strides = array<i32>} : memref<256x128xbf16, #tpu.memory_space<vmem>>, vector<256x128xbf16>,
    return
  }
  func.func @transform_0(%arg0: i32, %arg1: i32) -> (i32, i32, i32, i32) {
    %c0_i32 = arith.constant 0 : i32
    %c0_i32_0 = arith.constant 0 : i32
    %c0_i32_1 = arith.constant 0 : i32
    %c0_i32_2 = arith.constant 0 : i32
    return %arg0, %c0_i32, %c0_i32_0, %c0_i32_1 : i32, i32, i32, i32
  }
  func.func @transform_1(%arg0: i32, %arg1: i32) -> (i32, i32) {
    %c0_i32 = arith.constant 0 : i32
    %c0_i32_0 = arith.constant 0 : i32
    %c0_i32_1 = arith.constant 0 : i32
    return %c0_i32, %c0_i32_0 : i32, i32
  }
  func.func @transform_2(%arg0: i32, %arg1: i32) -> (i32, i32) {
    %c0_i32 = arith.constant 0 : i32
    %c0_i32_0 = arith.constant 0 : i32
    %c0_i32_1 = arith.constant 0 : i32
    return %c0_i32, %c0_i32_0 : i32, i32
  }
  func.func @transform_3(%arg0: i32, %arg1: i32) -> (i32, i32) {
    %c0_i32 = arith.constant 0 : i32
    %c0_i32_0 = arith.constant 0 : i32
    %c0_i32_1 = arith.constant 0 : i32
    return %c0_i32, %c0_i32_0 : i32, i32
  }
  func.func @transform_4(%arg0: i32, %arg1: i32) -> (i32, i32) {
    %c1_i32 = arith.constant 1 : i32
    %0 = arith.muli %arg0, %c1_i32 : i32
    %1 = arith.addi %0, %arg1 : i32
    %c0_i32 = arith.constant 0 : i32
    %c0_i32_0 = arith.constant 0 : i32
    return %1, %c0_i32 : i32, i32
  }
}

module attributes {stable_mosaic.version = 11 : i64} {
  func.func @_dual_mm_bn_res_relu_kernel(%arg0: i32, %arg1: memref<256x128xbf16, #tpu.memory_space<vmem>>, %arg2: memref<256x128xbf16, #tpu.memory_space<vmem>>, %arg3: memref<256x128xf32, #tpu.memory_space<vmem>>, %arg4: memref<128x128xbf16, #tpu.memory_space<vmem>>, %arg5: memref<128x128xbf16, #tpu.memory_space<vmem>>, %arg6: memref<1x128xf32, #tpu.memory_space<vmem>>, %arg7: memref<1x128xf32, #tpu.memory_space<vmem>>, %arg8: memref<256x128xf32, #tpu.memory_space<vmem>>) attributes {dimension_semantics = [#tpu.dimension_semantics<parallel>], iteration_bounds = array<i64: 2>, scalar_prefetch = 0 : i64, scratch_operands = 0 : i64, tpu.core_type = #tpu.core_type<tc>, window_params = [{transform_indices = @transform_0, window_bounds = array<i64: 256, 128>}, {transform_indices = @transform_1, window_bounds = array<i64: 256, 128>}, {transform_indices = @transform_2, window_bounds = array<i64: 256, 128>}, {pipeline_mode = #tpu.pipeline_mode<synchronous>, transform_indices = @transform_3, window_bounds = array<i64: 128, 128>}, {pipeline_mode = #tpu.pipeline_mode<synchronous>, transform_indices = @transform_4, window_bounds = array<i64: 128, 128>}, {pipeline_mode = #tpu.pipeline_mode<synchronous>, transform_indices = @transform_5, window_bounds = array<i64: 1, 128>}, {pipeline_mode = #tpu.pipeline_mode<synchronous>, transform_indices = @transform_6, window_bounds = array<i64: 1, 128>}, {transform_indices = @transform_7, window_bounds = array<i64: 256, 128>}]} {
    %c0 = arith.constant 0 : index
    %c0_0 = arith.constant 0 : index
    %0 = vector.load %arg1[%c0, %c0_0] : memref<256x128xbf16, #tpu.memory_space<vmem>>, vector<256x128xbf16>
    %c0_1 = arith.constant 0 : index
    %c0_2 = arith.constant 0 : index
    %1 = vector.load %arg4[%c0_1, %c0_2] : memref<128x128xbf16, #tpu.memory_space<vmem>>, vector<128x128xbf16>
    %cst = arith.constant dense<0.000000e+00> : vector<256x128xf32>
    %2 = tpu.matmul %0, %1, %cst {dimension_numbers = #tpu.dot_dimension_numbers<[1], [0], [0], [1], [0, 0, 1, 1], [], []>} : vector<256x128xbf16>, vector<128x128xbf16>, vector<256x128xf32> -> vector<256x128xf32>
    %c0_3 = arith.constant 0 : index
    %c0_4 = arith.constant 0 : index
    %3 = vector.load %arg2[%c0_3, %c0_4] : memref<256x128xbf16, #tpu.memory_space<vmem>>, vector<256x128xbf16>
    %c0_5 = arith.constant 0 : index
    %c0_6 = arith.constant 0 : index
    %4 = vector.load %arg5[%c0_5, %c0_6] : memref<128x128xbf16, #tpu.memory_space<vmem>>, vector<128x128xbf16>
    %cst_7 = arith.constant dense<0.000000e+00> : vector<256x128xf32>
    %5 = tpu.matmul %3, %4, %cst_7 {dimension_numbers = #tpu.dot_dimension_numbers<[1], [0], [0], [1], [0, 0, 1, 1], [], []>} : vector<256x128xbf16>, vector<128x128xbf16>, vector<256x128xf32> -> vector<256x128xf32>
    %6 = arith.addf %2, %5 : vector<256x128xf32>
    %c0_8 = arith.constant 0 : index
    %c0_9 = arith.constant 0 : index
    %7 = vector.load %arg6[%c0_8, %c0_9] : memref<1x128xf32, #tpu.memory_space<vmem>>, vector<1x128xf32>
    %8 = vector.broadcast %7 : vector<1x128xf32> to vector<256x128xf32>
    %9 = arith.mulf %6, %8 : vector<256x128xf32>
    %c0_10 = arith.constant 0 : index
    %c0_11 = arith.constant 0 : index
    %10 = vector.load %arg7[%c0_10, %c0_11] : memref<1x128xf32, #tpu.memory_space<vmem>>, vector<1x128xf32>
    %11 = vector.broadcast %10 : vector<1x128xf32> to vector<256x128xf32>
    %12 = arith.addf %9, %11 : vector<256x128xf32>
    %c0_12 = arith.constant 0 : index
    %c0_13 = arith.constant 0 : index
    %13 = vector.load %arg3[%c0_12, %c0_13] : memref<256x128xf32, #tpu.memory_space<vmem>>, vector<256x128xf32>
    %14 = arith.addf %12, %13 : vector<256x128xf32>
    %cst_14 = arith.constant 0.000000e+00 : f32
    %15 = vector.broadcast %cst_14 : f32 to vector<256x128xf32>
    %16 = arith.maximumf %14, %15 : vector<256x128xf32>
    %c0_15 = arith.constant 0 : index
    %c0_16 = arith.constant 0 : index
    %17 = vector.load %arg8[%c0_15, %c0_16] : memref<256x128xf32, #tpu.memory_space<vmem>>, vector<256x128xf32>
    tpu.vector_store %arg8[%c0_15, %c0_16], %16 {strides = array<i32>} : memref<256x128xf32, #tpu.memory_space<vmem>>, vector<256x128xf32>,
    return
  }
  func.func @transform_0(%arg0: i32) -> (i32, i32) {
    %c0_i32 = arith.constant 0 : i32
    %c0_i32_0 = arith.constant 0 : i32
    return %arg0, %c0_i32 : i32, i32
  }
  func.func @transform_1(%arg0: i32) -> (i32, i32) {
    %c0_i32 = arith.constant 0 : i32
    %c0_i32_0 = arith.constant 0 : i32
    return %arg0, %c0_i32 : i32, i32
  }
  func.func @transform_2(%arg0: i32) -> (i32, i32) {
    %c0_i32 = arith.constant 0 : i32
    %c0_i32_0 = arith.constant 0 : i32
    return %arg0, %c0_i32 : i32, i32
  }
  func.func @transform_3(%arg0: i32) -> (i32, i32) {
    %c0_i32 = arith.constant 0 : i32
    %c0_i32_0 = arith.constant 0 : i32
    %c0_i32_1 = arith.constant 0 : i32
    return %c0_i32, %c0_i32_0 : i32, i32
  }
  func.func @transform_4(%arg0: i32) -> (i32, i32) {
    %c0_i32 = arith.constant 0 : i32
    %c0_i32_0 = arith.constant 0 : i32
    %c0_i32_1 = arith.constant 0 : i32
    return %c0_i32, %c0_i32_0 : i32, i32
  }
  func.func @transform_5(%arg0: i32) -> (i32, i32) {
    %c0_i32 = arith.constant 0 : i32
    %c0_i32_0 = arith.constant 0 : i32
    %c0_i32_1 = arith.constant 0 : i32
    return %c0_i32, %c0_i32_0 : i32, i32
  }
  func.func @transform_6(%arg0: i32) -> (i32, i32) {
    %c0_i32 = arith.constant 0 : i32
    %c0_i32_0 = arith.constant 0 : i32
    %c0_i32_1 = arith.constant 0 : i32
    return %c0_i32, %c0_i32_0 : i32, i32
  }
  func.func @transform_7(%arg0: i32) -> (i32, i32) {
    %c0_i32 = arith.constant 0 : i32
    %c0_i32_0 = arith.constant 0 : i32
    return %arg0, %c0_i32 : i32, i32
  }
}

</mosaic_0001>

<llo_original>
// kernel: air_bottleneck_forward.5
$region0: #{air_bottleneck_forward.5}
  #allocation0 [shape = 'u32[]', space=smem, size = 0x4, offset = 0x4, fixed_abs, tag = 'smem constant byte address 0x4 - core index']
  #allocation1 [shape = 'u32[144,128]{1,0:T(1,128)}', space=vmem, size = 0x12000, scoped, tag = 'internal scratch']
  %s0 = inlined_call_operand.vmem [shape: bf16[512,16], index: 0, kind: input, shape index: {}]
  %s1 = inlined_call_operand.vmem [shape: bf16[16,256], index: 1, kind: input, shape index: {}]
  %s2 = inlined_call_operand.vmem [shape: f32[1,256], index: 2, kind: input, shape index: {}]
  %s3 = inlined_call_operand.vmem [shape: f32[1,256], index: 3, kind: input, shape index: {}]
  %s4 = inlined_call_operand.vmem [shape: bf16[512,128], index: 4, kind: output, shape index: {0}]
  %s5 = inlined_call_operand.vmem [shape: bf16[512,128], index: 5, kind: output, shape index: {1}]
  %6 = xla_tuple %s4, %s5
  %s7 = sld [smem:[#allocation0]]
  $region57: #{air_bottleneck_forward.5} parent=0
    _
  %s9 = ssub.s32 1, %s7
  %s10 = scalar_select 0, %s9, %s7
  loop: start=0, step=1, limit=4
  $region2: #{air_bottleneck_forward.5} parent=0 // loop_pre_header
    _
  $region3: #{air_bottleneck_forward.5} parent=0 // loop_header
    %s12 = sphi 0, %s16
    %p13 = scmp.ge.s32.totalorder %s12, 4
    %s22 = sphi 0, %s24
    %s25 = sphi 0, %s22
    %s26 = sphi 0, %s25
    %s42 = sphi 0, %s26
    %s46 = sphi 0, %s46
    %s48 = sphi 0, %s46
    %s49 = sphi 0, %s48
    %s63 = sphi 0, %s49
    %s67 = sphi 0, %s67
    %s69 = sphi 0, %s67
    %s70 = sphi 0, %s69
    %s84 = sphi 0, %s70
    %s88 = sphi 0, %s88
    %s90 = sphi 0, %s88
    %s91 = sphi 0, %s90
    %s105 = sphi 0, %s91
    %s111 = sphi 0, %s113
    %s114 = sphi 0, %s111
    %s115 = sphi 0, %s114
    %s131 = sphi 0, %s115
    %s137 = sphi 0, %s139
    %s140 = sphi 0, %s137
    %s141 = sphi 0, %s140
    %s157 = sphi 0, %s141
  $region4: #{air_bottleneck_forward.5} parent=0 // loop_header_branch
    %15 = sbr.rel (%p13) target = $region8
  $region5: #{air_bottleneck_forward.5} parent=0 // loop_body
    %s17 = ssub.s32 %s12, 1
    %s18 = ssub.s32 %s12, 2
    %s19 = sadd.s32 %s12, 1
    %s20 = ssub.s32 %s12, %s19
    %p21 = scmp.eq.s32.totalorder %s20, 0
    %s23 = sadd.s32 %s22, 1
    %s24 = scalar_select %p21, %s22, %s23
    %p27 = pneg %p21
    %p28 = scmp.eq.s32.totalorder %s12, 1
    %p29 = por %p27, %p28
    %p30 = scmp.ne.s32.totalorder %s22, %s25
    %p31 = scmp.eq.s32.totalorder %s12, 0
    %p32 = por %p30, %p31
    %p33 = scmp.ne.s32.totalorder %s22, %s25
    %p34 = scmp.eq.s32.totalorder %s17, 1
    %p35 = por %p33, %p34
    %p36 = scmp.ne.s32.totalorder %s25, %s26
    %p37 = scmp.eq.s32.totalorder %s17, 0
    %p38 = por %p36, %p37
    %p39 = scmp.ne.s32.totalorder %s25, %s26
    %p40 = scmp.eq.s32.totalorder %s18, 1
    %p41 = por %p39, %p40
    %p43 = scmp.ne.s32.totalorder %s26, %s42
    %p44 = scmp.eq.s32.totalorder %s18, 0
    %p45 = por %p43, %p44
    %s47 = sadd.s32 %s46, 1
    %p50 = scmp.eq.s32.totalorder %s12, 1
    %p51 = scmp.ne.s32.totalorder %s46, %s48
    %p52 = scmp.eq.s32.totalorder %s12, 0
    %p53 = por %p51, %p52
    %p54 = scmp.ne.s32.totalorder %s46, %s48
    %p55 = scmp.eq.s32.totalorder %s17, 1
    %p56 = por %p54, %p55
    %p57 = scmp.ne.s32.totalorder %s48, %s49
    %p58 = scmp.eq.s32.totalorder %s17, 0
    %p59 = por %p57, %p58
    %p60 = scmp.ne.s32.totalorder %s48, %s49
    %p61 = scmp.eq.s32.totalorder %s18, 1
    %p62 = por %p60, %p61
    %p64 = scmp.ne.s32.totalorder %s49, %s63
    %p65 = scmp.eq.s32.totalorder %s18, 0
    %p66 = por %p64, %p65
    %s68 = sadd.s32 %s67, 1
    %p71 = scmp.eq.s32.totalorder %s12, 1
    %p72 = scmp.ne.s32.totalorder %s67, %s69
    %p73 = scmp.eq.s32.totalorder %s12, 0
    %p74 = por %p72, %p73
    %p75 = scmp.ne.s32.totalorder %s67, %s69
    %p76 = scmp.eq.s32.totalorder %s17, 1
    %p77 = por %p75, %p76
    %p78 = scmp.ne.s32.totalorder %s69, %s70
    %p79 = scmp.eq.s32.totalorder %s17, 0
    %p80 = por %p78, %p79
    %p81 = scmp.ne.s32.totalorder %s69, %s70
    %p82 = scmp.eq.s32.totalorder %s18, 1
    %p83 = por %p81, %p82
    %p85 = scmp.ne.s32.totalorder %s70, %s84
    %p86 = scmp.eq.s32.totalorder %s18, 0
    %p87 = por %p85, %p86
    %s89 = sadd.s32 %s88, 1
    %p92 = scmp.eq.s32.totalorder %s12, 1
    %p93 = scmp.ne.s32.totalorder %s88, %s90
    %p94 = scmp.eq.s32.totalorder %s12, 0
    %p95 = por %p93, %p94
    %p96 = scmp.ne.s32.totalorder %s88, %s90
    %p97 = scmp.eq.s32.totalorder %s17, 1
    %p98 = por %p96, %p97
    %p99 = scmp.ne.s32.totalorder %s90, %s91
    %p100 = scmp.eq.s32.totalorder %s17, 0
    %p101 = por %p99, %p100
    %p102 = scmp.ne.s32.totalorder %s90, %s91
    %p103 = scmp.eq.s32.totalorder %s18, 1
    %p104 = por %p102, %p103
    %p106 = scmp.ne.s32.totalorder %s91, %s105
    %p107 = scmp.eq.s32.totalorder %s18, 0
    %p108 = por %p106, %p107
    %s109 = ssub.s32 %s12, %s19
    %p110 = scmp.eq.s32.totalorder %s109, 0
    %s112 = sadd.s32 %s111, 1
    %s113 = scalar_select %p110, %s111, %s112
    %p116 = pneg %p110
    %p117 = scmp.eq.s32.totalorder %s12, 1
    %p118 = por %p116, %p117
    %p119 = scmp.ne.s32.totalorder %s111, %s114
    %p120 = scmp.eq.s32.totalorder %s12, 0
    %p121 = por %p119, %p120
    %p122 = scmp.ne.s32.totalorder %s111, %s114
    %p123 = scmp.eq.s32.totalorder %s17, 1
    %p124 = por %p122, %p123
    %p125 = scmp.ne.s32.totalorder %s114, %s115
    %p126 = scmp.eq.s32.totalorder %s17, 0
    %p127 = por %p125, %p126
    %p128 = scmp.ne.s32.totalorder %s114, %s115
    %p129 = scmp.eq.s32.totalorder %s18, 1
    %p130 = por %p128, %p129
    %p132 = scmp.ne.s32.totalorder %s115, %s131
    %p133 = scmp.eq.s32.totalorder %s18, 0
    %p134 = por %p132, %p133
    %s135 = ssub.s32 %s12, %s19
    %p136 = scmp.eq.s32.totalorder %s135, 0
    %s138 = sadd.s32 %s137, 1
    %s139 = scalar_select %p136, %s137, %s138
    %p142 = pneg %p136
    %p143 = scmp.eq.s32.totalorder %s12, 1
    %p144 = por %p142, %p143
    %p145 = scmp.ne.s32.totalorder %s137, %s140
    %p146 = scmp.eq.s32.totalorder %s12, 0
    %p147 = por %p145, %p146
    %p148 = scmp.ne.s32.totalorder %s137, %s140
    %p149 = scmp.eq.s32.totalorder %s17, 1
    %p150 = por %p148, %p149
    %p151 = scmp.ne.s32.totalorder %s140, %s141
    %p152 = scmp.eq.s32.totalorder %s17, 0
    %p153 = por %p151, %p152
    %p154 = scmp.ne.s32.totalorder %s140, %s141
    %p155 = scmp.eq.s32.totalorder %s18, 1
    %p156 = por %p154, %p155
    %p158 = scmp.ne.s32.totalorder %s141, %s157
    %p159 = scmp.eq.s32.totalorder %s18, 0
    %p160 = por %p158, %p159
    %p161 = scmp.le.s32.totalorder 1, %s12
    %p162 = scmp.lt.s32.totalorder %s12, 3
    %p163 = pnand %p161, %p162
    %p164 = pneg %p163
    // Predicated region
    $region9: #{air_bottleneck_forward.5} parent=5 // pred_check
      _
    $region10: #{air_bottleneck_forward.5} parent=5 // pred_check_branch
      %166 = sbr.rel (%p163) target = $region12
    $region11: #{air_bottleneck_forward.5} parent=5 // pred_region
      %s167 = ssub.s32 %s12, 1
      // Predicated region
      $region13: #{air_bottleneck_forward.5} parent=11 // pred_check
        %p168 = pneg %p59
      $region14: #{air_bottleneck_forward.5} parent=11 // pred_check_branch
        %170 = sbr.rel (%p168) target = $region16
      $region15: #{air_bottleneck_forward.5} parent=11 // pred_region
        _
      $region16: #{air_bottleneck_forward.5} parent=11 // pred_fallthru
        _
      // Predicated region
      $region17: #{air_bottleneck_forward.5} parent=11 // pred_check
        %p171 = pneg %p80
      $region18: #{air_bottleneck_forward.5} parent=11 // pred_check_branch
        %173 = sbr.rel (%p171) target = $region20
      $region19: #{air_bottleneck_forward.5} parent=11 // pred_region
        _
      $region20: #{air_bottleneck_forward.5} parent=11 // pred_fallthru
        _
      // Predicated region
      $region21: #{air_bottleneck_forward.5} parent=11 // pred_check
        %p174 = pneg %p101
      $region22: #{air_bottleneck_forward.5} parent=11 // pred_check_branch
        %176 = sbr.rel (%p174) target = $region24
      $region23: #{air_bottleneck_forward.5} parent=11 // pred_region
        _
      $region24: #{air_bottleneck_forward.5} parent=11 // pred_fallthru
        _
    $region12: #{air_bottleneck_forward.5} parent=5 // pred_fallthru
      _
    %p177 = scmp.lt.s32.totalorder %s12, 2
    // Predicated region
    $region25: #{air_bottleneck_forward.5} parent=5 // pred_check
      %p178 = pneg %p177
    $region26: #{air_bottleneck_forward.5} parent=5 // pred_check_branch
      %180 = sbr.rel (%p178) target = $region28
    $region27: #{air_bottleneck_forward.5} parent=5 // pred_region
      // Predicated region
      $region29: #{air_bottleneck_forward.5} parent=27 // pred_check
        %p181 = pneg %p32
      $region30: #{air_bottleneck_forward.5} parent=27 // pred_check_branch
        %183 = sbr.rel (%p181) target = $region32
      $region31: #{air_bottleneck_forward.5} parent=27 // pred_region
        %s184 = smul.u32 32, %s12
        %p185 = scmp.lt.s32.totalorder %s184, 63
        %s186 = scalar_select %p185, %s184, 63
        %s187 = smul.addr %s186, 4
        %s188 = scalar_lea.vmem %s0, %s187
        %s189 = smul.u32 32, %s12
      $region32: #{air_bottleneck_forward.5} parent=27 // pred_fallthru
        _
    $region28: #{air_bottleneck_forward.5} parent=5 // pred_fallthru
      _
    %p190 = scmp.le.s32.totalorder 1, %s12
    %p191 = scmp.lt.s32.totalorder %s12, 3
    %p192 = pnand %p190, %p191
    %p193 = pneg %p192
    // Predicated region
    $region33: #{air_bottleneck_forward.5} parent=5 // pred_check
      _
    $region34: #{air_bottleneck_forward.5} parent=5 // pred_check_branch
      %195 = sbr.rel (%p192) target = $region36
    $region35: #{air_bottleneck_forward.5} parent=5 // pred_region
      %s196 = ssub.s32 %s12, 1
      %s197 = smul.u32 32, %s17
      %p198 = scmp.lt.s32.totalorder %s197, 63
      %s199 = scalar_select %p198, %s197, 63
      %s200 = smul.addr %s199, 4
      %s201 = scalar_lea.vmem %s0, %s200
      %p202 = pneg %p38
      %p203 = pneg %p35
      %p204 = pneg %p59
      %p205 = pneg %p56
      %p206 = pneg %p80
      %p207 = pneg %p77
      %p208 = pneg %p101
      %p209 = pneg %p98
      %p210 = pneg %p127
      %p211 = pneg %p124
      %s212 = smul.u32 32, %s17
      %p213 = scmp.lt.s32.totalorder %s212, 63
      %s214 = scalar_select %p213, %s212, 63
      %s215 = smul.addr %s214, 4
      %s216 = scalar_lea.vmem %s4, %s215
      %p217 = pneg %p153
      %p218 = pneg %p150
      %s219 = smul.u32 32, %s17
      %p220 = scmp.lt.s32.totalorder %s219, 63
      %s221 = scalar_select %p220, %s219, 63
      %s222 = smul.addr %s221, 4
      %s223 = scalar_lea.vmem %s5, %s222
      %s224 = smul.u32 32, %s17
      %p225 = scmp.lt.s32.totalorder %s224, 63
      %s226 = scalar_select %p225, %s224, 63
      %s227 = smul.addr %s226, 4
      %s228 = scalar_lea.vmem %s0, %s227
      %s229 = smul.u32 32, %s17
      %s230 = smul.u32 32, %s17
      %p231 = scmp.lt.s32.totalorder %s230, 63
      %s232 = scalar_select %p231, %s230, 63
      %s233 = smul.addr %s232, 4
      %s234 = scalar_lea.vmem %s4, %s233
      %s235 = smul.u32 32, %s17
      %s236 = smul.u32 32, %s17
      %p237 = scmp.lt.s32.totalorder %s236, 63
      %s238 = scalar_select %p237, %s236, 63
      %s239 = smul.addr %s238, 4
      %s240 = scalar_lea.vmem %s5, %s239
      %s241 = smul.u32 32, %s17
      %v243 = vld [vmem:[%s228] sm:$0xf]
      %v244 = vld [vmem:[%s228 + $0x4] sm:$0xf]
      %v245 = vld [vmem:[%s228 + $0x8] sm:$0xf]
      %v246 = vld [vmem:[%s228 + $0xc] sm:$0xf]
      %v247 = vld [vmem:[%s228 + $0x10] sm:$0xf]
      %v248 = vld [vmem:[%s228 + $0x14] sm:$0xf]
      %v249 = vld [vmem:[%s228 + $0x18] sm:$0xf]
      %v250 = vld [vmem:[%s228 + $0x1c] sm:$0xf]
      %v251 = vld [vmem:[%s228 + $0x20] sm:$0xf]
      %v252 = vld [vmem:[%s228 + $0x24] sm:$0xf]
      %v253 = vld [vmem:[%s228 + $0x28] sm:$0xf]
      %v254 = vld [vmem:[%s228 + $0x2c] sm:$0xf]
      %v255 = vld [vmem:[%s228 + $0x30] sm:$0xf]
      %v256 = vld [vmem:[%s228 + $0x34] sm:$0xf]
      %v257 = vld [vmem:[%s228 + $0x38] sm:$0xf]
      %v258 = vld [vmem:[%s228 + $0x3c] sm:$0xf]
      %v259 = vld [vmem:[%s228 + $0x40] sm:$0xf]
      %v260 = vld [vmem:[%s228 + $0x44] sm:$0xf]
      %v261 = vld [vmem:[%s228 + $0x48] sm:$0xf]
      %v262 = vld [vmem:[%s228 + $0x4c] sm:$0xf]
      %v263 = vld [vmem:[%s228 + $0x50] sm:$0xf]
      %v264 = vld [vmem:[%s228 + $0x54] sm:$0xf]
      %v265 = vld [vmem:[%s228 + $0x58] sm:$0xf]
      %v266 = vld [vmem:[%s228 + $0x5c] sm:$0xf]
      %v267 = vld [vmem:[%s228 + $0x60] sm:$0xf]
      %v268 = vld [vmem:[%s228 + $0x64] sm:$0xf]
      %v269 = vld [vmem:[%s228 + $0x68] sm:$0xf]
      %v270 = vld [vmem:[%s228 + $0x6c] sm:$0xf]
      %v271 = vld [vmem:[%s228 + $0x70] sm:$0xf]
      %v272 = vld [vmem:[%s228 + $0x74] sm:$0xf]
      %v273 = vld [vmem:[%s228 + $0x78] sm:$0xf]
      %v274 = vld [vmem:[%s228 + $0x7c] sm:$0xf]
      %v275 = vld [vmem:[%s1] sm:$0xff]
      %v276 = vld [vmem:[%s1 + $0x8] sm:$0xff]
      %v309 = vunpack.c.l.b16 %v243
      %v310 = vunpack.c.l.b16 %v244
      %v311 = vunpack.c.l.b16 %v245
      %v312 = vunpack.c.l.b16 %v246
      %v313 = vunpack.c.l.b16 %v247
      %v314 = vunpack.c.l.b16 %v248
      %v315 = vunpack.c.l.b16 %v249
      %v316 = vunpack.c.l.b16 %v250
      %v317 = vunpack.c.l.b16 %v251
      %v318 = vunpack.c.l.b16 %v252
      %v319 = vunpack.c.l.b16 %v253
      %v320 = vunpack.c.l.b16 %v254
      %v321 = vunpack.c.l.b16 %v255
      %v322 = vunpack.c.l.b16 %v256
      %v323 = vunpack.c.l.b16 %v257
      %v324 = vunpack.c.l.b16 %v258
      %v325 = vunpack.c.l.b16 %v259
      %v326 = vunpack.c.l.b16 %v260
      %v327 = vunpack.c.l.b16 %v261
      %v328 = vunpack.c.l.b16 %v262
      %v329 = vunpack.c.l.b16 %v263
      %v330 = vunpack.c.l.b16 %v264
      %v331 = vunpack.c.l.b16 %v265
      %v332 = vunpack.c.l.b16 %v266
      %v333 = vunpack.c.l.b16 %v267
      %v334 = vunpack.c.l.b16 %v268
      %v335 = vunpack.c.l.b16 %v269
      %v336 = vunpack.c.l.b16 %v270
      %v337 = vunpack.c.l.b16 %v271
      %v338 = vunpack.c.l.b16 %v272
      %v339 = vunpack.c.l.b16 %v273
      %v340 = vunpack.c.l.b16 %v274
      %v341 = vpack.c.b16 %v310, %v309
      %v342 = vpack.c.b16 %v312, %v311
      %v343 = vpack.c.b16 %v314, %v313
      %v344 = vpack.c.b16 %v316, %v315
      %v345 = vpack.c.b16 %v318, %v317
      %v346 = vpack.c.b16 %v320, %v319
      %v347 = vpack.c.b16 %v322, %v321
      %v348 = vpack.c.b16 %v324, %v323
      %v349 = vpack.c.b16 %v326, %v325
      %v350 = vpack.c.b16 %v328, %v327
      %v351 = vpack.c.b16 %v330, %v329
      %v352 = vpack.c.b16 %v332, %v331
      %v353 = vpack.c.b16 %v334, %v333
      %v354 = vpack.c.b16 %v336, %v335
      %v355 = vpack.c.b16 %v338, %v337
      %v356 = vpack.c.b16 %v340, %v339
      %v359 = vunpack.c.l.b16 %v275
      %v360 = vunpack.c.h.b16 %v275
      %v361 = vunpack.c.l.b16 %v276
      %v362 = vunpack.c.h.b16 %v276
      %v363 = vpack.c.b16 %v361, %v359
      %v364 = vpack.c.b16 %v362, %v360
      %vm367 = vcmask 130048
      %v369 = vsel %vm367, %v341, 0
      %v372 = vsel %vm367, %v342, 0
      %v375 = vsel %vm367, %v343, 0
      %v378 = vsel %vm367, %v344, 0
      %v381 = vsel %vm367, %v345, 0
      %v384 = vsel %vm367, %v346, 0
      %v387 = vsel %vm367, %v347, 0
      %v390 = vsel %vm367, %v348, 0
      %v393 = vsel %vm367, %v349, 0
      %v396 = vsel %vm367, %v350, 0
      %v399 = vsel %vm367, %v351, 0
      %v402 = vsel %vm367, %v352, 0
      %v405 = vsel %vm367, %v353, 0
      %v408 = vsel %vm367, %v354, 0
      %v411 = vsel %vm367, %v355, 0
      %v414 = vsel %vm367, %v356, 0
      %416 = vmatprep.subr.bf16.mxu0 0
      %417 = vmatpush1.bf16.msra.mxu0 0
      %418 = vmatprep.subr.bf16.mxu0 0
      %419 = vmatpush1.bf16.msra.mxu0 0
      %420 = vmatprep.subr.bf16.mxu0 0
      %421 = vmatpush1.bf16.msra.mxu0 0
      %422 = vmatprep.subr.bf16.mxu0 0
      %423 = vmatpush1.bf16.msra.mxu0 0
      %424 = vmatprep.subr.bf16.mxu0 0
      %425 = vmatpush1.bf16.msra.mxu0 0
      %426 = vmatprep.subr.bf16.mxu0 0
      %427 = vmatpush1.bf16.msra.mxu0 0
      %428 = vmatprep.subr.bf16.mxu0 0
      %429 = vmatpush1.bf16.msra.mxu0 0
      %430 = vmatprep.subr.bf16.mxu0 %v364
      %431 = vmatpush1.bf16.msra.mxu0 %v363
      %432 = vmatprep.subr.bf16.mxu0 0
      %433 = vmatpush2.bf16.msra.mxu0 0
      %434 = vmatprep.subr.bf16.mxu0 0
      %435 = vmatpush2.bf16.msra.mxu0 0
      %436 = vmatprep.subr.bf16.mxu0 0
      %437 = vmatpush2.bf16.msra.mxu0 0
      %438 = vmatprep.subr.bf16.mxu0 0
      %439 = vmatpush2.bf16.msra.mxu0 0
      %440 = vmatprep.subr.bf16.mxu0 0
      %441 = vmatpush2.bf16.msra.mxu0 0
      %442 = vmatprep.subr.bf16.mxu0 0
      %443 = vmatpush2.bf16.msra.mxu0 0
      %444 = vmatprep.subr.bf16.mxu0 0
      %445 = vmatpush2.bf16.msra.mxu0 0
      %446 = vmatprep.subr.bf16.mxu0 0
      %447 = vmatpush2.bf16.msra.mxu0 0
      %448 = vmatprep.mubr.bf16.mxu0 0
      %449 = vmatmul.mubr.bf16.gmra.mxu0 %v369
      %v450 = vpop.f32.mrf.mxu0
      %v451 = vadd.f32 0.0, %v450
      %v452 = vpop.f32.mrf.mxu0
      %v453 = vadd.f32 0.0, %v452
      %v454 = vpop.f32.mrf.mxu0
      %v455 = vadd.f32 0.0, %v454
      %v456 = vpop.f32.mrf.mxu0
      %v457 = vadd.f32 0.0, %v456
      %458 = vmatprep.mubr.bf16.mxu0 0
      %459 = vmatmul.mubr.bf16.gmra.mxu0 %v372
      %v460 = vpop.f32.mrf.mxu0
      %v461 = vadd.f32 0.0, %v460
      %v462 = vpop.f32.mrf.mxu0
      %v463 = vadd.f32 0.0, %v462
      %v464 = vpop.f32.mrf.mxu0
      %v465 = vadd.f32 0.0, %v464
      %v466 = vpop.f32.mrf.mxu0
      %v467 = vadd.f32 0.0, %v466
      %468 = vmatprep.mubr.bf16.mxu0 0
      %469 = vmatmul.mubr.bf16.gmra.mxu0 %v375
      %v470 = vpop.f32.mrf.mxu0
      %v471 = vadd.f32 0.0, %v470
      %v472 = vpop.f32.mrf.mxu0
      %v473 = vadd.f32 0.0, %v472
      %v474 = vpop.f32.mrf.mxu0
      %v475 = vadd.f32 0.0, %v474
      %v476 = vpop.f32.mrf.mxu0
      %v477 = vadd.f32 0.0, %v476
      %478 = vmatprep.mubr.bf16.mxu0 0
      %479 = vmatmul.mubr.bf16.gmra.mxu0 %v378
      %v480 = vpop.f32.mrf.mxu0
      %v481 = vadd.f32 0.0, %v480
      %v482 = vpop.f32.mrf.mxu0
      %v483 = vadd.f32 0.0, %v482
      %v484 = vpop.f32.mrf.mxu0
      %v485 = vadd.f32 0.0, %v484
      %v486 = vpop.f32.mrf.mxu0
      %v487 = vadd.f32 0.0, %v486
      %488 = vmatprep.mubr.bf16.mxu0 0
      %489 = vmatmul.mubr.bf16.gmra.mxu0 %v381
      %v490 = vpop.f32.mrf.mxu0
      %v491 = vadd.f32 0.0, %v490
      %v492 = vpop.f32.mrf.mxu0
      %v493 = vadd.f32 0.0, %v492
      %v494 = vpop.f32.mrf.mxu0
      %v495 = vadd.f32 0.0, %v494
      %v496 = vpop.f32.mrf.mxu0
      %v497 = vadd.f32 0.0, %v496
      %498 = vmatprep.mubr.bf16.mxu0 0
      %499 = vmatmul.mubr.bf16.gmra.mxu0 %v384
      %v500 = vpop.f32.mrf.mxu0
      %v501 = vadd.f32 0.0, %v500
      %v502 = vpop.f32.mrf.mxu0
      %v503 = vadd.f32 0.0, %v502
      %v504 = vpop.f32.mrf.mxu0
      %v505 = vadd.f32 0.0, %v504
      %v506 = vpop.f32.mrf.mxu0
      %v507 = vadd.f32 0.0, %v506
      %508 = vmatprep.mubr.bf16.mxu0 0
      %509 = vmatmul.mubr.bf16.gmra.mxu0 %v387
      %v510 = vpop.f32.mrf.mxu0
      %v511 = vadd.f32 0.0, %v510
      %v512 = vpop.f32.mrf.mxu0
      %v513 = vadd.f32 0.0, %v512
      %v514 = vpop.f32.mrf.mxu0
      %v515 = vadd.f32 0.0, %v514
      %v516 = vpop.f32.mrf.mxu0
      %v517 = vadd.f32 0.0, %v516
      %518 = vmatprep.mubr.bf16.mxu0 0
      %519 = vmatmul.mubr.bf16.gmra.mxu0 %v390
      %v520 = vpop.f32.mrf.mxu0
      %v521 = vadd.f32 0.0, %v520
      %v522 = vpop.f32.mrf.mxu0
      %v523 = vadd.f32 0.0, %v522
      %v524 = vpop.f32.mrf.mxu0
      %v525 = vadd.f32 0.0, %v524
      %v526 = vpop.f32.mrf.mxu0
      %v527 = vadd.f32 0.0, %v526
      %528 = vmatprep.mubr.bf16.mxu0 0
      %529 = vmatmul.mubr.bf16.gmra.mxu0 %v393
      %v530 = vpop.f32.mrf.mxu0
      %v531 = vadd.f32 0.0, %v530
      %v532 = vpop.f32.mrf.mxu0
      %v533 = vadd.f32 0.0, %v532
      %v534 = vpop.f32.mrf.mxu0
      %v535 = vadd.f32 0.0, %v534
      %v536 = vpop.f32.mrf.mxu0
      %v537 = vadd.f32 0.0, %v536
      %538 = vmatprep.mubr.bf16.mxu0 0
      %539 = vmatmul.mubr.bf16.gmra.mxu0 %v396
      %v540 = vpop.f32.mrf.mxu0
      %v541 = vadd.f32 0.0, %v540
      %v542 = vpop.f32.mrf.mxu0
      %v543 = vadd.f32 0.0, %v542
      %v544 = vpop.f32.mrf.mxu0
      %v545 = vadd.f32 0.0, %v544
      %v546 = vpop.f32.mrf.mxu0
      %v547 = vadd.f32 0.0, %v546
      %548 = vmatprep.mubr.bf16.mxu0 0
      %549 = vmatmul.mubr.bf16.gmra.mxu0 %v399
      %v550 = vpop.f32.mrf.mxu0
      %v551 = vadd.f32 0.0, %v550
      %v552 = vpop.f32.mrf.mxu0
      %v553 = vadd.f32 0.0, %v552
      %v554 = vpop.f32.mrf.mxu0
      %v555 = vadd.f32 0.0, %v554
      %v556 = vpop.f32.mrf.mxu0
      %v557 = vadd.f32 0.0, %v556
      %558 = vmatprep.mubr.bf16.mxu0 0
      %559 = vmatmul.mubr.bf16.gmra.mxu0 %v402
      %v560 = vpop.f32.mrf.mxu0
      %v561 = vadd.f32 0.0, %v560
      %v562 = vpop.f32.mrf.mxu0
      %v563 = vadd.f32 0.0, %v562
      %v564 = vpop.f32.mrf.mxu0
      %v565 = vadd.f32 0.0, %v564
      %v566 = vpop.f32.mrf.mxu0
      %v567 = vadd.f32 0.0, %v566
      %568 = vmatprep.mubr.bf16.mxu0 0
      %569 = vmatmul.mubr.bf16.gmra.mxu0 %v405
      %v570 = vpop.f32.mrf.mxu0
      %v571 = vadd.f32 0.0, %v570
      %v572 = vpop.f32.mrf.mxu0
      %v573 = vadd.f32 0.0, %v572
      %v574 = vpop.f32.mrf.mxu0
      %v575 = vadd.f32 0.0, %v574
      %v576 = vpop.f32.mrf.mxu0
      %v577 = vadd.f32 0.0, %v576
      %578 = vmatprep.mubr.bf16.mxu0 0
      %579 = vmatmul.mubr.bf16.gmra.mxu0 %v408
      %v580 = vpop.f32.mrf.mxu0
      %v581 = vadd.f32 0.0, %v580
      %v582 = vpop.f32.mrf.mxu0
      %v583 = vadd.f32 0.0, %v582
      %v584 = vpop.f32.mrf.mxu0
      %v585 = vadd.f32 0.0, %v584
      %v586 = vpop.f32.mrf.mxu0
      %v587 = vadd.f32 0.0, %v586
      %588 = vmatprep.mubr.bf16.mxu0 0
      %589 = vmatmul.mubr.bf16.gmra.mxu0 %v411
      %v590 = vpop.f32.mrf.mxu0
      %v591 = vadd.f32 0.0, %v590
      %v592 = vpop.f32.mrf.mxu0
      %v593 = vadd.f32 0.0, %v592
      %v594 = vpop.f32.mrf.mxu0
      %v595 = vadd.f32 0.0, %v594
      %v596 = vpop.f32.mrf.mxu0
      %v597 = vadd.f32 0.0, %v596
      %598 = vmatprep.mubr.bf16.mxu0 0
      %599 = vmatmul.mubr.bf16.gmra.mxu0 %v414
      %v600 = vpop.f32.mrf.mxu0
      %v601 = vadd.f32 0.0, %v600
      %v602 = vpop.f32.mrf.mxu0
      %v603 = vadd.f32 0.0, %v602
      %v604 = vpop.f32.mrf.mxu0
      %v605 = vadd.f32 0.0, %v604
      %v606 = vpop.f32.mrf.mxu0
      %v607 = vadd.f32 0.0, %v606
      %608 = vdwg.mxu0
      %v609 = vld [vmem:[%s2] sm:$0x3]
      %v611 = vlaneseq
      %v612 = vshrl.u32 %v611, 7
      %v613 = vsub.s32 0, %v612
      %v614 = vrot.slane %v609, %v613
      %v615 = vlaneseq
      %v616 = vshrl.u32 %v615, 7
      %v617 = vsub.s32 1, %v616
      %v618 = vrot.slane %v609, %v617
      %v621 = vmul.f32 %v451, %v614
      %v622 = vmul.f32 %v453, %v618
      %v623 = vmul.f32 %v455, %v614
      %v624 = vmul.f32 %v457, %v618
      %v625 = vmul.f32 %v461, %v614
      %v626 = vmul.f32 %v463, %v618
      %v627 = vmul.f32 %v465, %v614
      %v628 = vmul.f32 %v467, %v618
      %v629 = vmul.f32 %v471, %v614
      %v630 = vmul.f32 %v473, %v618
      %v631 = vmul.f32 %v475, %v614
      %v632 = vmul.f32 %v477, %v618
      %v633 = vmul.f32 %v481, %v614
      %v634 = vmul.f32 %v483, %v618
      %v635 = vmul.f32 %v485, %v614
      %v636 = vmul.f32 %v487, %v618
      %v637 = vmul.f32 %v491, %v614
      %v638 = vmul.f32 %v493, %v618
      %v639 = vmul.f32 %v495, %v614
      %v640 = vmul.f32 %v497, %v618
      %v641 = vmul.f32 %v501, %v614
      %v642 = vmul.f32 %v503, %v618
      %v643 = vmul.f32 %v505, %v614
      %v644 = vmul.f32 %v507, %v618
      %v645 = vmul.f32 %v511, %v614
      %v646 = vmul.f32 %v513, %v618
      %v647 = vmul.f32 %v515, %v614
      %v648 = vmul.f32 %v517, %v618
      %v649 = vmul.f32 %v521, %v614
      %v650 = vmul.f32 %v523, %v618
      %v651 = vmul.f32 %v525, %v614
      %v652 = vmul.f32 %v527, %v618
      %v653 = vmul.f32 %v531, %v614
      %v654 = vmul.f32 %v533, %v618
      %v655 = vmul.f32 %v535, %v614
      %v656 = vmul.f32 %v537, %v618
      %v657 = vmul.f32 %v541, %v614
      %v658 = vmul.f32 %v543, %v618
      %v659 = vmul.f32 %v545, %v614
      %v660 = vmul.f32 %v547, %v618
      %v661 = vmul.f32 %v551, %v614
      %v662 = vmul.f32 %v553, %v618
      %v663 = vmul.f32 %v555, %v614
      %v664 = vmul.f32 %v557, %v618
      %v665 = vmul.f32 %v561, %v614
      %v666 = vmul.f32 %v563, %v618
      %v667 = vmul.f32 %v565, %v614
      %v668 = vmul.f32 %v567, %v618
      %v669 = vmul.f32 %v571, %v614
      %v670 = vmul.f32 %v573, %v618
      %v671 = vmul.f32 %v575, %v614
      %v672 = vmul.f32 %v577, %v618
      %v673 = vmul.f32 %v581, %v614
      %v674 = vmul.f32 %v583, %v618
      %v675 = vmul.f32 %v585, %v614
      %v676 = vmul.f32 %v587, %v618
      %v677 = vmul.f32 %v591, %v614
      %v678 = vmul.f32 %v593, %v618
      %v679 = vmul.f32 %v595, %v614
      %v680 = vmul.f32 %v597, %v618
      %v681 = vmul.f32 %v601, %v614
      %v682 = vmul.f32 %v603, %v618
      %v683 = vmul.f32 %v605, %v614
      %v684 = vmul.f32 %v607, %v618
      %v685 = vld [vmem:[%s3] sm:$0x3]
      %v687 = vlaneseq
      %v688 = vshrl.u32 %v687, 7
      %v689 = vsub.s32 0, %v688
      %v690 = vrot.slane %v685, %v689
      %v691 = vlaneseq
      %v692 = vshrl.u32 %v691, 7
      %v693 = vsub.s32 1, %v692
      %v694 = vrot.slane %v685, %v693
      %v697 = vadd.f32 %v621, %v690
      %v698 = vadd.f32 %v622, %v694
      %v699 = vadd.f32 %v623, %v690
      %v700 = vadd.f32 %v624, %v694
      %v701 = vadd.f32 %v625, %v690
      %v702 = vadd.f32 %v626, %v694
      %v703 = vadd.f32 %v627, %v690
      %v704 = vadd.f32 %v628, %v694
      %v705 = vadd.f32 %v629, %v690
      %v706 = vadd.f32 %v630, %v694
      %v707 = vadd.f32 %v631, %v690
      %v708 = vadd.f32 %v632, %v694
      %v709 = vadd.f32 %v633, %v690
      %v710 = vadd.f32 %v634, %v694
      %v711 = vadd.f32 %v635, %v690
      %v712 = vadd.f32 %v636, %v694
      %v713 = vadd.f32 %v637, %v690
      %v714 = vadd.f32 %v638, %v694
      %v715 = vadd.f32 %v639, %v690
      %v716 = vadd.f32 %v640, %v694
      %v717 = vadd.f32 %v641, %v690
      %v718 = vadd.f32 %v642, %v694
      %v719 = vadd.f32 %v643, %v690
      %v720 = vadd.f32 %v644, %v694
      %v721 = vadd.f32 %v645, %v690
      %v722 = vadd.f32 %v646, %v694
      %v723 = vadd.f32 %v647, %v690
      %v724 = vadd.f32 %v648, %v694
      %v725 = vadd.f32 %v649, %v690
      %v726 = vadd.f32 %v650, %v694
      %v727 = vadd.f32 %v651, %v690
      %v728 = vadd.f32 %v652, %v694
      %v729 = vadd.f32 %v653, %v690
      %v730 = vadd.f32 %v654, %v694
      %v731 = vadd.f32 %v655, %v690
      %v732 = vadd.f32 %v656, %v694
      %v733 = vadd.f32 %v657, %v690
      %v734 = vadd.f32 %v658, %v694
      %v735 = vadd.f32 %v659, %v690
      %v736 = vadd.f32 %v660, %v694
      %v737 = vadd.f32 %v661, %v690
      %v738 = vadd.f32 %v662, %v694
      %v739 = vadd.f32 %v663, %v690
      %v740 = vadd.f32 %v664, %v694
      %v741 = vadd.f32 %v665, %v690
      %v742 = vadd.f32 %v666, %v694
      %v743 = vadd.f32 %v667, %v690
      %v744 = vadd.f32 %v668, %v694
      %v745 = vadd.f32 %v669, %v690
      %v746 = vadd.f32 %v670, %v694
      %v747 = vadd.f32 %v671, %v690
      %v748 = vadd.f32 %v672, %v694
      %v749 = vadd.f32 %v673, %v690
      %v750 = vadd.f32 %v674, %v694
      %v751 = vadd.f32 %v675, %v690
      %v752 = vadd.f32 %v676, %v694
      %v753 = vadd.f32 %v677, %v690
      %v754 = vadd.f32 %v678, %v694
      %v755 = vadd.f32 %v679, %v690
      %v756 = vadd.f32 %v680, %v694
      %v757 = vadd.f32 %v681, %v690
      %v758 = vadd.f32 %v682, %v694
      %v759 = vadd.f32 %v683, %v690
      %v760 = vadd.f32 %v684, %v694
      %v761 = vmax.f32 %v697, 0.0
      %v762 = vmax.f32 %v698, 0.0
      %v763 = vmax.f32 %v699, 0.0
      %v764 = vmax.f32 %v700, 0.0
      %v765 = vmax.f32 %v701, 0.0
      %v766 = vmax.f32 %v702, 0.0
      %v767 = vmax.f32 %v703, 0.0
      %v768 = vmax.f32 %v704, 0.0
      %v769 = vmax.f32 %v705, 0.0
      %v770 = vmax.f32 %v706, 0.0
      %v771 = vmax.f32 %v707, 0.0
      %v772 = vmax.f32 %v708, 0.0
      %v773 = vmax.f32 %v709, 0.0
      %v774 = vmax.f32 %v710, 0.0
      %v775 = vmax.f32 %v711, 0.0
      %v776 = vmax.f32 %v712, 0.0
      %v777 = vmax.f32 %v713, 0.0
      %v778 = vmax.f32 %v714, 0.0
      %v779 = vmax.f32 %v715, 0.0
      %v780 = vmax.f32 %v716, 0.0
      %v781 = vmax.f32 %v717, 0.0
      %v782 = vmax.f32 %v718, 0.0
      %v783 = vmax.f32 %v719, 0.0
      %v784 = vmax.f32 %v720, 0.0
      %v785 = vmax.f32 %v721, 0.0
      %v786 = vmax.f32 %v722, 0.0
      %v787 = vmax.f32 %v723, 0.0
      %v788 = vmax.f32 %v724, 0.0
      %v789 = vmax.f32 %v725, 0.0
      %v790 = vmax.f32 %v726, 0.0
      %v791 = vmax.f32 %v727, 0.0
      %v792 = vmax.f32 %v728, 0.0
      %v793 = vmax.f32 %v729, 0.0
      %v794 = vmax.f32 %v730, 0.0
      %v795 = vmax.f32 %v731, 0.0
      %v796 = vmax.f32 %v732, 0.0
      %v797 = vmax.f32 %v733, 0.0
      %v798 = vmax.f32 %v734, 0.0
      %v799 = vmax.f32 %v735, 0.0
      %v800 = vmax.f32 %v736, 0.0
      %v801 = vmax.f32 %v737, 0.0
      %v802 = vmax.f32 %v738, 0.0
      %v803 = vmax.f32 %v739, 0.0
      %v804 = vmax.f32 %v740, 0.0
      %v805 = vmax.f32 %v741, 0.0
      %v806 = vmax.f32 %v742, 0.0
      %v807 = vmax.f32 %v743, 0.0
      %v808 = vmax.f32 %v744, 0.0
      %v809 = vmax.f32 %v745, 0.0
      %v810 = vmax.f32 %v746, 0.0
      %v811 = vmax.f32 %v747, 0.0
      %v812 = vmax.f32 %v748, 0.0
      %v813 = vmax.f32 %v749, 0.0
      %v814 = vmax.f32 %v750, 0.0
      %v815 = vmax.f32 %v751, 0.0
      %v816 = vmax.f32 %v752, 0.0
      %v817 = vmax.f32 %v753, 0.0
      %v818 = vmax.f32 %v754, 0.0
      %v819 = vmax.f32 %v755, 0.0
      %v820 = vmax.f32 %v756, 0.0
      %v821 = vmax.f32 %v757, 0.0
      %v822 = vmax.f32 %v758, 0.0
      %v823 = vmax.f32 %v759, 0.0
      %v824 = vmax.f32 %v760, 0.0
      %v825 = vpack.c.bf16 %v763, %v761
      %v826 = vpack.c.bf16 %v767, %v765
      %v827 = vpack.c.bf16 %v771, %v769
      %v828 = vpack.c.bf16 %v775, %v773
      %v829 = vpack.c.bf16 %v779, %v777
      %v830 = vpack.c.bf16 %v783, %v781
      %v831 = vpack.c.bf16 %v787, %v785
      %v832 = vpack.c.bf16 %v791, %v789
      %v833 = vpack.c.bf16 %v795, %v793
      %v834 = vpack.c.bf16 %v799, %v797
      %v835 = vpack.c.bf16 %v803, %v801
      %v836 = vpack.c.bf16 %v807, %v805
      %v837 = vpack.c.bf16 %v811, %v809
      %v838 = vpack.c.bf16 %v815, %v813
      %v839 = vpack.c.bf16 %v819, %v817
      %v840 = vpack.c.bf16 %v823, %v821
      %v857 = vunpack.c.l.b16 %v825
      %v858 = vunpack.c.h.b16 %v825
      %v859 = vunpack.c.l.b16 %v826
      %v860 = vunpack.c.h.b16 %v826
      %v861 = vunpack.c.l.b16 %v827
      %v862 = vunpack.c.h.b16 %v827
      %v863 = vunpack.c.l.b16 %v828
      %v864 = vunpack.c.h.b16 %v828
      %v865 = vunpack.c.l.b16 %v829
      %v866 = vunpack.c.h.b16 %v829
      %v867 = vunpack.c.l.b16 %v830
      %v868 = vunpack.c.h.b16 %v830
      %v869 = vunpack.c.l.b16 %v831
      %v870 = vunpack.c.h.b16 %v831
      %v871 = vunpack.c.l.b16 %v832
      %v872 = vunpack.c.h.b16 %v832
      %v873 = vunpack.c.l.b16 %v833
      %v874 = vunpack.c.h.b16 %v833
      %v875 = vunpack.c.l.b16 %v834
      %v876 = vunpack.c.h.b16 %v834
      %v877 = vunpack.c.l.b16 %v835
      %v878 = vunpack.c.h.b16 %v835
      %v879 = vunpack.c.l.b16 %v836
      %v880 = vunpack.c.h.b16 %v836
      %v881 = vunpack.c.l.b16 %v837
      %v882 = vunpack.c.h.b16 %v837
      %v883 = vunpack.c.l.b16 %v838
      %v884 = vunpack.c.h.b16 %v838
      %v885 = vunpack.c.l.b16 %v839
      %v886 = vunpack.c.h.b16 %v839
      %v887 = vunpack.c.l.b16 %v840
      %v888 = vunpack.c.h.b16 %v840
      %v889 = vpack.c.b16 %v857, %v857
      %v890 = vpack.c.b16 %v858, %v858
      %v891 = vpack.c.b16 %v859, %v859
      %v892 = vpack.c.b16 %v860, %v860
      %v893 = vpack.c.b16 %v861, %v861
      %v894 = vpack.c.b16 %v862, %v862
      %v895 = vpack.c.b16 %v863, %v863
      %v896 = vpack.c.b16 %v864, %v864
      %v897 = vpack.c.b16 %v865, %v865
      %v898 = vpack.c.b16 %v866, %v866
      %v899 = vpack.c.b16 %v867, %v867
      %v900 = vpack.c.b16 %v868, %v868
      %v901 = vpack.c.b16 %v869, %v869
      %v902 = vpack.c.b16 %v870, %v870
      %v903 = vpack.c.b16 %v871, %v871
      %v904 = vpack.c.b16 %v872, %v872
      %v905 = vpack.c.b16 %v873, %v873
      %v906 = vpack.c.b16 %v874, %v874
      %v907 = vpack.c.b16 %v875, %v875
      %v908 = vpack.c.b16 %v876, %v876
      %v909 = vpack.c.b16 %v877, %v877
      %v910 = vpack.c.b16 %v878, %v878
      %v911 = vpack.c.b16 %v879, %v879
      %v912 = vpack.c.b16 %v880, %v880
      %v913 = vpack.c.b16 %v881, %v881
      %v914 = vpack.c.b16 %v882, %v882
      %v915 = vpack.c.b16 %v883, %v883
      %v916 = vpack.c.b16 %v884, %v884
      %v917 = vpack.c.b16 %v885, %v885
      %v918 = vpack.c.b16 %v886, %v886
      %v919 = vpack.c.b16 %v887, %v887
      %v920 = vpack.c.b16 %v888, %v888
      %953 = vst [vmem:[%s234] sm:$0xf] %v889
      %954 = vst [vmem:[%s234 + $0x4] sm:$0xf] %v890
      %955 = vst [vmem:[%s234 + $0x8] sm:$0xf] %v891
      %956 = vst [vmem:[%s234 + $0xc] sm:$0xf] %v892
      %957 = vst [vmem:[%s234 + $0x10] sm:$0xf] %v893
      %958 = vst [vmem:[%s234 + $0x14] sm:$0xf] %v894
      %959 = vst [vmem:[%s234 + $0x18] sm:$0xf] %v895
      %960 = vst [vmem:[%s234 + $0x1c] sm:$0xf] %v896
      %961 = vst [vmem:[%s234 + $0x20] sm:$0xf] %v897
      %962 = vst [vmem:[%s234 + $0x24] sm:$0xf] %v898
      %963 = vst [vmem:[%s234 + $0x28] sm:$0xf] %v899
      %964 = vst [vmem:[%s234 + $0x2c] sm:$0xf] %v900
      %965 = vst [vmem:[%s234 + $0x30] sm:$0xf] %v901
      %966 = vst [vmem:[%s234 + $0x34] sm:$0xf] %v902
      %967 = vst [vmem:[%s234 + $0x38] sm:$0xf] %v903
      %968 = vst [vmem:[%s234 + $0x3c] sm:$0xf] %v904
      %969 = vst [vmem:[%s234 + $0x40] sm:$0xf] %v905
      %970 = vst [vmem:[%s234 + $0x44] sm:$0xf] %v906
      %971 = vst [vmem:[%s234 + $0x48] sm:$0xf] %v907
      %972 = vst [vmem:[%s234 + $0x4c] sm:$0xf] %v908
      %973 = vst [vmem:[%s234 + $0x50] sm:$0xf] %v909
      %974 = vst [vmem:[%s234 + $0x54] sm:$0xf] %v910
      %975 = vst [vmem:[%s234 + $0x58] sm:$0xf] %v911
      %976 = vst [vmem:[%s234 + $0x5c] sm:$0xf] %v912
      %977 = vst [vmem:[%s234 + $0x60] sm:$0xf] %v913
      %978 = vst [vmem:[%s234 + $0x64] sm:$0xf] %v914
      %979 = vst [vmem:[%s234 + $0x68] sm:$0xf] %v915
      %980 = vst [vmem:[%s234 + $0x6c] sm:$0xf] %v916
      %981 = vst [vmem:[%s234 + $0x70] sm:$0xf] %v917
      %982 = vst [vmem:[%s234 + $0x74] sm:$0xf] %v918
      %983 = vst [vmem:[%s234 + $0x78] sm:$0xf] %v919
      %984 = vst [vmem:[%s234 + $0x7c] sm:$0xf] %v920
      %v985 = vpack.c.bf16 %v764, %v762
      %v986 = vpack.c.bf16 %v768, %v766
      %v987 = vpack.c.bf16 %v772, %v770
      %v988 = vpack.c.bf16 %v776, %v774
      %v989 = vpack.c.bf16 %v780, %v778
      %v990 = vpack.c.bf16 %v784, %v782
      %v991 = vpack.c.bf16 %v788, %v786
      %v992 = vpack.c.bf16 %v792, %v790
      %v993 = vpack.c.bf16 %v796, %v794
      %v994 = vpack.c.bf16 %v800, %v798
      %v995 = vpack.c.bf16 %v804, %v802
      %v996 = vpack.c.bf16 %v808, %v806
      %v997 = vpack.c.bf16 %v812, %v810
      %v998 = vpack.c.bf16 %v816, %v814
      %v999 = vpack.c.bf16 %v820, %v818
      %v1000 = vpack.c.bf16 %v824, %v822
      %v1017 = vunpack.c.l.b16 %v985
      %v1018 = vunpack.c.h.b16 %v985
      %v1019 = vunpack.c.l.b16 %v986
      %v1020 = vunpack.c.h.b16 %v986
      %v1021 = vunpack.c.l.b16 %v987
      %v1022 = vunpack.c.h.b16 %v987
      %v1023 = vunpack.c.l.b16 %v988
      %v1024 = vunpack.c.h.b16 %v988
      %v1025 = vunpack.c.l.b16 %v989
      %v1026 = vunpack.c.h.b16 %v989
      %v1027 = vunpack.c.l.b16 %v990
      %v1028 = vunpack.c.h.b16 %v990
      %v1029 = vunpack.c.l.b16 %v991
      %v1030 = vunpack.c.h.b16 %v991
      %v1031 = vunpack.c.l.b16 %v992
      %v1032 = vunpack.c.h.b16 %v992
      %v1033 = vunpack.c.l.b16 %v993
      %v1034 = vunpack.c.h.b16 %v993
      %v1035 = vunpack.c.l.b16 %v994
      %v1036 = vunpack.c.h.b16 %v994
      %v1037 = vunpack.c.l.b16 %v995
      %v1038 = vunpack.c.h.b16 %v995
      %v1039 = vunpack.c.l.b16 %v996
      %v1040 = vunpack.c.h.b16 %v996
      %v1041 = vunpack.c.l.b16 %v997
      %v1042 = vunpack.c.h.b16 %v997
      %v1043 = vunpack.c.l.b16 %v998
      %v1044 = vunpack.c.h.b16 %v998
      %v1045 = vunpack.c.l.b16 %v999
      %v1046 = vunpack.c.h.b16 %v999
      %v1047 = vunpack.c.l.b16 %v1000
      %v1048 = vunpack.c.h.b16 %v1000
      %v1049 = vpack.c.b16 %v1017, %v1017
      %v1050 = vpack.c.b16 %v1018, %v1018
      %v1051 = vpack.c.b16 %v1019, %v1019
      %v1052 = vpack.c.b16 %v1020, %v1020
      %v1053 = vpack.c.b16 %v1021, %v1021
      %v1054 = vpack.c.b16 %v1022, %v1022
      %v1055 = vpack.c.b16 %v1023, %v1023
      %v1056 = vpack.c.b16 %v1024, %v1024
      %v1057 = vpack.c.b16 %v1025, %v1025
      %v1058 = vpack.c.b16 %v1026, %v1026
      %v1059 = vpack.c.b16 %v1027, %v1027
      %v1060 = vpack.c.b16 %v1028, %v1028
      %v1061 = vpack.c.b16 %v1029, %v1029
      %v1062 = vpack.c.b16 %v1030, %v1030
      %v1063 = vpack.c.b16 %v1031, %v1031
      %v1064 = vpack.c.b16 %v1032, %v1032
      %v1065 = vpack.c.b16 %v1033, %v1033
      %v1066 = vpack.c.b16 %v1034, %v1034
      %v1067 = vpack.c.b16 %v1035, %v1035
      %v1068 = vpack.c.b16 %v1036, %v1036
      %v1069 = vpack.c.b16 %v1037, %v1037
      %v1070 = vpack.c.b16 %v1038, %v1038
      %v1071 = vpack.c.b16 %v1039, %v1039
      %v1072 = vpack.c.b16 %v1040, %v1040
      %v1073 = vpack.c.b16 %v1041, %v1041
      %v1074 = vpack.c.b16 %v1042, %v1042
      %v1075 = vpack.c.b16 %v1043, %v1043
      %v1076 = vpack.c.b16 %v1044, %v1044
      %v1077 = vpack.c.b16 %v1045, %v1045
      %v1078 = vpack.c.b16 %v1046, %v1046
      %v1079 = vpack.c.b16 %v1047, %v1047
      %v1080 = vpack.c.b16 %v1048, %v1048
      %1113 = vst [vmem:[%s240] sm:$0xf] %v1049
      %1114 = vst [vmem:[%s240 + $0x4] sm:$0xf] %v1050
      %1115 = vst [vmem:[%s240 + $0x8] sm:$0xf] %v1051
      %1116 = vst [vmem:[%s240 + $0xc] sm:$0xf] %v1052
      %1117 = vst [vmem:[%s240 + $0x10] sm:$0xf] %v1053
      %1118 = vst [vmem:[%s240 + $0x14] sm:$0xf] %v1054
      %1119 = vst [vmem:[%s240 + $0x18] sm:$0xf] %v1055
      %1120 = vst [vmem:[%s240 + $0x1c] sm:$0xf] %v1056
      %1121 = vst [vmem:[%s240 + $0x20] sm:$0xf] %v1057
      %1122 = vst [vmem:[%s240 + $0x24] sm:$0xf] %v1058
      %1123 = vst [vmem:[%s240 + $0x28] sm:$0xf] %v1059
      %1124 = vst [vmem:[%s240 + $0x2c] sm:$0xf] %v1060
      %1125 = vst [vmem:[%s240 + $0x30] sm:$0xf] %v1061
      %1126 = vst [vmem:[%s240 + $0x34] sm:$0xf] %v1062
      %1127 = vst [vmem:[%s240 + $0x38] sm:$0xf] %v1063
      %1128 = vst [vmem:[%s240 + $0x3c] sm:$0xf] %v1064
      %1129 = vst [vmem:[%s240 + $0x40] sm:$0xf] %v1065
      %1130 = vst [vmem:[%s240 + $0x44] sm:$0xf] %v1066
      %1131 = vst [vmem:[%s240 + $0x48] sm:$0xf] %v1067
      %1132 = vst [vmem:[%s240 + $0x4c] sm:$0xf] %v1068
      %1133 = vst [vmem:[%s240 + $0x50] sm:$0xf] %v1069
      %1134 = vst [vmem:[%s240 + $0x54] sm:$0xf] %v1070
      %1135 = vst [vmem:[%s240 + $0x58] sm:$0xf] %v1071
      %1136 = vst [vmem:[%s240 + $0x5c] sm:$0xf] %v1072
      %1137 = vst [vmem:[%s240 + $0x60] sm:$0xf] %v1073
      %1138 = vst [vmem:[%s240 + $0x64] sm:$0xf] %v1074
      %1139 = vst [vmem:[%s240 + $0x68] sm:$0xf] %v1075
      %1140 = vst [vmem:[%s240 + $0x6c] sm:$0xf] %v1076
      %1141 = vst [vmem:[%s240 + $0x70] sm:$0xf] %v1077
      %1142 = vst [vmem:[%s240 + $0x74] sm:$0xf] %v1078
      %1143 = vst [vmem:[%s240 + $0x78] sm:$0xf] %v1079
      %1144 = vst [vmem:[%s240 + $0x7c] sm:$0xf] %v1080
      %s1145 = smul.u32 32, %s17
      %p1146 = scmp.lt.s32.totalorder %s1145, 63
      %s1147 = scalar_select %p1146, %s1145, 63
      %s1148 = smul.addr %s1147, 4
      %s1149 = scalar_lea.vmem %s4, %s1148
      %s1150 = smul.u32 32, %s17
      %p1151 = scmp.lt.s32.totalorder %s1150, 63
      %s1152 = scalar_select %p1151, %s1150, 63
      %s1153 = smul.addr %s1152, 4
      %s1154 = scalar_lea.vmem %s5, %s1153
      // Predicated region
      $region37: #{air_bottleneck_forward.5} parent=35 // pred_check
        %p1155 = pneg %p124
      $region38: #{air_bottleneck_forward.5} parent=35 // pred_check_branch
        %1157 = sbr.rel (%p1155) target = $region40
      $region39: #{air_bottleneck_forward.5} parent=35 // pred_region
        %s1158 = smul.u32 32, %s17
      $region40: #{air_bottleneck_forward.5} parent=35 // pred_fallthru
        _
      // Predicated region
      $region41: #{air_bottleneck_forward.5} parent=35 // pred_check
        %p1159 = pneg %p150
      $region42: #{air_bottleneck_forward.5} parent=35 // pred_check_branch
        %1161 = sbr.rel (%p1159) target = $region44
      $region43: #{air_bottleneck_forward.5} parent=35 // pred_region
        %s1162 = smul.u32 32, %s17
      $region44: #{air_bottleneck_forward.5} parent=35 // pred_fallthru
        _
    $region36: #{air_bottleneck_forward.5} parent=5 // pred_fallthru
      _
    %p1163 = scmp.le.s32.totalorder 2, %s12
    // Predicated region
    $region45: #{air_bottleneck_forward.5} parent=5 // pred_check
      %p1164 = pneg %p1163
    $region46: #{air_bottleneck_forward.5} parent=5 // pred_check_branch
      %1166 = sbr.rel (%p1164) target = $region48
    $region47: #{air_bottleneck_forward.5} parent=5 // pred_region
      %s1167 = ssub.s32 %s12, 2
      // Predicated region
      $region49: #{air_bottleneck_forward.5} parent=47 // pred_check
        %p1168 = pneg %p130
      $region50: #{air_bottleneck_forward.5} parent=47 // pred_check_branch
        %1170 = sbr.rel (%p1168) target = $region52
      $region51: #{air_bottleneck_forward.5} parent=47 // pred_region
        %s1171 = smul.u32 32, %s18
        %p1172 = scmp.lt.s32.totalorder %s1171, 63
        %s1173 = scalar_select %p1172, %s1171, 63
        %s1174 = smul.addr %s1173, 4
        %s1175 = scalar_lea.vmem %s4, %s1174
      $region52: #{air_bottleneck_forward.5} parent=47 // pred_fallthru
        _
      // Predicated region
      $region53: #{air_bottleneck_forward.5} parent=47 // pred_check
        %p1176 = pneg %p156
      $region54: #{air_bottleneck_forward.5} parent=47 // pred_check_branch
        %1178 = sbr.rel (%p1176) target = $region56
      $region55: #{air_bottleneck_forward.5} parent=47 // pred_region
        %s1179 = smul.u32 32, %s18
        %p1180 = scmp.lt.s32.totalorder %s1179, 63
        %s1181 = scalar_select %p1180, %s1179, 63
        %s1182 = smul.addr %s1181, 4
        %s1183 = scalar_lea.vmem %s5, %s1182
      $region56: #{air_bottleneck_forward.5} parent=47 // pred_fallthru
        _
    $region48: #{air_bottleneck_forward.5} parent=5 // pred_fallthru
      _
  $region6: #{air_bottleneck_forward.5} parent=0 // loop_footer
    %s16 = sadd.s32 1, %s12
  $region7: #{air_bottleneck_forward.5} parent=0 // loop_footer_branch
    %11 = sbr.rel target = $region3
  $region8: #{air_bottleneck_forward.5} parent=0 // loop_exit
    _

// kernel: air_bottleneck_forward.9
$region0: #{air_bottleneck_forward.9}
  #allocation0 [shape = 'u32[]', space=smem, size = 0x4, offset = 0x4, fixed_abs, tag = 'smem constant byte address 0x4 - core index']
  #allocation1 [shape = 'u32[144,128]{1,0:T(1,128)}', space=vmem, size = 0x12000, scoped, tag = 'internal scratch']
  %s0 = inlined_call_operand.vmem [shape: bf16[512,128], index: 0, kind: input, shape index: {}]
  %s1 = inlined_call_operand.vmem [shape: bf16[512,128], index: 1, kind: input, shape index: {}]
  %s2 = inlined_call_operand.vmem [shape: f32[512,128], index: 2, kind: input, shape index: {}]
  %s3 = inlined_call_operand.vmem [shape: bf16[128,128], index: 3, kind: input, shape index: {}]
  %s4 = inlined_call_operand.vmem [shape: bf16[128,128], index: 4, kind: input, shape index: {}]
  %s5 = inlined_call_operand.vmem [shape: f32[1,128], index: 5, kind: input, shape index: {}]
  %s6 = inlined_call_operand.vmem [shape: f32[1,128], index: 6, kind: input, shape index: {}]
  %s7 = inlined_call_operand.hbm [shape: f32[512,128], index: 7, kind: output, shape index: {}]
  %s8 = sld [smem:[#allocation0]]
  $region61: #{air_bottleneck_forward.9} parent=0
    _
  %s10 = ssub.s32 1, %s8
  %s11 = scalar_select 0, %s10, %s8
  $region1: #{air_bottleneck_forward.9} parent=0
    #allocation2 [shape = 'u8[262144]{0}', space=vmem, size = 0x40000, scoped, tag = 'output window, operand 0']
    #allocation3 [shape = 's32[2]{0}', space=sflag, size = 0x8, scoped, tag = 'scoped memory for air_bottleneck_forward.9']
    %12 = vsyncpa [#allocation3], 0
    %s13 = scalar_lea.sflag [#allocation3], 1
    %14 = vsyncpa %s13, 0
    loop: start=0, step=1, limit=4
    $region2: #{air_bottleneck_forward.9} parent=1 // loop_pre_header
      _
    $region3: #{air_bottleneck_forward.9} parent=1 // loop_header
      %s16 = sphi 0, %s20
      %p17 = scmp.ge.s32.totalorder %s16, 4
      %s26 = sphi 0, %s28
      %s29 = sphi 0, %s26
      %s30 = sphi 0, %s29
      %s46 = sphi 0, %s30
      %s52 = sphi 0, %s54
      %s55 = sphi 0, %s52
      %s56 = sphi 0, %s55
      %s72 = sphi 0, %s56
      %s78 = sphi 0, %s80
      %s81 = sphi 0, %s78
      %s82 = sphi 0, %s81
      %s98 = sphi 0, %s82
      %s102 = sphi 0, %s102
      %s104 = sphi 0, %s102
      %s105 = sphi 0, %s104
      %s119 = sphi 0, %s105
      %s123 = sphi 0, %s123
      %s125 = sphi 0, %s123
      %s126 = sphi 0, %s125
      %s140 = sphi 0, %s126
      %s144 = sphi 0, %s144
      %s146 = sphi 0, %s144
      %s147 = sphi 0, %s146
      %s161 = sphi 0, %s147
      %s165 = sphi 0, %s165
      %s167 = sphi 0, %s165
      %s168 = sphi 0, %s167
      %s182 = sphi 0, %s168
      %s188 = sphi 0, %s190
      %s191 = sphi 0, %s188
      %s192 = sphi 0, %s191
      %s208 = sphi 0, %s192
    $region4: #{air_bottleneck_forward.9} parent=1 // loop_header_branch
      %19 = sbr.rel (%p17) target = $region8
    $region5: #{air_bottleneck_forward.9} parent=1 // loop_body
      %s21 = ssub.s32 %s16, 1
      %s22 = ssub.s32 %s16, 2
      %s23 = sadd.s32 %s16, 1
      %s24 = ssub.s32 %s16, %s23
      %p25 = scmp.eq.s32.totalorder %s24, 0
      %s27 = sadd.s32 %s26, 1
      %s28 = scalar_select %p25, %s26, %s27
      %p31 = pneg %p25
      %p32 = scmp.eq.s32.totalorder %s16, 1
      %p33 = por %p31, %p32
      %p34 = scmp.ne.s32.totalorder %s26, %s29
      %p35 = scmp.eq.s32.totalorder %s16, 0
      %p36 = por %p34, %p35
      %p37 = scmp.ne.s32.totalorder %s26, %s29
      %p38 = scmp.eq.s32.totalorder %s21, 1
      %p39 = por %p37, %p38
      %p40 = scmp.ne.s32.totalorder %s29, %s30
      %p41 = scmp.eq.s32.totalorder %s21, 0
      %p42 = por %p40, %p41
      %p43 = scmp.ne.s32.totalorder %s29, %s30
      %p44 = scmp.eq.s32.totalorder %s22, 1
      %p45 = por %p43, %p44
      %p47 = scmp.ne.s32.totalorder %s30, %s46
      %p48 = scmp.eq.s32.totalorder %s22, 0
      %p49 = por %p47, %p48
      %s50 = ssub.s32 %s16, %s23
      %p51 = scmp.eq.s32.totalorder %s50, 0
      %s53 = sadd.s32 %s52, 1
      %s54 = scalar_select %p51, %s52, %s53
      %p57 = pneg %p51
      %p58 = scmp.eq.s32.totalorder %s16, 1
      %p59 = por %p57, %p58
      %p60 = scmp.ne.s32.totalorder %s52, %s55
      %p61 = scmp.eq.s32.totalorder %s16, 0
      %p62 = por %p60, %p61
      %p63 = scmp.ne.s32.totalorder %s52, %s55
      %p64 = scmp.eq.s32.totalorder %s21, 1
      %p65 = por %p63, %p64
      %p66 = scmp.ne.s32.totalorder %s55, %s56
      %p67 = scmp.eq.s32.totalorder %s21, 0
      %p68 = por %p66, %p67
      %p69 = scmp.ne.s32.totalorder %s55, %s56
      %p70 = scmp.eq.s32.totalorder %s22, 1
      %p71 = por %p69, %p70
      %p73 = scmp.ne.s32.totalorder %s56, %s72
      %p74 = scmp.eq.s32.totalorder %s22, 0
      %p75 = por %p73, %p74
      %s76 = ssub.s32 %s16, %s23
      %p77 = scmp.eq.s32.totalorder %s76, 0
      %s79 = sadd.s32 %s78, 1
      %s80 = scalar_select %p77, %s78, %s79
      %p83 = pneg %p77
      %p84 = scmp.eq.s32.totalorder %s16, 1
      %p85 = por %p83, %p84
      %p86 = scmp.ne.s32.totalorder %s78, %s81
      %p87 = scmp.eq.s32.totalorder %s16, 0
      %p88 = por %p86, %p87
      %p89 = scmp.ne.s32.totalorder %s78, %s81
      %p90 = scmp.eq.s32.totalorder %s21, 1
      %p91 = por %p89, %p90
      %p92 = scmp.ne.s32.totalorder %s81, %s82
      %p93 = scmp.eq.s32.totalorder %s21, 0
      %p94 = por %p92, %p93
      %p95 = scmp.ne.s32.totalorder %s81, %s82
      %p96 = scmp.eq.s32.totalorder %s22, 1
      %p97 = por %p95, %p96
      %p99 = scmp.ne.s32.totalorder %s82, %s98
      %p100 = scmp.eq.s32.totalorder %s22, 0
      %p101 = por %p99, %p100
      %s103 = sadd.s32 %s102, 1
      %p106 = scmp.eq.s32.totalorder %s16, 1
      %p107 = scmp.ne.s32.totalorder %s102, %s104
      %p108 = scmp.eq.s32.totalorder %s16, 0
      %p109 = por %p107, %p108
      %p110 = scmp.ne.s32.totalorder %s102, %s104
      %p111 = scmp.eq.s32.totalorder %s21, 1
      %p112 = por %p110, %p111
      %p113 = scmp.ne.s32.totalorder %s104, %s105
      %p114 = scmp.eq.s32.totalorder %s21, 0
      %p115 = por %p113, %p114
      %p116 = scmp.ne.s32.totalorder %s104, %s105
      %p117 = scmp.eq.s32.totalorder %s22, 1
      %p118 = por %p116, %p117
      %p120 = scmp.ne.s32.totalorder %s105, %s119
      %p121 = scmp.eq.s32.totalorder %s22, 0
      %p122 = por %p120, %p121
      %s124 = sadd.s32 %s123, 1
      %p127 = scmp.eq.s32.totalorder %s16, 1
      %p128 = scmp.ne.s32.totalorder %s123, %s125
      %p129 = scmp.eq.s32.totalorder %s16, 0
      %p130 = por %p128, %p129
      %p131 = scmp.ne.s32.totalorder %s123, %s125
      %p132 = scmp.eq.s32.totalorder %s21, 1
      %p133 = por %p131, %p132
      %p134 = scmp.ne.s32.totalorder %s125, %s126
      %p135 = scmp.eq.s32.totalorder %s21, 0
      %p136 = por %p134, %p135
      %p137 = scmp.ne.s32.totalorder %s125, %s126
      %p138 = scmp.eq.s32.totalorder %s22, 1
      %p139 = por %p137, %p138
      %p141 = scmp.ne.s32.totalorder %s126, %s140
      %p142 = scmp.eq.s32.totalorder %s22, 0
      %p143 = por %p141, %p142
      %s145 = sadd.s32 %s144, 1
      %p148 = scmp.eq.s32.totalorder %s16, 1
      %p149 = scmp.ne.s32.totalorder %s144, %s146
      %p150 = scmp.eq.s32.totalorder %s16, 0
      %p151 = por %p149, %p150
      %p152 = scmp.ne.s32.totalorder %s144, %s146
      %p153 = scmp.eq.s32.totalorder %s21, 1
      %p154 = por %p152, %p153
      %p155 = scmp.ne.s32.totalorder %s146, %s147
      %p156 = scmp.eq.s32.totalorder %s21, 0
      %p157 = por %p155, %p156
      %p158 = scmp.ne.s32.totalorder %s146, %s147
      %p159 = scmp.eq.s32.totalorder %s22, 1
      %p160 = por %p158, %p159
      %p162 = scmp.ne.s32.totalorder %s147, %s161
      %p163 = scmp.eq.s32.totalorder %s22, 0
      %p164 = por %p162, %p163
      %s166 = sadd.s32 %s165, 1
      %p169 = scmp.eq.s32.totalorder %s16, 1
      %p170 = scmp.ne.s32.totalorder %s165, %s167
      %p171 = scmp.eq.s32.totalorder %s16, 0
      %p172 = por %p170, %p171
      %p173 = scmp.ne.s32.totalorder %s165, %s167
      %p174 = scmp.eq.s32.totalorder %s21, 1
      %p175 = por %p173, %p174
      %p176 = scmp.ne.s32.totalorder %s167, %s168
      %p177 = scmp.eq.s32.totalorder %s21, 0
      %p178 = por %p176, %p177
      %p179 = scmp.ne.s32.totalorder %s167, %s168
      %p180 = scmp.eq.s32.totalorder %s22, 1
      %p181 = por %p179, %p180
      %p183 = scmp.ne.s32.totalorder %s168, %s182
      %p184 = scmp.eq.s32.totalorder %s22, 0
      %p185 = por %p183, %p184
      %s186 = ssub.s32 %s16, %s23
      %p187 = scmp.eq.s32.totalorder %s186, 0
      %s189 = sadd.s32 %s188, 1
      %s190 = scalar_select %p187, %s188, %s189
      %p193 = pneg %p187
      %p194 = scmp.eq.s32.totalorder %s16, 1
      %p195 = por %p193, %p194
      %p196 = scmp.ne.s32.totalorder %s188, %s191
      %p197 = scmp.eq.s32.totalorder %s16, 0
      %p198 = por %p196, %p197
      %p199 = scmp.ne.s32.totalorder %s188, %s191
      %p200 = scmp.eq.s32.totalorder %s21, 1
      %p201 = por %p199, %p200
      %p202 = scmp.ne.s32.totalorder %s191, %s192
      %p203 = scmp.eq.s32.totalorder %s21, 0
      %p204 = por %p202, %p203
      %p205 = scmp.ne.s32.totalorder %s191, %s192
      %p206 = scmp.eq.s32.totalorder %s22, 1
      %p207 = por %p205, %p206
      %p209 = scmp.ne.s32.totalorder %s192, %s208
      %p210 = scmp.eq.s32.totalorder %s22, 0
      %p211 = por %p209, %p210
      %p212 = scmp.le.s32.totalorder 1, %s16
      %p213 = scmp.lt.s32.totalorder %s16, 3
      %p214 = pnand %p212, %p213
      %p215 = pneg %p214
      // Predicated region
      $region9: #{air_bottleneck_forward.9} parent=5 // pred_check
        _
      $region10: #{air_bottleneck_forward.9} parent=5 // pred_check_branch
        %217 = sbr.rel (%p214) target = $region12
      $region11: #{air_bottleneck_forward.9} parent=5 // pred_region
        %s218 = ssub.s32 %s16, 1
        // Predicated region
        $region13: #{air_bottleneck_forward.9} parent=11 // pred_check
          %p219 = pneg %p115
        $region14: #{air_bottleneck_forward.9} parent=11 // pred_check_branch
          %221 = sbr.rel (%p219) target = $region16
        $region15: #{air_bottleneck_forward.9} parent=11 // pred_region
          _
        $region16: #{air_bottleneck_forward.9} parent=11 // pred_fallthru
          _
        // Predicated region
        $region17: #{air_bottleneck_forward.9} parent=11 // pred_check
          %p222 = pneg %p136
        $region18: #{air_bottleneck_forward.9} parent=11 // pred_check_branch
          %224 = sbr.rel (%p222) target = $region20
        $region19: #{air_bottleneck_forward.9} parent=11 // pred_region
          _
        $region20: #{air_bottleneck_forward.9} parent=11 // pred_fallthru
          _
        // Predicated region
        $region21: #{air_bottleneck_forward.9} parent=11 // pred_check
          %p225 = pneg %p157
        $region22: #{air_bottleneck_forward.9} parent=11 // pred_check_branch
          %227 = sbr.rel (%p225) target = $region24
        $region23: #{air_bottleneck_forward.9} parent=11 // pred_region
          _
        $region24: #{air_bottleneck_forward.9} parent=11 // pred_fallthru
          _
        // Predicated region
        $region25: #{air_bottleneck_forward.9} parent=11 // pred_check
          %p228 = pneg %p178
        $region26: #{air_bottleneck_forward.9} parent=11 // pred_check_branch
          %230 = sbr.rel (%p228) target = $region28
        $region27: #{air_bottleneck_forward.9} parent=11 // pred_region
          _
        $region28: #{air_bottleneck_forward.9} parent=11 // pred_fallthru
          _
      $region12: #{air_bottleneck_forward.9} parent=5 // pred_fallthru
        _
      %p231 = scmp.lt.s32.totalorder %s16, 2
      // Predicated region
      $region29: #{air_bottleneck_forward.9} parent=5 // pred_check
        %p232 = pneg %p231
      $region30: #{air_bottleneck_forward.9} parent=5 // pred_check_branch
        %234 = sbr.rel (%p232) target = $region32
      $region31: #{air_bottleneck_forward.9} parent=5 // pred_region
        // Predicated region
        $region33: #{air_bottleneck_forward.9} parent=31 // pred_check
          %p235 = pneg %p36
        $region34: #{air_bottleneck_forward.9} parent=31 // pred_check_branch
          %237 = sbr.rel (%p235) target = $region36
        $region35: #{air_bottleneck_forward.9} parent=31 // pred_region
          %s238 = smul.u32 32, %s16
          %p239 = scmp.lt.s32.totalorder %s238, 63
          %s240 = scalar_select %p239, %s238, 63
          %s241 = smul.addr %s240, 4
          %s242 = scalar_lea.vmem %s0, %s241
          %s243 = smul.u32 32, %s16
        $region36: #{air_bottleneck_forward.9} parent=31 // pred_fallthru
          _
        // Predicated region
        $region37: #{air_bottleneck_forward.9} parent=31 // pred_check
          %p244 = pneg %p62
        $region38: #{air_bottleneck_forward.9} parent=31 // pred_check_branch
          %246 = sbr.rel (%p244) target = $region40
        $region39: #{air_bottleneck_forward.9} parent=31 // pred_region
          %s247 = smul.u32 32, %s16
          %p248 = scmp.lt.s32.totalorder %s247, 63
          %s249 = scalar_select %p248, %s247, 63
          %s250 = smul.addr %s249, 4
          %s251 = scalar_lea.vmem %s1, %s250
          %s252 = smul.u32 32, %s16
        $region40: #{air_bottleneck_forward.9} parent=31 // pred_fallthru
          _
        // Predicated region
        $region41: #{air_bottleneck_forward.9} parent=31 // pred_check
          %p253 = pneg %p88
        $region42: #{air_bottleneck_forward.9} parent=31 // pred_check_branch
          %255 = sbr.rel (%p253) target = $region44
        $region43: #{air_bottleneck_forward.9} parent=31 // pred_region
          %s256 = smul.u32 32, %s16
          %p257 = scmp.lt.s32.totalorder %s256, 63
          %s258 = scalar_select %p257, %s256, 63
          %s259 = smul.addr %s258, 8
          %s260 = scalar_lea.vmem %s2, %s259
          %s261 = smul.u32 32, %s16
        $region44: #{air_bottleneck_forward.9} parent=31 // pred_fallthru
          _
      $region32: #{air_bottleneck_forward.9} parent=5 // pred_fallthru
        _
      %p262 = scmp.le.s32.totalorder 1, %s16
      %p263 = scmp.lt.s32.totalorder %s16, 3
      %p264 = pnand %p262, %p263
      %p265 = pneg %p264
      // Predicated region
      $region45: #{air_bottleneck_forward.9} parent=5 // pred_check
        _
      $region46: #{air_bottleneck_forward.9} parent=5 // pred_check_branch
        %267 = sbr.rel (%p264) target = $region48
      $region47: #{air_bottleneck_forward.9} parent=5 // pred_region
        %s268 = ssub.s32 %s16, 1
        %s269 = smul.u32 32, %s21
        %p270 = scmp.lt.s32.totalorder %s269, 63
        %s271 = scalar_select %p270, %s269, 63
        %s272 = smul.addr %s271, 4
        %s273 = scalar_lea.vmem %s0, %s272
        %p274 = pneg %p42
        %p275 = pneg %p39
        %s276 = smul.u32 32, %s21
        %p277 = scmp.lt.s32.totalorder %s276, 63
        %s278 = scalar_select %p277, %s276, 63
        %s279 = smul.addr %s278, 4
        %s280 = scalar_lea.vmem %s1, %s279
        %p281 = pneg %p68
        %p282 = pneg %p65
        %s283 = smul.u32 32, %s21
        %p284 = scmp.lt.s32.totalorder %s283, 63
        %s285 = scalar_select %p284, %s283, 63
        %s286 = smul.addr %s285, 8
        %s287 = scalar_lea.vmem %s2, %s286
        %p288 = pneg %p94
        %p289 = pneg %p91
        %p290 = pneg %p115
        %p291 = pneg %p112
        %p292 = pneg %p136
        %p293 = pneg %p133
        %p294 = pneg %p157
        %p295 = pneg %p154
        %p296 = pneg %p178
        %p297 = pneg %p175
        %p298 = pneg %p204
        %p299 = pneg %p201
        %s300 = sand.u32 %s191, 1
        %s301 = scalar_lea.sflag [#allocation3], %s300
        %s302 = sand.u32 %s191, 1
        %s303 = smul.addr %s302, 256
        %s304 = scalar_lea.vmem [#allocation2], %s303
        %s305 = smul.u32 32, %s21
        %p306 = scmp.lt.s32.totalorder %s305, 63
        %s307 = scalar_select %p306, %s305, 63
        %s308 = smul.addr %s307, 4
        %s309 = scalar_lea.vmem %s0, %s308
        %s310 = smul.u32 32, %s21
        %s311 = smul.u32 32, %s21
        %p312 = scmp.lt.s32.totalorder %s311, 63
        %s313 = scalar_select %p312, %s311, 63
        %s314 = smul.addr %s313, 4
        %s315 = scalar_lea.vmem %s1, %s314
        %s316 = smul.u32 32, %s21
        %s317 = smul.u32 32, %s21
        %p318 = scmp.lt.s32.totalorder %s317, 63
        %s319 = scalar_select %p318, %s317, 63
        %s320 = smul.addr %s319, 8
        %s321 = scalar_lea.vmem %s2, %s320
        %s322 = smul.u32 32, %s21
        %s323 = smul.u32 32, %s21
        %v325 = vld [vmem:[%s309] sm:$0xf]
        %v326 = vld [vmem:[%s309 + $0x4] sm:$0xf]
        %v327 = vld [vmem:[%s309 + $0x8] sm:$0xf]
        %v328 = vld [vmem:[%s309 + $0xc] sm:$0xf]
        %v329 = vld [vmem:[%s309 + $0x10] sm:$0xf]
        %v330 = vld [vmem:[%s309 + $0x14] sm:$0xf]
        %v331 = vld [vmem:[%s309 + $0x18] sm:$0xf]
        %v332 = vld [vmem:[%s309 + $0x1c] sm:$0xf]
        %v333 = vld [vmem:[%s309 + $0x20] sm:$0xf]
        %v334 = vld [vmem:[%s309 + $0x24] sm:$0xf]
        %v335 = vld [vmem:[%s309 + $0x28] sm:$0xf]
        %v336 = vld [vmem:[%s309 + $0x2c] sm:$0xf]
        %v337 = vld [vmem:[%s309 + $0x30] sm:$0xf]
        %v338 = vld [vmem:[%s309 + $0x34] sm:$0xf]
        %v339 = vld [vmem:[%s309 + $0x38] sm:$0xf]
        %v340 = vld [vmem:[%s309 + $0x3c] sm:$0xf]
        %v341 = vld [vmem:[%s309 + $0x40] sm:$0xf]
        %v342 = vld [vmem:[%s309 + $0x44] sm:$0xf]
        %v343 = vld [vmem:[%s309 + $0x48] sm:$0xf]
        %v344 = vld [vmem:[%s309 + $0x4c] sm:$0xf]
        %v345 = vld [vmem:[%s309 + $0x50] sm:$0xf]
        %v346 = vld [vmem:[%s309 + $0x54] sm:$0xf]
        %v347 = vld [vmem:[%s309 + $0x58] sm:$0xf]
        %v348 = vld [vmem:[%s309 + $0x5c] sm:$0xf]
        %v349 = vld [vmem:[%s309 + $0x60] sm:$0xf]
        %v350 = vld [vmem:[%s309 + $0x64] sm:$0xf]
        %v351 = vld [vmem:[%s309 + $0x68] sm:$0xf]
        %v352 = vld [vmem:[%s309 + $0x6c] sm:$0xf]
        %v353 = vld [vmem:[%s309 + $0x70] sm:$0xf]
        %v354 = vld [vmem:[%s309 + $0x74] sm:$0xf]
        %v355 = vld [vmem:[%s309 + $0x78] sm:$0xf]
        %v356 = vld [vmem:[%s309 + $0x7c] sm:$0xf]
        %v357 = vld [vmem:[%s3] sm:$0xf]
        %v358 = vld [vmem:[%s3 + $0x4] sm:$0xf]
        %v359 = vld [vmem:[%s3 + $0x8] sm:$0xf]
        %v360 = vld [vmem:[%s3 + $0xc] sm:$0xf]
        %v361 = vld [vmem:[%s3 + $0x10] sm:$0xf]
        %v362 = vld [vmem:[%s3 + $0x14] sm:$0xf]
        %v363 = vld [vmem:[%s3 + $0x18] sm:$0xf]
        %v364 = vld [vmem:[%s3 + $0x1c] sm:$0xf]
        %v365 = vld [vmem:[%s3 + $0x20] sm:$0xf]
        %v366 = vld [vmem:[%s3 + $0x24] sm:$0xf]
        %v367 = vld [vmem:[%s3 + $0x28] sm:$0xf]
        %v368 = vld [vmem:[%s3 + $0x2c] sm:$0xf]
        %v369 = vld [vmem:[%s3 + $0x30] sm:$0xf]
        %v370 = vld [vmem:[%s3 + $0x34] sm:$0xf]
        %v371 = vld [vmem:[%s3 + $0x38] sm:$0xf]
        %v372 = vld [vmem:[%s3 + $0x3c] sm:$0xf]
        %v373 = vld [vmem:[%s315] sm:$0xf]
        %v374 = vld [vmem:[%s315 + $0x4] sm:$0xf]
        %v375 = vld [vmem:[%s315 + $0x8] sm:$0xf]
        %v376 = vld [vmem:[%s315 + $0xc] sm:$0xf]
        %v377 = vld [vmem:[%s315 + $0x10] sm:$0xf]
        %v378 = vld [vmem:[%s315 + $0x14] sm:$0xf]
        %v379 = vld [vmem:[%s315 + $0x18] sm:$0xf]
        %v380 = vld [vmem:[%s315 + $0x1c] sm:$0xf]
        %v381 = vld [vmem:[%s315 + $0x20] sm:$0xf]
        %v382 = vld [vmem:[%s315 + $0x24] sm:$0xf]
        %v383 = vld [vmem:[%s315 + $0x28] sm:$0xf]
        %v384 = vld [vmem:[%s315 + $0x2c] sm:$0xf]
        %v385 = vld [vmem:[%s315 + $0x30] sm:$0xf]
        %v386 = vld [vmem:[%s315 + $0x34] sm:$0xf]
        %v387 = vld [vmem:[%s315 + $0x38] sm:$0xf]
        %v388 = vld [vmem:[%s315 + $0x3c] sm:$0xf]
        %v389 = vld [vmem:[%s315 + $0x40] sm:$0xf]
        %v390 = vld [vmem:[%s315 + $0x44] sm:$0xf]
        %v391 = vld [vmem:[%s315 + $0x48] sm:$0xf]
        %v392 = vld [vmem:[%s315 + $0x4c] sm:$0xf]
        %v393 = vld [vmem:[%s315 + $0x50] sm:$0xf]
        %v394 = vld [vmem:[%s315 + $0x54] sm:$0xf]
        %v395 = vld [vmem:[%s315 + $0x58] sm:$0xf]
        %v396 = vld [vmem:[%s315 + $0x5c] sm:$0xf]
        %v397 = vld [vmem:[%s315 + $0x60] sm:$0xf]
        %v398 = vld [vmem:[%s315 + $0x64] sm:$0xf]
        %v399 = vld [vmem:[%s315 + $0x68] sm:$0xf]
        %v400 = vld [vmem:[%s315 + $0x6c] sm:$0xf]
        %v401 = vld [vmem:[%s315 + $0x70] sm:$0xf]
        %v402 = vld [vmem:[%s315 + $0x74] sm:$0xf]
        %v403 = vld [vmem:[%s315 + $0x78] sm:$0xf]
        %v404 = vld [vmem:[%s315 + $0x7c] sm:$0xf]
        %v405 = vld [vmem:[%s4] sm:$0xf]
        %v406 = vld [vmem:[%s4 + $0x4] sm:$0xf]
        %v407 = vld [vmem:[%s4 + $0x8] sm:$0xf]
        %v408 = vld [vmem:[%s4 + $0xc] sm:$0xf]
        %v409 = vld [vmem:[%s4 + $0x10] sm:$0xf]
        %v410 = vld [vmem:[%s4 + $0x14] sm:$0xf]
        %v411 = vld [vmem:[%s4 + $0x18] sm:$0xf]
        %v412 = vld [vmem:[%s4 + $0x1c] sm:$0xf]
        %v413 = vld [vmem:[%s4 + $0x20] sm:$0xf]
        %v414 = vld [vmem:[%s4 + $0x24] sm:$0xf]
        %v415 = vld [vmem:[%s4 + $0x28] sm:$0xf]
        %v416 = vld [vmem:[%s4 + $0x2c] sm:$0xf]
        %v417 = vld [vmem:[%s4 + $0x30] sm:$0xf]
        %v418 = vld [vmem:[%s4 + $0x34] sm:$0xf]
        %v419 = vld [vmem:[%s4 + $0x38] sm:$0xf]
        %v420 = vld [vmem:[%s4 + $0x3c] sm:$0xf]
        %v453 = vunpack.c.l.b16 %v373
        %v454 = vunpack.c.l.b16 %v374
        %v455 = vunpack.c.l.b16 %v375
        %v456 = vunpack.c.l.b16 %v376
        %v457 = vunpack.c.l.b16 %v377
        %v458 = vunpack.c.l.b16 %v378
        %v459 = vunpack.c.l.b16 %v379
        %v460 = vunpack.c.l.b16 %v380
        %v461 = vunpack.c.l.b16 %v381
        %v462 = vunpack.c.l.b16 %v382
        %v463 = vunpack.c.l.b16 %v383
        %v464 = vunpack.c.l.b16 %v384
        %v465 = vunpack.c.l.b16 %v385
        %v466 = vunpack.c.l.b16 %v386
        %v467 = vunpack.c.l.b16 %v387
        %v468 = vunpack.c.l.b16 %v388
        %v469 = vunpack.c.l.b16 %v389
        %v470 = vunpack.c.l.b16 %v390
        %v471 = vunpack.c.l.b16 %v391
        %v472 = vunpack.c.l.b16 %v392
        %v473 = vunpack.c.l.b16 %v393
        %v474 = vunpack.c.l.b16 %v394
        %v475 = vunpack.c.l.b16 %v395
        %v476 = vunpack.c.l.b16 %v396
        %v477 = vunpack.c.l.b16 %v397
        %v478 = vunpack.c.l.b16 %v398
        %v479 = vunpack.c.l.b16 %v399
        %v480 = vunpack.c.l.b16 %v400
        %v481 = vunpack.c.l.b16 %v401
        %v482 = vunpack.c.l.b16 %v402
        %v483 = vunpack.c.l.b16 %v403
        %v484 = vunpack.c.l.b16 %v404
        %v485 = vpack.c.b16 %v454, %v453
        %v486 = vpack.c.b16 %v456, %v455
        %v487 = vpack.c.b16 %v458, %v457
        %v488 = vpack.c.b16 %v460, %v459
        %v489 = vpack.c.b16 %v462, %v461
        %v490 = vpack.c.b16 %v464, %v463
        %v491 = vpack.c.b16 %v466, %v465
        %v492 = vpack.c.b16 %v468, %v467
        %v493 = vpack.c.b16 %v470, %v469
        %v494 = vpack.c.b16 %v472, %v471
        %v495 = vpack.c.b16 %v474, %v473
        %v496 = vpack.c.b16 %v476, %v475
        %v497 = vpack.c.b16 %v478, %v477
        %v498 = vpack.c.b16 %v480, %v479
        %v499 = vpack.c.b16 %v482, %v481
        %v500 = vpack.c.b16 %v484, %v483
        %v533 = vunpack.c.l.b16 %v405
        %v534 = vunpack.c.l.b16 %v406
        %v535 = vunpack.c.l.b16 %v407
        %v536 = vunpack.c.l.b16 %v408
        %v537 = vunpack.c.l.b16 %v409
        %v538 = vunpack.c.l.b16 %v410
        %v539 = vunpack.c.l.b16 %v411
        %v540 = vunpack.c.l.b16 %v412
        %v541 = vunpack.c.l.b16 %v413
        %v542 = vunpack.c.l.b16 %v414
        %v543 = vunpack.c.l.b16 %v415
        %v544 = vunpack.c.l.b16 %v416
        %v545 = vunpack.c.l.b16 %v417
        %v546 = vunpack.c.l.b16 %v418
        %v547 = vunpack.c.l.b16 %v419
        %v548 = vunpack.c.l.b16 %v420
        %v549 = vpack.c.b16 %v534, %v533
        %v550 = vpack.c.b16 %v536, %v535
        %v551 = vpack.c.b16 %v538, %v537
        %v552 = vpack.c.b16 %v540, %v539
        %v553 = vpack.c.b16 %v542, %v541
        %v554 = vpack.c.b16 %v544, %v543
        %v555 = vpack.c.b16 %v546, %v545
        %v556 = vpack.c.b16 %v548, %v547
        %565 = vmatprep.subr.bf16.mxu0 0
        %566 = vmatpush1.bf16.msra.mxu0 %v556
        %567 = vmatprep.subr.bf16.mxu0 0
        %568 = vmatpush1.bf16.msra.mxu0 %v555
        %569 = vmatprep.subr.bf16.mxu0 0
        %570 = vmatpush1.bf16.msra.mxu0 %v554
        %571 = vmatprep.subr.bf16.mxu0 0
        %572 = vmatpush1.bf16.msra.mxu0 %v553
        %573 = vmatprep.subr.bf16.mxu0 0
        %574 = vmatpush1.bf16.msra.mxu0 %v552
        %575 = vmatprep.subr.bf16.mxu0 0
        %576 = vmatpush1.bf16.msra.mxu0 %v551
        %577 = vmatprep.subr.bf16.mxu0 0
        %578 = vmatpush1.bf16.msra.mxu0 %v550
        %579 = vmatprep.subr.bf16.mxu0 0
        %580 = vmatpush1.bf16.msra.mxu0 %v549
        %581 = vmatprep.subr.bf16.mxu0 0
        %582 = vmatpush2.bf16.msra.mxu0 0
        %583 = vmatprep.subr.bf16.mxu0 0
        %584 = vmatpush2.bf16.msra.mxu0 0
        %585 = vmatprep.subr.bf16.mxu0 0
        %586 = vmatpush2.bf16.msra.mxu0 0
        %587 = vmatprep.subr.bf16.mxu0 0
        %588 = vmatpush2.bf16.msra.mxu0 0
        %589 = vmatprep.subr.bf16.mxu0 0
        %590 = vmatpush2.bf16.msra.mxu0 0
        %591 = vmatprep.subr.bf16.mxu0 0
        %592 = vmatpush2.bf16.msra.mxu0 0
        %593 = vmatprep.subr.bf16.mxu0 0
        %594 = vmatpush2.bf16.msra.mxu0 0
        %595 = vmatprep.subr.bf16.mxu0 0
        %596 = vmatpush2.bf16.msra.mxu0 0
        %597 = vmatprep.mubr.bf16.mxu0 0
        %598 = vmatmul.mubr.bf16.gmra.mxu0 %v485
        %v599 = vpop.f32.mrf.mxu0
        %v600 = vadd.f32 0.0, %v599
        %v601 = vpop.f32.mrf.mxu0
        %v602 = vpop.f32.mrf.mxu0
        %v603 = vadd.f32 0.0, %v602
        %v604 = vpop.f32.mrf.mxu0
        %605 = vmatprep.mubr.bf16.mxu0 0
        %606 = vmatmul.mubr.bf16.gmra.mxu0 %v486
        %v607 = vpop.f32.mrf.mxu0
        %v608 = vadd.f32 0.0, %v607
        %v609 = vpop.f32.mrf.mxu0
        %v610 = vpop.f32.mrf.mxu0
        %v611 = vadd.f32 0.0, %v610
        %v612 = vpop.f32.mrf.mxu0
        %613 = vmatprep.mubr.bf16.mxu0 0
        %614 = vmatmul.mubr.bf16.gmra.mxu0 %v487
        %v615 = vpop.f32.mrf.mxu0
        %v616 = vadd.f32 0.0, %v615
        %v617 = vpop.f32.mrf.mxu0
        %v618 = vpop.f32.mrf.mxu0
        %v619 = vadd.f32 0.0, %v618
        %v620 = vpop.f32.mrf.mxu0
        %621 = vmatprep.mubr.bf16.mxu0 0
        %622 = vmatmul.mubr.bf16.gmra.mxu0 %v488
        %v623 = vpop.f32.mrf.mxu0
        %v624 = vadd.f32 0.0, %v623
        %v625 = vpop.f32.mrf.mxu0
        %v626 = vpop.f32.mrf.mxu0
        %v627 = vadd.f32 0.0, %v626
        %v628 = vpop.f32.mrf.mxu0
        %629 = vmatprep.mubr.bf16.mxu0 0
        %630 = vmatmul.mubr.bf16.gmra.mxu0 %v489
        %v631 = vpop.f32.mrf.mxu0
        %v632 = vadd.f32 0.0, %v631
        %v633 = vpop.f32.mrf.mxu0
        %v634 = vpop.f32.mrf.mxu0
        %v635 = vadd.f32 0.0, %v634
        %v636 = vpop.f32.mrf.mxu0
        %637 = vmatprep.mubr.bf16.mxu0 0
        %638 = vmatmul.mubr.bf16.gmra.mxu0 %v490
        %v639 = vpop.f32.mrf.mxu0
        %v640 = vadd.f32 0.0, %v639
        %v641 = vpop.f32.mrf.mxu0
        %v642 = vpop.f32.mrf.mxu0
        %v643 = vadd.f32 0.0, %v642
        %v644 = vpop.f32.mrf.mxu0
        %645 = vmatprep.mubr.bf16.mxu0 0
        %646 = vmatmul.mubr.bf16.gmra.mxu0 %v491
        %v647 = vpop.f32.mrf.mxu0
        %v648 = vadd.f32 0.0, %v647
        %v649 = vpop.f32.mrf.mxu0
        %v650 = vpop.f32.mrf.mxu0
        %v651 = vadd.f32 0.0, %v650
        %v652 = vpop.f32.mrf.mxu0
        %653 = vmatprep.mubr.bf16.mxu0 0
        %654 = vmatmul.mubr.bf16.gmra.mxu0 %v492
        %v655 = vpop.f32.mrf.mxu0
        %v656 = vadd.f32 0.0, %v655
        %v657 = vpop.f32.mrf.mxu0
        %v658 = vpop.f32.mrf.mxu0
        %v659 = vadd.f32 0.0, %v658
        %v660 = vpop.f32.mrf.mxu0
        %661 = vmatprep.mubr.bf16.mxu0 0
        %662 = vmatmul.mubr.bf16.gmra.mxu0 %v493
        %v663 = vpop.f32.mrf.mxu0
        %v664 = vadd.f32 0.0, %v663
        %v665 = vpop.f32.mrf.mxu0
        %v666 = vpop.f32.mrf.mxu0
        %v667 = vadd.f32 0.0, %v666
        %v668 = vpop.f32.mrf.mxu0
        %669 = vmatprep.mubr.bf16.mxu0 0
        %670 = vmatmul.mubr.bf16.gmra.mxu0 %v494
        %v671 = vpop.f32.mrf.mxu0
        %v672 = vadd.f32 0.0, %v671
        %v673 = vpop.f32.mrf.mxu0
        %v674 = vpop.f32.mrf.mxu0
        %v675 = vadd.f32 0.0, %v674
        %v676 = vpop.f32.mrf.mxu0
        %677 = vmatprep.mubr.bf16.mxu0 0
        %678 = vmatmul.mubr.bf16.gmra.mxu0 %v495
        %v679 = vpop.f32.mrf.mxu0
        %v680 = vadd.f32 0.0, %v679
        %v681 = vpop.f32.mrf.mxu0
        %v682 = vpop.f32.mrf.mxu0
        %v683 = vadd.f32 0.0, %v682
        %v684 = vpop.f32.mrf.mxu0
        %685 = vmatprep.mubr.bf16.mxu0 0
        %686 = vmatmul.mubr.bf16.gmra.mxu0 %v496
        %v687 = vpop.f32.mrf.mxu0
        %v688 = vadd.f32 0.0, %v687
        %v689 = vpop.f32.mrf.mxu0
        %v690 = vpop.f32.mrf.mxu0
        %v691 = vadd.f32 0.0, %v690
        %v692 = vpop.f32.mrf.mxu0
        %693 = vmatprep.mubr.bf16.mxu0 0
        %694 = vmatmul.mubr.bf16.gmra.mxu0 %v497
        %v695 = vpop.f32.mrf.mxu0
        %v696 = vadd.f32 0.0, %v695
        %v697 = vpop.f32.mrf.mxu0
        %v698 = vpop.f32.mrf.mxu0
        %v699 = vadd.f32 0.0, %v698
        %v700 = vpop.f32.mrf.mxu0
        %701 = vmatprep.mubr.bf16.mxu0 0
        %702 = vmatmul.mubr.bf16.gmra.mxu0 %v498
        %v703 = vpop.f32.mrf.mxu0
        %v704 = vadd.f32 0.0, %v703
        %v705 = vpop.f32.mrf.mxu0
        %v706 = vpop.f32.mrf.mxu0
        %v707 = vadd.f32 0.0, %v706
        %v708 = vpop.f32.mrf.mxu0
        %709 = vmatprep.mubr.bf16.mxu0 0
        %710 = vmatmul.mubr.bf16.gmra.mxu0 %v499
        %v711 = vpop.f32.mrf.mxu0
        %v712 = vadd.f32 0.0, %v711
        %v713 = vpop.f32.mrf.mxu0
        %v714 = vpop.f32.mrf.mxu0
        %v715 = vadd.f32 0.0, %v714
        %v716 = vpop.f32.mrf.mxu0
        %717 = vmatprep.mubr.bf16.mxu0 0
        %718 = vmatmul.mubr.bf16.gmra.mxu0 %v500
        %v719 = vpop.f32.mrf.mxu0
        %v720 = vadd.f32 0.0, %v719
        %v721 = vpop.f32.mrf.mxu0
        %v722 = vpop.f32.mrf.mxu0
        %v723 = vadd.f32 0.0, %v722
        %v724 = vpop.f32.mrf.mxu0
        %725 = vdwg.mxu0
        %v758 = vunpack.c.l.b16 %v325
        %v759 = vunpack.c.l.b16 %v326
        %v760 = vunpack.c.l.b16 %v327
        %v761 = vunpack.c.l.b16 %v328
        %v762 = vunpack.c.l.b16 %v329
        %v763 = vunpack.c.l.b16 %v330
        %v764 = vunpack.c.l.b16 %v331
        %v765 = vunpack.c.l.b16 %v332
        %v766 = vunpack.c.l.b16 %v333
        %v767 = vunpack.c.l.b16 %v334
        %v768 = vunpack.c.l.b16 %v335
        %v769 = vunpack.c.l.b16 %v336
        %v770 = vunpack.c.l.b16 %v337
        %v771 = vunpack.c.l.b16 %v338
        %v772 = vunpack.c.l.b16 %v339
        %v773 = vunpack.c.l.b16 %v340
        %v774 = vunpack.c.l.b16 %v341
        %v775 = vunpack.c.l.b16 %v342
        %v776 = vunpack.c.l.b16 %v343
        %v777 = vunpack.c.l.b16 %v344
        %v778 = vunpack.c.l.b16 %v345
        %v779 = vunpack.c.l.b16 %v346
        %v780 = vunpack.c.l.b16 %v347
        %v781 = vunpack.c.l.b16 %v348
        %v782 = vunpack.c.l.b16 %v349
        %v783 = vunpack.c.l.b16 %v350
        %v784 = vunpack.c.l.b16 %v351
        %v785 = vunpack.c.l.b16 %v352
        %v786 = vunpack.c.l.b16 %v353
        %v787 = vunpack.c.l.b16 %v354
        %v788 = vunpack.c.l.b16 %v355
        %v789 = vunpack.c.l.b16 %v356
        %v790 = vpack.c.b16 %v759, %v758
        %v791 = vpack.c.b16 %v761, %v760
        %v792 = vpack.c.b16 %v763, %v762
        %v793 = vpack.c.b16 %v765, %v764
        %v794 = vpack.c.b16 %v767, %v766
        %v795 = vpack.c.b16 %v769, %v768
        %v796 = vpack.c.b16 %v771, %v770
        %v797 = vpack.c.b16 %v773, %v772
        %v798 = vpack.c.b16 %v775, %v774
        %v799 = vpack.c.b16 %v777, %v776
        %v800 = vpack.c.b16 %v779, %v778
        %v801 = vpack.c.b16 %v781, %v780
        %v802 = vpack.c.b16 %v783, %v782
        %v803 = vpack.c.b16 %v785, %v784
        %v804 = vpack.c.b16 %v787, %v786
        %v805 = vpack.c.b16 %v789, %v788
        %v838 = vunpack.c.l.b16 %v357
        %v839 = vunpack.c.l.b16 %v358
        %v840 = vunpack.c.l.b16 %v359
        %v841 = vunpack.c.l.b16 %v360
        %v842 = vunpack.c.l.b16 %v361
        %v843 = vunpack.c.l.b16 %v362
        %v844 = vunpack.c.l.b16 %v363
        %v845 = vunpack.c.l.b16 %v364
        %v846 = vunpack.c.l.b16 %v365
        %v847 = vunpack.c.l.b16 %v366
        %v848 = vunpack.c.l.b16 %v367
        %v849 = vunpack.c.l.b16 %v368
        %v850 = vunpack.c.l.b16 %v369
        %v851 = vunpack.c.l.b16 %v370
        %v852 = vunpack.c.l.b16 %v371
        %v853 = vunpack.c.l.b16 %v372
        %v854 = vpack.c.b16 %v839, %v838
        %v855 = vpack.c.b16 %v841, %v840
        %v856 = vpack.c.b16 %v843, %v842
        %v857 = vpack.c.b16 %v845, %v844
        %v858 = vpack.c.b16 %v847, %v846
        %v859 = vpack.c.b16 %v849, %v848
        %v860 = vpack.c.b16 %v851, %v850
        %v861 = vpack.c.b16 %v853, %v852
        %870 = vmatprep.subr.bf16.mxu0 0
        %871 = vmatpush1.bf16.msra.mxu0 %v861
        %872 = vmatprep.subr.bf16.mxu0 0
        %873 = vmatpush1.bf16.msra.mxu0 %v860
        %874 = vmatprep.subr.bf16.mxu0 0
        %875 = vmatpush1.bf16.msra.mxu0 %v859
        %876 = vmatprep.subr.bf16.mxu0 0
        %877 = vmatpush1.bf16.msra.mxu0 %v858
        %878 = vmatprep.subr.bf16.mxu0 0
        %879 = vmatpush1.bf16.msra.mxu0 %v857
        %880 = vmatprep.subr.bf16.mxu0 0
        %881 = vmatpush1.bf16.msra.mxu0 %v856
        %882 = vmatprep.subr.bf16.mxu0 0
        %883 = vmatpush1.bf16.msra.mxu0 %v855
        %884 = vmatprep.subr.bf16.mxu0 0
        %885 = vmatpush1.bf16.msra.mxu0 %v854
        %886 = vmatprep.subr.bf16.mxu0 0
        %887 = vmatpush2.bf16.msra.mxu0 0
        %888 = vmatprep.subr.bf16.mxu0 0
        %889 = vmatpush2.bf16.msra.mxu0 0
        %890 = vmatprep.subr.bf16.mxu0 0
        %891 = vmatpush2.bf16.msra.mxu0 0
        %892 = vmatprep.subr.bf16.mxu0 0
        %893 = vmatpush2.bf16.msra.mxu0 0
        %894 = vmatprep.subr.bf16.mxu0 0
        %895 = vmatpush2.bf16.msra.mxu0 0
        %896 = vmatprep.subr.bf16.mxu0 0
        %897 = vmatpush2.bf16.msra.mxu0 0
        %898 = vmatprep.subr.bf16.mxu0 0
        %899 = vmatpush2.bf16.msra.mxu0 0
        %900 = vmatprep.subr.bf16.mxu0 0
        %901 = vmatpush2.bf16.msra.mxu0 0
        %902 = vmatprep.mubr.bf16.mxu0 0
        %903 = vmatmul.mubr.bf16.gmra.mxu0 %v790
        %v904 = vpop.f32.mrf.mxu0
        %v905 = vadd.f32 %v600, %v904
        %v906 = vpop.f32.mrf.mxu0
        %v907 = vpop.f32.mrf.mxu0
        %v908 = vadd.f32 %v603, %v907
        %v909 = vpop.f32.mrf.mxu0
        %910 = vmatprep.mubr.bf16.mxu0 0
        %911 = vmatmul.mubr.bf16.gmra.mxu0 %v791
        %v912 = vpop.f32.mrf.mxu0
        %v913 = vadd.f32 %v608, %v912
        %v914 = vpop.f32.mrf.mxu0
        %v915 = vpop.f32.mrf.mxu0
        %v916 = vadd.f32 %v611, %v915
        %v917 = vpop.f32.mrf.mxu0
        %918 = vmatprep.mubr.bf16.mxu0 0
        %919 = vmatmul.mubr.bf16.gmra.mxu0 %v792
        %v920 = vpop.f32.mrf.mxu0
        %v921 = vadd.f32 %v616, %v920
        %v922 = vpop.f32.mrf.mxu0
        %v923 = vpop.f32.mrf.mxu0
        %v924 = vadd.f32 %v619, %v923
        %v925 = vpop.f32.mrf.mxu0
        %926 = vmatprep.mubr.bf16.mxu0 0
        %927 = vmatmul.mubr.bf16.gmra.mxu0 %v793
        %v928 = vpop.f32.mrf.mxu0
        %v929 = vadd.f32 %v624, %v928
        %v930 = vpop.f32.mrf.mxu0
        %v931 = vpop.f32.mrf.mxu0
        %v932 = vadd.f32 %v627, %v931
        %v933 = vpop.f32.mrf.mxu0
        %934 = vmatprep.mubr.bf16.mxu0 0
        %935 = vmatmul.mubr.bf16.gmra.mxu0 %v794
        %v936 = vpop.f32.mrf.mxu0
        %v937 = vadd.f32 %v632, %v936
        %v938 = vpop.f32.mrf.mxu0
        %v939 = vpop.f32.mrf.mxu0
        %v940 = vadd.f32 %v635, %v939
        %v941 = vpop.f32.mrf.mxu0
        %942 = vmatprep.mubr.bf16.mxu0 0
        %943 = vmatmul.mubr.bf16.gmra.mxu0 %v795
        %v944 = vpop.f32.mrf.mxu0
        %v945 = vadd.f32 %v640, %v944
        %v946 = vpop.f32.mrf.mxu0
        %v947 = vpop.f32.mrf.mxu0
        %v948 = vadd.f32 %v643, %v947
        %v949 = vpop.f32.mrf.mxu0
        %950 = vmatprep.mubr.bf16.mxu0 0
        %951 = vmatmul.mubr.bf16.gmra.mxu0 %v796
        %v952 = vpop.f32.mrf.mxu0
        %v953 = vadd.f32 %v648, %v952
        %v954 = vpop.f32.mrf.mxu0
        %v955 = vpop.f32.mrf.mxu0
        %v956 = vadd.f32 %v651, %v955
        %v957 = vpop.f32.mrf.mxu0
        %958 = vmatprep.mubr.bf16.mxu0 0
        %959 = vmatmul.mubr.bf16.gmra.mxu0 %v797
        %v960 = vpop.f32.mrf.mxu0
        %v961 = vadd.f32 %v656, %v960
        %v962 = vpop.f32.mrf.mxu0
        %v963 = vpop.f32.mrf.mxu0
        %v964 = vadd.f32 %v659, %v963
        %v965 = vpop.f32.mrf.mxu0
        %966 = vmatprep.mubr.bf16.mxu0 0
        %967 = vmatmul.mubr.bf16.gmra.mxu0 %v798
        %v968 = vpop.f32.mrf.mxu0
        %v969 = vadd.f32 %v664, %v968
        %v970 = vpop.f32.mrf.mxu0
        %v971 = vpop.f32.mrf.mxu0
        %v972 = vadd.f32 %v667, %v971
        %v973 = vpop.f32.mrf.mxu0
        %974 = vmatprep.mubr.bf16.mxu0 0
        %975 = vmatmul.mubr.bf16.gmra.mxu0 %v799
        %v976 = vpop.f32.mrf.mxu0
        %v977 = vadd.f32 %v672, %v976
        %v978 = vpop.f32.mrf.mxu0
        %v979 = vpop.f32.mrf.mxu0
        %v980 = vadd.f32 %v675, %v979
        %v981 = vpop.f32.mrf.mxu0
        %982 = vmatprep.mubr.bf16.mxu0 0
        %983 = vmatmul.mubr.bf16.gmra.mxu0 %v800
        %v984 = vpop.f32.mrf.mxu0
        %v985 = vadd.f32 %v680, %v984
        %v986 = vpop.f32.mrf.mxu0
        %v987 = vpop.f32.mrf.mxu0
        %v988 = vadd.f32 %v683, %v987
        %v989 = vpop.f32.mrf.mxu0
        %990 = vmatprep.mubr.bf16.mxu0 0
        %991 = vmatmul.mubr.bf16.gmra.mxu0 %v801
        %v992 = vpop.f32.mrf.mxu0
        %v993 = vadd.f32 %v688, %v992
        %v994 = vpop.f32.mrf.mxu0
        %v995 = vpop.f32.mrf.mxu0
        %v996 = vadd.f32 %v691, %v995
        %v997 = vpop.f32.mrf.mxu0
        %998 = vmatprep.mubr.bf16.mxu0 0
        %999 = vmatmul.mubr.bf16.gmra.mxu0 %v802
        %v1000 = vpop.f32.mrf.mxu0
        %v1001 = vadd.f32 %v696, %v1000
        %v1002 = vpop.f32.mrf.mxu0
        %v1003 = vpop.f32.mrf.mxu0
        %v1004 = vadd.f32 %v699, %v1003
        %v1005 = vpop.f32.mrf.mxu0
        %1006 = vmatprep.mubr.bf16.mxu0 0
        %1007 = vmatmul.mubr.bf16.gmra.mxu0 %v803
        %v1008 = vpop.f32.mrf.mxu0
        %v1009 = vadd.f32 %v704, %v1008
        %v1010 = vpop.f32.mrf.mxu0
        %v1011 = vpop.f32.mrf.mxu0
        %v1012 = vadd.f32 %v707, %v1011
        %v1013 = vpop.f32.mrf.mxu0
        %1014 = vmatprep.mubr.bf16.mxu0 0
        %1015 = vmatmul.mubr.bf16.gmra.mxu0 %v804
        %v1016 = vpop.f32.mrf.mxu0
        %v1017 = vadd.f32 %v712, %v1016
        %v1018 = vpop.f32.mrf.mxu0
        %v1019 = vpop.f32.mrf.mxu0
        %v1020 = vadd.f32 %v715, %v1019
        %v1021 = vpop.f32.mrf.mxu0
        %1022 = vmatprep.mubr.bf16.mxu0 0
        %1023 = vmatmul.mubr.bf16.gmra.mxu0 %v805
        %v1024 = vpop.f32.mrf.mxu0
        %v1025 = vadd.f32 %v720, %v1024
        %v1026 = vpop.f32.mrf.mxu0
        %v1027 = vpop.f32.mrf.mxu0
        %v1028 = vadd.f32 %v723, %v1027
        %v1029 = vpop.f32.mrf.mxu0
        %1030 = vdwg.mxu0
        %v1031 = vld [vmem:[%s5] sm:$0x1]
        %v1033 = vlaneseq
        %v1034 = vshrl.u32 %v1033, 7
        %v1035 = vsub.s32 0, %v1034
        %v1036 = vrot.slane %v1031, %v1035
        %v1038 = vmul.f32 %v905, %v1036
        %v1039 = vmul.f32 %v908, %v1036
        %v1040 = vmul.f32 %v913, %v1036
        %v1041 = vmul.f32 %v916, %v1036
        %v1042 = vmul.f32 %v921, %v1036
        %v1043 = vmul.f32 %v924, %v1036
        %v1044 = vmul.f32 %v929, %v1036
        %v1045 = vmul.f32 %v932, %v1036
        %v1046 = vmul.f32 %v937, %v1036
        %v1047 = vmul.f32 %v940, %v1036
        %v1048 = vmul.f32 %v945, %v1036
        %v1049 = vmul.f32 %v948, %v1036
        %v1050 = vmul.f32 %v953, %v1036
        %v1051 = vmul.f32 %v956, %v1036
        %v1052 = vmul.f32 %v961, %v1036
        %v1053 = vmul.f32 %v964, %v1036
        %v1054 = vmul.f32 %v969, %v1036
        %v1055 = vmul.f32 %v972, %v1036
        %v1056 = vmul.f32 %v977, %v1036
        %v1057 = vmul.f32 %v980, %v1036
        %v1058 = vmul.f32 %v985, %v1036
        %v1059 = vmul.f32 %v988, %v1036
        %v1060 = vmul.f32 %v993, %v1036
        %v1061 = vmul.f32 %v996, %v1036
        %v1062 = vmul.f32 %v1001, %v1036
        %v1063 = vmul.f32 %v1004, %v1036
        %v1064 = vmul.f32 %v1009, %v1036
        %v1065 = vmul.f32 %v1012, %v1036
        %v1066 = vmul.f32 %v1017, %v1036
        %v1067 = vmul.f32 %v1020, %v1036
        %v1068 = vmul.f32 %v1025, %v1036
        %v1069 = vmul.f32 %v1028, %v1036
        %v1070 = vld [vmem:[%s6] sm:$0x1]
        %v1072 = vlaneseq
        %v1073 = vshrl.u32 %v1072, 7
        %v1074 = vsub.s32 0, %v1073
        %v1075 = vrot.slane %v1070, %v1074
        %v1077 = vadd.f32 %v1038, %v1075
        %v1078 = vadd.f32 %v1039, %v1075
        %v1079 = vadd.f32 %v1040, %v1075
        %v1080 = vadd.f32 %v1041, %v1075
        %v1081 = vadd.f32 %v1042, %v1075
        %v1082 = vadd.f32 %v1043, %v1075
        %v1083 = vadd.f32 %v1044, %v1075
        %v1084 = vadd.f32 %v1045, %v1075
        %v1085 = vadd.f32 %v1046, %v1075
        %v1086 = vadd.f32 %v1047, %v1075
        %v1087 = vadd.f32 %v1048, %v1075
        %v1088 = vadd.f32 %v1049, %v1075
        %v1089 = vadd.f32 %v1050, %v1075
        %v1090 = vadd.f32 %v1051, %v1075
        %v1091 = vadd.f32 %v1052, %v1075
        %v1092 = vadd.f32 %v1053, %v1075
        %v1093 = vadd.f32 %v1054, %v1075
        %v1094 = vadd.f32 %v1055, %v1075
        %v1095 = vadd.f32 %v1056, %v1075
        %v1096 = vadd.f32 %v1057, %v1075
        %v1097 = vadd.f32 %v1058, %v1075
        %v1098 = vadd.f32 %v1059, %v1075
        %v1099 = vadd.f32 %v1060, %v1075
        %v1100 = vadd.f32 %v1061, %v1075
        %v1101 = vadd.f32 %v1062, %v1075
        %v1102 = vadd.f32 %v1063, %v1075
        %v1103 = vadd.f32 %v1064, %v1075
        %v1104 = vadd.f32 %v1065, %v1075
        %v1105 = vadd.f32 %v1066, %v1075
        %v1106 = vadd.f32 %v1067, %v1075
        %v1107 = vadd.f32 %v1068, %v1075
        %v1108 = vadd.f32 %v1069, %v1075
        %v1109 = vld [vmem:[%s321] sm:$0xff]
        %v1110 = vld [vmem:[%s321 + $0x8] sm:$0xff]
        %v1111 = vld [vmem:[%s321 + $0x10] sm:$0xff]
        %v1112 = vld [vmem:[%s321 + $0x18] sm:$0xff]
        %v1113 = vld [vmem:[%s321 + $0x20] sm:$0xff]
        %v1114 = vld [vmem:[%s321 + $0x28] sm:$0xff]
        %v1115 = vld [vmem:[%s321 + $0x30] sm:$0xff]
        %v1116 = vld [vmem:[%s321 + $0x38] sm:$0xff]
        %v1117 = vld [vmem:[%s321 + $0x40] sm:$0xff]
        %v1118 = vld [vmem:[%s321 + $0x48] sm:$0xff]
        %v1119 = vld [vmem:[%s321 + $0x50] sm:$0xff]
        %v1120 = vld [vmem:[%s321 + $0x58] sm:$0xff]
        %v1121 = vld [vmem:[%s321 + $0x60] sm:$0xff]
        %v1122 = vld [vmem:[%s321 + $0x68] sm:$0xff]
        %v1123 = vld [vmem:[%s321 + $0x70] sm:$0xff]
        %v1124 = vld [vmem:[%s321 + $0x78] sm:$0xff]
        %v1125 = vld [vmem:[%s321 + $0x80] sm:$0xff]
        %v1126 = vld [vmem:[%s321 + $0x88] sm:$0xff]
        %v1127 = vld [vmem:[%s321 + $0x90] sm:$0xff]
        %v1128 = vld [vmem:[%s321 + $0x98] sm:$0xff]
        %v1129 = vld [vmem:[%s321 + $0xa0] sm:$0xff]
        %v1130 = vld [vmem:[%s321 + $0xa8] sm:$0xff]
        %v1131 = vld [vmem:[%s321 + $0xb0] sm:$0xff]
        %v1132 = vld [vmem:[%s321 + $0xb8] sm:$0xff]
        %v1133 = vld [vmem:[%s321 + $0xc0] sm:$0xff]
        %v1134 = vld [vmem:[%s321 + $0xc8] sm:$0xff]
        %v1135 = vld [vmem:[%s321 + $0xd0] sm:$0xff]
        %v1136 = vld [vmem:[%s321 + $0xd8] sm:$0xff]
        %v1137 = vld [vmem:[%s321 + $0xe0] sm:$0xff]
        %v1138 = vld [vmem:[%s321 + $0xe8] sm:$0xff]
        %v1139 = vld [vmem:[%s321 + $0xf0] sm:$0xff]
        %v1140 = vld [vmem:[%s321 + $0xf8] sm:$0xff]
        %v1141 = vadd.f32 %v1077, %v1109
        %v1142 = vadd.f32 %v1078, %v1110
        %v1143 = vadd.f32 %v1079, %v1111
        %v1144 = vadd.f32 %v1080, %v1112
        %v1145 = vadd.f32 %v1081, %v1113
        %v1146 = vadd.f32 %v1082, %v1114
        %v1147 = vadd.f32 %v1083, %v1115
        %v1148 = vadd.f32 %v1084, %v1116
        %v1149 = vadd.f32 %v1085, %v1117
        %v1150 = vadd.f32 %v1086, %v1118
        %v1151 = vadd.f32 %v1087, %v1119
        %v1152 = vadd.f32 %v1088, %v1120
        %v1153 = vadd.f32 %v1089, %v1121
        %v1154 = vadd.f32 %v1090, %v1122
        %v1155 = vadd.f32 %v1091, %v1123
        %v1156 = vadd.f32 %v1092, %v1124
        %v1157 = vadd.f32 %v1093, %v1125
        %v1158 = vadd.f32 %v1094, %v1126
        %v1159 = vadd.f32 %v1095, %v1127
        %v1160 = vadd.f32 %v1096, %v1128
        %v1161 = vadd.f32 %v1097, %v1129
        %v1162 = vadd.f32 %v1098, %v1130
        %v1163 = vadd.f32 %v1099, %v1131
        %v1164 = vadd.f32 %v1100, %v1132
        %v1165 = vadd.f32 %v1101, %v1133
        %v1166 = vadd.f32 %v1102, %v1134
        %v1167 = vadd.f32 %v1103, %v1135
        %v1168 = vadd.f32 %v1104, %v1136
        %v1169 = vadd.f32 %v1105, %v1137
        %v1170 = vadd.f32 %v1106, %v1138
        %v1171 = vadd.f32 %v1107, %v1139
        %v1172 = vadd.f32 %v1108, %v1140
        %v1173 = vmax.f32 %v1141, 0.0
        %v1174 = vmax.f32 %v1142, 0.0
        %v1175 = vmax.f32 %v1143, 0.0
        %v1176 = vmax.f32 %v1144, 0.0
        %v1177 = vmax.f32 %v1145, 0.0
        %v1178 = vmax.f32 %v1146, 0.0
        %v1179 = vmax.f32 %v1147, 0.0
        %v1180 = vmax.f32 %v1148, 0.0
        %v1181 = vmax.f32 %v1149, 0.0
        %v1182 = vmax.f32 %v1150, 0.0
        %v1183 = vmax.f32 %v1151, 0.0
        %v1184 = vmax.f32 %v1152, 0.0
        %v1185 = vmax.f32 %v1153, 0.0
        %v1186 = vmax.f32 %v1154, 0.0
        %v1187 = vmax.f32 %v1155, 0.0
        %v1188 = vmax.f32 %v1156, 0.0
        %v1189 = vmax.f32 %v1157, 0.0
        %v1190 = vmax.f32 %v1158, 0.0
        %v1191 = vmax.f32 %v1159, 0.0
        %v1192 = vmax.f32 %v1160, 0.0
        %v1193 = vmax.f32 %v1161, 0.0
        %v1194 = vmax.f32 %v1162, 0.0
        %v1195 = vmax.f32 %v1163, 0.0
        %v1196 = vmax.f32 %v1164, 0.0
        %v1197 = vmax.f32 %v1165, 0.0
        %v1198 = vmax.f32 %v1166, 0.0
        %v1199 = vmax.f32 %v1167, 0.0
        %v1200 = vmax.f32 %v1168, 0.0
        %v1201 = vmax.f32 %v1169, 0.0
        %v1202 = vmax.f32 %v1170, 0.0
        %v1203 = vmax.f32 %v1171, 0.0
        %v1204 = vmax.f32 %v1172, 0.0
        %1205 = vst [vmem:[%s304] sm:$0xff] %v1173
        %1206 = vst [vmem:[%s304 + $0x8] sm:$0xff] %v1174
        %1207 = vst [vmem:[%s304 + $0x10] sm:$0xff] %v1175
        %1208 = vst [vmem:[%s304 + $0x18] sm:$0xff] %v1176
        %1209 = vst [vmem:[%s304 + $0x20] sm:$0xff] %v1177
        %1210 = vst [vmem:[%s304 + $0x28] sm:$0xff] %v1178
        %1211 = vst [vmem:[%s304 + $0x30] sm:$0xff] %v1179
        %1212 = vst [vmem:[%s304 + $0x38] sm:$0xff] %v1180
        %1213 = vst [vmem:[%s304 + $0x40] sm:$0xff] %v1181
        %1214 = vst [vmem:[%s304 + $0x48] sm:$0xff] %v1182
        %1215 = vst [vmem:[%s304 + $0x50] sm:$0xff] %v1183
        %1216 = vst [vmem:[%s304 + $0x58] sm:$0xff] %v1184
        %1217 = vst [vmem:[%s304 + $0x60] sm:$0xff] %v1185
        %1218 = vst [vmem:[%s304 + $0x68] sm:$0xff] %v1186
        %1219 = vst [vmem:[%s304 + $0x70] sm:$0xff] %v1187
        %1220 = vst [vmem:[%s304 + $0x78] sm:$0xff] %v1188
        %1221 = vst [vmem:[%s304 + $0x80] sm:$0xff] %v1189
        %1222 = vst [vmem:[%s304 + $0x88] sm:$0xff] %v1190
        %1223 = vst [vmem:[%s304 + $0x90] sm:$0xff] %v1191
        %1224 = vst [vmem:[%s304 + $0x98] sm:$0xff] %v1192
        %1225 = vst [vmem:[%s304 + $0xa0] sm:$0xff] %v1193
        %1226 = vst [vmem:[%s304 + $0xa8] sm:$0xff] %v1194
        %1227 = vst [vmem:[%s304 + $0xb0] sm:$0xff] %v1195
        %1228 = vst [vmem:[%s304 + $0xb8] sm:$0xff] %v1196
        %1229 = vst [vmem:[%s304 + $0xc0] sm:$0xff] %v1197
        %1230 = vst [vmem:[%s304 + $0xc8] sm:$0xff] %v1198
        %1231 = vst [vmem:[%s304 + $0xd0] sm:$0xff] %v1199
        %1232 = vst [vmem:[%s304 + $0xd8] sm:$0xff] %v1200
        %1233 = vst [vmem:[%s304 + $0xe0] sm:$0xff] %v1201
        %1234 = vst [vmem:[%s304 + $0xe8] sm:$0xff] %v1202
        %1235 = vst [vmem:[%s304 + $0xf0] sm:$0xff] %v1203
        %1236 = vst [vmem:[%s304 + $0xf8] sm:$0xff] %v1204
        %s1237 = sand.u32 %s191, 1
        %s1238 = scalar_lea.sflag [#allocation3], %s1237
        %s1239 = sand.u32 %s191, 1
        %s1240 = smul.addr %s1239, 256
        %s1241 = scalar_lea.vmem [#allocation2], %s1240
        // Predicated region
        $region49: #{air_bottleneck_forward.9} parent=47 // pred_check
          %p1242 = pneg %p201
        $region50: #{air_bottleneck_forward.9} parent=47 // pred_check_branch
          %1244 = sbr.rel (%p1242) target = $region52
        $region51: #{air_bottleneck_forward.9} parent=47 // pred_region
          %s1245 = smul.u32 32, %s21
          %s1247 = ssub.s32 4096, 4096
          %1248 = vsyncadd %s1238, %s1247
          %s1249 = smul.addr %s1245, 128
          %s1250 = scalar_lea.hbm %s7, %s1249
          %s1251 = sshll.u32 %s1241, 4
          %s1252 = int_to_ptr.vmem [resolvable:$true] %s1251
          %1257 = dma.vmem_to_hbm [thread:$0]  %s1252, 4096, %s1250, %s1238, 128, 128, 8
        $region52: #{air_bottleneck_forward.9} parent=47 // pred_fallthru
          _
      $region48: #{air_bottleneck_forward.9} parent=5 // pred_fallthru
        _
      %p1258 = scmp.le.s32.totalorder 2, %s16
      // Predicated region
      $region53: #{air_bottleneck_forward.9} parent=5 // pred_check
        %p1259 = pneg %p1258
      $region54: #{air_bottleneck_forward.9} parent=5 // pred_check_branch
        %1261 = sbr.rel (%p1259) target = $region56
      $region55: #{air_bottleneck_forward.9} parent=5 // pred_region
        %s1262 = ssub.s32 %s16, 2
        // Predicated region
        $region57: #{air_bottleneck_forward.9} parent=55 // pred_check
          %p1263 = pneg %p207
        $region58: #{air_bottleneck_forward.9} parent=55 // pred_check_branch
          %1265 = sbr.rel (%p1263) target = $region60
        $region59: #{air_bottleneck_forward.9} parent=55 // pred_region
          %s1266 = sand.u32 %s192, 1
          %s1267 = scalar_lea.sflag [#allocation3], %s1266
          %s1268 = sand.u32 %s192, 1
          %s1269 = smul.addr %s1268, 256
          %s1270 = scalar_lea.vmem [#allocation2], %s1269
          %1271 = dma.done %s1267, 4096
        $region60: #{air_bottleneck_forward.9} parent=55 // pred_fallthru
          _
      $region56: #{air_bottleneck_forward.9} parent=5 // pred_fallthru
        _
    $region6: #{air_bottleneck_forward.9} parent=1 // loop_footer
      %s20 = sadd.s32 1, %s16
    $region7: #{air_bottleneck_forward.9} parent=1 // loop_footer_branch
      %15 = sbr.rel target = $region3
    $region8: #{air_bottleneck_forward.9} parent=1 // loop_exit
      _
    %1272 = vsyncpa [#allocation3], 1
    %s1273 = scalar_lea.sflag [#allocation3], 1
    %1274 = vsyncpa %s1273, 1

// kernel: air_bottleneck_forward.7
$region0: #{air_bottleneck_forward.7}
  #allocation0 [shape = 'u32[]', space=smem, size = 0x4, offset = 0x4, fixed_abs, tag = 'smem constant byte address 0x4 - core index']
  #allocation1 [shape = 'u32[144,128]{1,0:T(1,128)}', space=vmem, size = 0x12000, scoped, tag = 'internal scratch']
  %s0 = inlined_call_operand.vmem [shape: bf16[2,18,18,128], index: 0, kind: input, shape index: {}]
  %s1 = inlined_call_operand.vmem [shape: bf16[1152,128], index: 1, kind: input, shape index: {}]
  %s2 = inlined_call_operand.vmem [shape: f32[1,128], index: 2, kind: input, shape index: {}]
  %s3 = inlined_call_operand.vmem [shape: f32[1,128], index: 3, kind: input, shape index: {}]
  %s4 = inlined_call_operand.vmem [shape: bf16[512,128], index: 4, kind: output, shape index: {}]
  %s5 = sld [smem:[#allocation0]]
  $region49: #{air_bottleneck_forward.7} parent=0
    _
  %s7 = ssub.s32 1, %s5
  %s8 = scalar_select 0, %s7, %s5
  loop: start=0, step=1, limit=4
  $region2: #{air_bottleneck_forward.7} parent=0 // loop_pre_header
    _
  $region3: #{air_bottleneck_forward.7} parent=0 // loop_header
    %s10 = sphi 0, %s14
    %p11 = scmp.ge.s32.totalorder %s10, 4
    %s17 = sphi 0, %s29
    %s18 = sphi 0, %s25
    %s19 = sphi 0, %s17
    %s20 = sphi 0, %s18
    %s21 = sphi 0, %s19
    %s22 = sphi 0, %s20
    %s32 = sphi 0, %s34
    %s35 = sphi 0, %s32
    %s36 = sphi 0, %s35
    %s52 = sphi 0, %s36
    %s56 = sphi 0, %s56
    %s58 = sphi 0, %s56
    %s59 = sphi 0, %s58
    %s73 = sphi 0, %s59
    %s77 = sphi 0, %s77
    %s79 = sphi 0, %s77
    %s80 = sphi 0, %s79
    %s94 = sphi 0, %s80
    %s98 = sphi 0, %s98
    %s100 = sphi 0, %s98
    %s101 = sphi 0, %s100
    %s115 = sphi 0, %s101
    %s123 = sphi 0, %s125
    %s126 = sphi 0, %s123
    %s127 = sphi 0, %s126
    %s143 = sphi 0, %s127
  $region4: #{air_bottleneck_forward.7} parent=0 // loop_header_branch
    %13 = sbr.rel (%p11) target = $region8
  $region5: #{air_bottleneck_forward.7} parent=0 // loop_body
    %s15 = ssub.s32 %s10, 1
    %s16 = ssub.s32 %s10, 2
    %s23 = sadd.s32 1, %s18
    %p24 = scmp.ge.s32.totalorder %s23, 1
    %s25 = scalar_select %p24, 0, %s23
    %s26 = sadd.s32 1, %s17
    %s27 = scalar_select %p24, %s26, %s17
    %p28 = scmp.ge.s32.totalorder %s27, 2
    %s29 = scalar_select %p28, 0, %s27
    %s30 = ssub.s32 %s17, %s29
    %p31 = scmp.eq.s32.totalorder %s30, 0
    %s33 = sadd.s32 %s32, 1
    %s34 = scalar_select %p31, %s32, %s33
    %p37 = pneg %p31
    %p38 = scmp.eq.s32.totalorder %s10, 1
    %p39 = por %p37, %p38
    %p40 = scmp.ne.s32.totalorder %s32, %s35
    %p41 = scmp.eq.s32.totalorder %s10, 0
    %p42 = por %p40, %p41
    %p43 = scmp.ne.s32.totalorder %s32, %s35
    %p44 = scmp.eq.s32.totalorder %s15, 1
    %p45 = por %p43, %p44
    %p46 = scmp.ne.s32.totalorder %s35, %s36
    %p47 = scmp.eq.s32.totalorder %s15, 0
    %p48 = por %p46, %p47
    %p49 = scmp.ne.s32.totalorder %s35, %s36
    %p50 = scmp.eq.s32.totalorder %s16, 1
    %p51 = por %p49, %p50
    %p53 = scmp.ne.s32.totalorder %s36, %s52
    %p54 = scmp.eq.s32.totalorder %s16, 0
    %p55 = por %p53, %p54
    %s57 = sadd.s32 %s56, 1
    %p60 = scmp.eq.s32.totalorder %s10, 1
    %p61 = scmp.ne.s32.totalorder %s56, %s58
    %p62 = scmp.eq.s32.totalorder %s10, 0
    %p63 = por %p61, %p62
    %p64 = scmp.ne.s32.totalorder %s56, %s58
    %p65 = scmp.eq.s32.totalorder %s15, 1
    %p66 = por %p64, %p65
    %p67 = scmp.ne.s32.totalorder %s58, %s59
    %p68 = scmp.eq.s32.totalorder %s15, 0
    %p69 = por %p67, %p68
    %p70 = scmp.ne.s32.totalorder %s58, %s59
    %p71 = scmp.eq.s32.totalorder %s16, 1
    %p72 = por %p70, %p71
    %p74 = scmp.ne.s32.totalorder %s59, %s73
    %p75 = scmp.eq.s32.totalorder %s16, 0
    %p76 = por %p74, %p75
    %s78 = sadd.s32 %s77, 1
    %p81 = scmp.eq.s32.totalorder %s10, 1
    %p82 = scmp.ne.s32.totalorder %s77, %s79
    %p83 = scmp.eq.s32.totalorder %s10, 0
    %p84 = por %p82, %p83
    %p85 = scmp.ne.s32.totalorder %s77, %s79
    %p86 = scmp.eq.s32.totalorder %s15, 1
    %p87 = por %p85, %p86
    %p88 = scmp.ne.s32.totalorder %s79, %s80
    %p89 = scmp.eq.s32.totalorder %s15, 0
    %p90 = por %p88, %p89
    %p91 = scmp.ne.s32.totalorder %s79, %s80
    %p92 = scmp.eq.s32.totalorder %s16, 1
    %p93 = por %p91, %p92
    %p95 = scmp.ne.s32.totalorder %s80, %s94
    %p96 = scmp.eq.s32.totalorder %s16, 0
    %p97 = por %p95, %p96
    %s99 = sadd.s32 %s98, 1
    %p102 = scmp.eq.s32.totalorder %s10, 1
    %p103 = scmp.ne.s32.totalorder %s98, %s100
    %p104 = scmp.eq.s32.totalorder %s10, 0
    %p105 = por %p103, %p104
    %p106 = scmp.ne.s32.totalorder %s98, %s100
    %p107 = scmp.eq.s32.totalorder %s15, 1
    %p108 = por %p106, %p107
    %p109 = scmp.ne.s32.totalorder %s100, %s101
    %p110 = scmp.eq.s32.totalorder %s15, 0
    %p111 = por %p109, %p110
    %p112 = scmp.ne.s32.totalorder %s100, %s101
    %p113 = scmp.eq.s32.totalorder %s16, 1
    %p114 = por %p112, %p113
    %p116 = scmp.ne.s32.totalorder %s101, %s115
    %p117 = scmp.eq.s32.totalorder %s16, 0
    %p118 = por %p116, %p117
    %s119 = sadd.s32 %s17, %s18
    %s120 = sadd.s32 %s29, %s25
    %s121 = ssub.s32 %s119, %s120
    %p122 = scmp.eq.s32.totalorder %s121, 0
    %s124 = sadd.s32 %s123, 1
    %s125 = scalar_select %p122, %s123, %s124
    %p128 = pneg %p122
    %p129 = scmp.eq.s32.totalorder %s10, 1
    %p130 = por %p128, %p129
    %p131 = scmp.ne.s32.totalorder %s123, %s126
    %p132 = scmp.eq.s32.totalorder %s10, 0
    %p133 = por %p131, %p132
    %p134 = scmp.ne.s32.totalorder %s123, %s126
    %p135 = scmp.eq.s32.totalorder %s15, 1
    %p136 = por %p134, %p135
    %p137 = scmp.ne.s32.totalorder %s126, %s127
    %p138 = scmp.eq.s32.totalorder %s15, 0
    %p139 = por %p137, %p138
    %p140 = scmp.ne.s32.totalorder %s126, %s127
    %p141 = scmp.eq.s32.totalorder %s16, 1
    %p142 = por %p140, %p141
    %p144 = scmp.ne.s32.totalorder %s127, %s143
    %p145 = scmp.eq.s32.totalorder %s16, 0
    %p146 = por %p144, %p145
    %p147 = scmp.le.s32.totalorder 1, %s10
    %p148 = scmp.lt.s32.totalorder %s10, 3
    %p149 = pnand %p147, %p148
    %p150 = pneg %p149
    // Predicated region
    $region9: #{air_bottleneck_forward.7} parent=5 // pred_check
      _
    $region10: #{air_bottleneck_forward.7} parent=5 // pred_check_branch
      %152 = sbr.rel (%p149) target = $region12
    $region11: #{air_bottleneck_forward.7} parent=5 // pred_region
      %s153 = ssub.s32 %s10, 1
      // Predicated region
      $region13: #{air_bottleneck_forward.7} parent=11 // pred_check
        %p154 = pneg %p69
      $region14: #{air_bottleneck_forward.7} parent=11 // pred_check_branch
        %156 = sbr.rel (%p154) target = $region16
      $region15: #{air_bottleneck_forward.7} parent=11 // pred_region
        _
      $region16: #{air_bottleneck_forward.7} parent=11 // pred_fallthru
        _
      // Predicated region
      $region17: #{air_bottleneck_forward.7} parent=11 // pred_check
        %p157 = pneg %p90
      $region18: #{air_bottleneck_forward.7} parent=11 // pred_check_branch
        %159 = sbr.rel (%p157) target = $region20
      $region19: #{air_bottleneck_forward.7} parent=11 // pred_region
        _
      $region20: #{air_bottleneck_forward.7} parent=11 // pred_fallthru
        _
      // Predicated region
      $region21: #{air_bottleneck_forward.7} parent=11 // pred_check
        %p160 = pneg %p111
      $region22: #{air_bottleneck_forward.7} parent=11 // pred_check_branch
        %162 = sbr.rel (%p160) target = $region24
      $region23: #{air_bottleneck_forward.7} parent=11 // pred_region
        _
      $region24: #{air_bottleneck_forward.7} parent=11 // pred_fallthru
        _
    $region12: #{air_bottleneck_forward.7} parent=5 // pred_fallthru
      _
    %p163 = scmp.lt.s32.totalorder %s10, 2
    // Predicated region
    $region25: #{air_bottleneck_forward.7} parent=5 // pred_check
      %p164 = pneg %p163
    $region26: #{air_bottleneck_forward.7} parent=5 // pred_check_branch
      %166 = sbr.rel (%p164) target = $region28
    $region27: #{air_bottleneck_forward.7} parent=5 // pred_region
      // Predicated region
      $region29: #{air_bottleneck_forward.7} parent=27 // pred_check
        %p167 = pneg %p42
      $region30: #{air_bottleneck_forward.7} parent=27 // pred_check_branch
        %169 = sbr.rel (%p167) target = $region32
      $region31: #{air_bottleneck_forward.7} parent=27 // pred_region
        %p170 = scmp.lt.s32.totalorder %s17, 1
        %s171 = scalar_select %p170, %s17, 1
        %s172 = smul.addr %s171, 54
        %s173 = smul.addr %s172, 4
        %s174 = scalar_lea.vmem %s0, %s173
      $region32: #{air_bottleneck_forward.7} parent=27 // pred_fallthru
        _
    $region28: #{air_bottleneck_forward.7} parent=5 // pred_fallthru
      _
    %p175 = scmp.le.s32.totalorder 1, %s10
    %p176 = scmp.lt.s32.totalorder %s10, 3
    %p177 = pnand %p175, %p176
    %p178 = pneg %p177
    // Predicated region
    $region33: #{air_bottleneck_forward.7} parent=5 // pred_check
      _
    $region34: #{air_bottleneck_forward.7} parent=5 // pred_check_branch
      %180 = sbr.rel (%p177) target = $region36
    $region35: #{air_bottleneck_forward.7} parent=5 // pred_region
      %s181 = ssub.s32 %s10, 1
      %p182 = scmp.lt.s32.totalorder %s19, 1
      %s183 = scalar_select %p182, %s19, 1
      %s184 = smul.addr %s183, 54
      %s185 = smul.addr %s184, 4
      %s186 = scalar_lea.vmem %s0, %s185
      %p187 = pneg %p48
      %p188 = pneg %p45
      %p189 = pneg %p69
      %p190 = pneg %p66
      %p191 = pneg %p90
      %p192 = pneg %p87
      %p193 = pneg %p111
      %p194 = pneg %p108
      %p195 = pneg %p139
      %p196 = pneg %p136
      %s197 = sadd.s32 %s19, %s20
      %s198 = smul.u32 32, %s197
      %p199 = scmp.lt.s32.totalorder %s198, 63
      %s200 = scalar_select %p199, %s198, 63
      %s201 = smul.addr %s200, 4
      %s202 = scalar_lea.vmem %s4, %s201
      %p203 = scmp.lt.s32.totalorder %s19, 1
      %s204 = scalar_select %p203, %s19, 1
      %s205 = smul.addr %s204, 54
      %s206 = smul.addr %s205, 4
      %s207 = scalar_lea.vmem %s0, %s206
      %s208 = sadd.s32 %s19, %s20
      %s209 = smul.u32 32, %s208
      %p210 = scmp.lt.s32.totalorder %s209, 63
      %s211 = scalar_select %p210, %s209, 63
      %s212 = smul.addr %s211, 4
      %s213 = scalar_lea.vmem %s4, %s212
      %s214 = sadd.s32 %s19, %s20
      %s215 = smul.u32 32, %s214
      %s217 = smul.u32 %s20, 16
      %s218 = smul.u32 %s217, 3
      %s219 = smul.addr %s218, 4
      %s220 = scalar_lea.vmem %s207, %s219
      %v221 = vld [vmem:[%s220] sm:$0xf]
      %v222 = vld [vmem:[%s220 + $0x4] sm:$0xf]
      %v223 = vld [vmem:[%s220 + $0xc] sm:$0xf]
      %v224 = vld [vmem:[%s220 + $0x10] sm:$0xf]
      %v225 = vld [vmem:[%s220 + $0x18] sm:$0xf]
      %v226 = vld [vmem:[%s220 + $0x1c] sm:$0xf]
      %v227 = vld [vmem:[%s220 + $0x24] sm:$0xf]
      %v228 = vld [vmem:[%s220 + $0x28] sm:$0xf]
      %v229 = vld [vmem:[%s220 + $0x30] sm:$0xf]
      %v230 = vld [vmem:[%s220 + $0x34] sm:$0xf]
      %v231 = vld [vmem:[%s220 + $0x3c] sm:$0xf]
      %v232 = vld [vmem:[%s220 + $0x40] sm:$0xf]
      %v233 = vld [vmem:[%s220 + $0x48] sm:$0xf]
      %v234 = vld [vmem:[%s220 + $0x4c] sm:$0xf]
      %v235 = vld [vmem:[%s220 + $0x54] sm:$0xf]
      %v236 = vld [vmem:[%s220 + $0x58] sm:$0xf]
      %v237 = vld [vmem:[%s220 + $0x60] sm:$0xf]
      %v238 = vld [vmem:[%s220 + $0x64] sm:$0xf]
      %v239 = vld [vmem:[%s220 + $0x6c] sm:$0xf]
      %v240 = vld [vmem:[%s220 + $0x70] sm:$0xf]
      %v241 = vld [vmem:[%s220 + $0x78] sm:$0xf]
      %v242 = vld [vmem:[%s220 + $0x7c] sm:$0xf]
      %v243 = vld [vmem:[%s220 + $0x84] sm:$0xf]
      %v244 = vld [vmem:[%s220 + $0x88] sm:$0xf]
      %v245 = vld [vmem:[%s220 + $0x90] sm:$0xf]
      %v246 = vld [vmem:[%s220 + $0x94] sm:$0xf]
      %v247 = vld [vmem:[%s220 + $0x9c] sm:$0xf]
      %v248 = vld [vmem:[%s220 + $0xa0] sm:$0xf]
      %v249 = vld [vmem:[%s220 + $0xa8] sm:$0xf]
      %v250 = vld [vmem:[%s220 + $0xac] sm:$0xf]
      %v251 = vld [vmem:[%s220 + $0xb4] sm:$0xf]
      %v252 = vld [vmem:[%s220 + $0xb8] sm:$0xf]
      %v253 = vld [vmem:[%s220 + $0x8] sm:$0x1]
      %v254 = vld [vmem:[%s220 + $0x14] sm:$0x1]
      %v255 = vld [vmem:[%s220 + $0x20] sm:$0x1]
      %v256 = vld [vmem:[%s220 + $0x2c] sm:$0x1]
      %v257 = vld [vmem:[%s220 + $0x38] sm:$0x1]
      %v258 = vld [vmem:[%s220 + $0x44] sm:$0x1]
      %v259 = vld [vmem:[%s220 + $0x50] sm:$0x1]
      %v260 = vld [vmem:[%s220 + $0x5c] sm:$0x1]
      %v261 = vld [vmem:[%s220 + $0x68] sm:$0x1]
      %v262 = vld [vmem:[%s220 + $0x74] sm:$0x1]
      %v263 = vld [vmem:[%s220 + $0x80] sm:$0x1]
      %v264 = vld [vmem:[%s220 + $0x8c] sm:$0x1]
      %v265 = vld [vmem:[%s220 + $0x98] sm:$0x1]
      %v266 = vld [vmem:[%s220 + $0xa4] sm:$0x1]
      %v267 = vld [vmem:[%s220 + $0xb0] sm:$0x1]
      %v268 = vld [vmem:[%s220 + $0xbc] sm:$0x1]
      %v269 = vld [vmem:[%s220] sm:$0xe]
      %v270 = vld [vmem:[%s220 + $0xc] sm:$0xe]
      %v271 = vld [vmem:[%s220 + $0x18] sm:$0xe]
      %v272 = vld [vmem:[%s220 + $0x24] sm:$0xe]
      %v273 = vld [vmem:[%s220 + $0x30] sm:$0xe]
      %v274 = vld [vmem:[%s220 + $0x3c] sm:$0xe]
      %v275 = vld [vmem:[%s220 + $0x48] sm:$0xe]
      %v276 = vld [vmem:[%s220 + $0x54] sm:$0xe]
      %v277 = vld [vmem:[%s220 + $0x60] sm:$0xe]
      %v278 = vld [vmem:[%s220 + $0x6c] sm:$0xe]
      %v279 = vld [vmem:[%s220 + $0x78] sm:$0xe]
      %v280 = vld [vmem:[%s220 + $0x84] sm:$0xe]
      %v281 = vld [vmem:[%s220 + $0x90] sm:$0xe]
      %v282 = vld [vmem:[%s220 + $0x9c] sm:$0xe]
      %v283 = vld [vmem:[%s220 + $0xa8] sm:$0xe]
      %v284 = vld [vmem:[%s220 + $0xb4] sm:$0xe]
      %s285 = sadd.s32 %s217, 1
      %s286 = smul.u32 %s285, 3
      %s287 = smul.addr %s286, 4
      %s288 = scalar_lea.vmem %s207, %s287
      %v289 = vld [vmem:[%s288] sm:$0xf]
      %v290 = vld [vmem:[%s288 + $0x4] sm:$0xf]
      %v291 = vld [vmem:[%s288 + $0xc] sm:$0xf]
      %v292 = vld [vmem:[%s288 + $0x10] sm:$0xf]
      %v293 = vld [vmem:[%s288 + $0x18] sm:$0xf]
      %v294 = vld [vmem:[%s288 + $0x1c] sm:$0xf]
      %v295 = vld [vmem:[%s288 + $0x24] sm:$0xf]
      %v296 = vld [vmem:[%s288 + $0x28] sm:$0xf]
      %v297 = vld [vmem:[%s288 + $0x30] sm:$0xf]
      %v298 = vld [vmem:[%s288 + $0x34] sm:$0xf]
      %v299 = vld [vmem:[%s288 + $0x3c] sm:$0xf]
      %v300 = vld [vmem:[%s288 + $0x40] sm:$0xf]
      %v301 = vld [vmem:[%s288 + $0x48] sm:$0xf]
      %v302 = vld [vmem:[%s288 + $0x4c] sm:$0xf]
      %v303 = vld [vmem:[%s288 + $0x54] sm:$0xf]
      %v304 = vld [vmem:[%s288 + $0x58] sm:$0xf]
      %v305 = vld [vmem:[%s288 + $0x60] sm:$0xf]
      %v306 = vld [vmem:[%s288 + $0x64] sm:$0xf]
      %v307 = vld [vmem:[%s288 + $0x6c] sm:$0xf]
      %v308 = vld [vmem:[%s288 + $0x70] sm:$0xf]
      %v309 = vld [vmem:[%s288 + $0x78] sm:$0xf]
      %v310 = vld [vmem:[%s288 + $0x7c] sm:$0xf]
      %v311 = vld [vmem:[%s288 + $0x84] sm:$0xf]
      %v312 = vld [vmem:[%s288 + $0x88] sm:$0xf]
      %v313 = vld [vmem:[%s288 + $0x90] sm:$0xf]
      %v314 = vld [vmem:[%s288 + $0x94] sm:$0xf]
      %v315 = vld [vmem:[%s288 + $0x9c] sm:$0xf]
      %v316 = vld [vmem:[%s288 + $0xa0] sm:$0xf]
      %v317 = vld [vmem:[%s288 + $0xa8] sm:$0xf]
      %v318 = vld [vmem:[%s288 + $0xac] sm:$0xf]
      %v319 = vld [vmem:[%s288 + $0xb4] sm:$0xf]
      %v320 = vld [vmem:[%s288 + $0xb8] sm:$0xf]
      %v321 = vld [vmem:[%s288 + $0x8] sm:$0x1]
      %v322 = vld [vmem:[%s288 + $0x14] sm:$0x1]
      %v323 = vld [vmem:[%s288 + $0x20] sm:$0x1]
      %v324 = vld [vmem:[%s288 + $0x2c] sm:$0x1]
      %v325 = vld [vmem:[%s288 + $0x38] sm:$0x1]
      %v326 = vld [vmem:[%s288 + $0x44] sm:$0x1]
      %v327 = vld [vmem:[%s288 + $0x50] sm:$0x1]
      %v328 = vld [vmem:[%s288 + $0x5c] sm:$0x1]
      %v329 = vld [vmem:[%s288 + $0x68] sm:$0x1]
      %v330 = vld [vmem:[%s288 + $0x74] sm:$0x1]
      %v331 = vld [vmem:[%s288 + $0x80] sm:$0x1]
      %v332 = vld [vmem:[%s288 + $0x8c] sm:$0x1]
      %v333 = vld [vmem:[%s288 + $0x98] sm:$0x1]
      %v334 = vld [vmem:[%s288 + $0xa4] sm:$0x1]
      %v335 = vld [vmem:[%s288 + $0xb0] sm:$0x1]
      %v336 = vld [vmem:[%s288 + $0xbc] sm:$0x1]
      %v337 = vld [vmem:[%s288] sm:$0xe]
      %v338 = vld [vmem:[%s288 + $0xc] sm:$0xe]
      %v339 = vld [vmem:[%s288 + $0x18] sm:$0xe]
      %v340 = vld [vmem:[%s288 + $0x24] sm:$0xe]
      %v341 = vld [vmem:[%s288 + $0x30] sm:$0xe]
      %v342 = vld [vmem:[%s288 + $0x3c] sm:$0xe]
      %v343 = vld [vmem:[%s288 + $0x48] sm:$0xe]
      %v344 = vld [vmem:[%s288 + $0x54] sm:$0xe]
      %v345 = vld [vmem:[%s288 + $0x60] sm:$0xe]
      %v346 = vld [vmem:[%s288 + $0x6c] sm:$0xe]
      %v347 = vld [vmem:[%s288 + $0x78] sm:$0xe]
      %v348 = vld [vmem:[%s288 + $0x84] sm:$0xe]
      %v349 = vld [vmem:[%s288 + $0x90] sm:$0xe]
      %v350 = vld [vmem:[%s288 + $0x9c] sm:$0xe]
      %v351 = vld [vmem:[%s288 + $0xa8] sm:$0xe]
      %v352 = vld [vmem:[%s288 + $0xb4] sm:$0xe]
      %s353 = sadd.s32 %s217, 2
      %s354 = smul.u32 %s353, 3
      %s355 = smul.addr %s354, 4
      %s356 = scalar_lea.vmem %s207, %s355
      %v357 = vld [vmem:[%s356] sm:$0xf]
      %v358 = vld [vmem:[%s356 + $0x4] sm:$0xf]
      %v359 = vld [vmem:[%s356 + $0xc] sm:$0xf]
      %v360 = vld [vmem:[%s356 + $0x10] sm:$0xf]
      %v361 = vld [vmem:[%s356 + $0x18] sm:$0xf]
      %v362 = vld [vmem:[%s356 + $0x1c] sm:$0xf]
      %v363 = vld [vmem:[%s356 + $0x24] sm:$0xf]
      %v364 = vld [vmem:[%s356 + $0x28] sm:$0xf]
      %v365 = vld [vmem:[%s356 + $0x30] sm:$0xf]
      %v366 = vld [vmem:[%s356 + $0x34] sm:$0xf]
      %v367 = vld [vmem:[%s356 + $0x3c] sm:$0xf]
      %v368 = vld [vmem:[%s356 + $0x40] sm:$0xf]
      %v369 = vld [vmem:[%s356 + $0x48] sm:$0xf]
      %v370 = vld [vmem:[%s356 + $0x4c] sm:$0xf]
      %v371 = vld [vmem:[%s356 + $0x54] sm:$0xf]
      %v372 = vld [vmem:[%s356 + $0x58] sm:$0xf]
      %v373 = vld [vmem:[%s356 + $0x60] sm:$0xf]
      %v374 = vld [vmem:[%s356 + $0x64] sm:$0xf]
      %v375 = vld [vmem:[%s356 + $0x6c] sm:$0xf]
      %v376 = vld [vmem:[%s356 + $0x70] sm:$0xf]
      %v377 = vld [vmem:[%s356 + $0x78] sm:$0xf]
      %v378 = vld [vmem:[%s356 + $0x7c] sm:$0xf]
      %v379 = vld [vmem:[%s356 + $0x84] sm:$0xf]
      %v380 = vld [vmem:[%s356 + $0x88] sm:$0xf]
      %v381 = vld [vmem:[%s356 + $0x90] sm:$0xf]
      %v382 = vld [vmem:[%s356 + $0x94] sm:$0xf]
      %v383 = vld [vmem:[%s356 + $0x9c] sm:$0xf]
      %v384 = vld [vmem:[%s356 + $0xa0] sm:$0xf]
      %v385 = vld [vmem:[%s356 + $0xa8] sm:$0xf]
      %v386 = vld [vmem:[%s356 + $0xac] sm:$0xf]
      %v387 = vld [vmem:[%s356 + $0xb4] sm:$0xf]
      %v388 = vld [vmem:[%s356 + $0xb8] sm:$0xf]
      %v389 = vld [vmem:[%s356 + $0x8] sm:$0x1]
      %v390 = vld [vmem:[%s356 + $0x14] sm:$0x1]
      %v391 = vld [vmem:[%s356 + $0x20] sm:$0x1]
      %v392 = vld [vmem:[%s356 + $0x2c] sm:$0x1]
      %v393 = vld [vmem:[%s356 + $0x38] sm:$0x1]
      %v394 = vld [vmem:[%s356 + $0x44] sm:$0x1]
      %v395 = vld [vmem:[%s356 + $0x50] sm:$0x1]
      %v396 = vld [vmem:[%s356 + $0x5c] sm:$0x1]
      %v397 = vld [vmem:[%s356 + $0x68] sm:$0x1]
      %v398 = vld [vmem:[%s356 + $0x74] sm:$0x1]
      %v399 = vld [vmem:[%s356 + $0x80] sm:$0x1]
      %v400 = vld [vmem:[%s356 + $0x8c] sm:$0x1]
      %v401 = vld [vmem:[%s356 + $0x98] sm:$0x1]
      %v402 = vld [vmem:[%s356 + $0xa4] sm:$0x1]
      %v403 = vld [vmem:[%s356 + $0xb0] sm:$0x1]
      %v404 = vld [vmem:[%s356 + $0xbc] sm:$0x1]
      %v405 = vld [vmem:[%s356] sm:$0xe]
      %v406 = vld [vmem:[%s356 + $0xc] sm:$0xe]
      %v407 = vld [vmem:[%s356 + $0x18] sm:$0xe]
      %v408 = vld [vmem:[%s356 + $0x24] sm:$0xe]
      %v409 = vld [vmem:[%s356 + $0x30] sm:$0xe]
      %v410 = vld [vmem:[%s356 + $0x3c] sm:$0xe]
      %v411 = vld [vmem:[%s356 + $0x48] sm:$0xe]
      %v412 = vld [vmem:[%s356 + $0x54] sm:$0xe]
      %v413 = vld [vmem:[%s356 + $0x60] sm:$0xe]
      %v414 = vld [vmem:[%s356 + $0x6c] sm:$0xe]
      %v415 = vld [vmem:[%s356 + $0x78] sm:$0xe]
      %v416 = vld [vmem:[%s356 + $0x84] sm:$0xe]
      %v417 = vld [vmem:[%s356 + $0x90] sm:$0xe]
      %v418 = vld [vmem:[%s356 + $0x9c] sm:$0xe]
      %v419 = vld [vmem:[%s356 + $0xa8] sm:$0xe]
      %v420 = vld [vmem:[%s356 + $0xb4] sm:$0xe]
      %v453 = vunpack.c.l.b16 %v221
      %v454 = vunpack.c.l.b16 %v222
      %v455 = vunpack.c.l.b16 %v223
      %v456 = vunpack.c.l.b16 %v224
      %v457 = vunpack.c.l.b16 %v225
      %v458 = vunpack.c.l.b16 %v226
      %v459 = vunpack.c.l.b16 %v227
      %v460 = vunpack.c.l.b16 %v228
      %v461 = vunpack.c.l.b16 %v229
      %v462 = vunpack.c.l.b16 %v230
      %v463 = vunpack.c.l.b16 %v231
      %v464 = vunpack.c.l.b16 %v232
      %v465 = vunpack.c.l.b16 %v233
      %v466 = vunpack.c.l.b16 %v234
      %v467 = vunpack.c.l.b16 %v235
      %v468 = vunpack.c.l.b16 %v236
      %v469 = vunpack.c.l.b16 %v237
      %v470 = vunpack.c.l.b16 %v238
      %v471 = vunpack.c.l.b16 %v239
      %v472 = vunpack.c.l.b16 %v240
      %v473 = vunpack.c.l.b16 %v241
      %v474 = vunpack.c.l.b16 %v242
      %v475 = vunpack.c.l.b16 %v243
      %v476 = vunpack.c.l.b16 %v244
      %v477 = vunpack.c.l.b16 %v245
      %v478 = vunpack.c.l.b16 %v246
      %v479 = vunpack.c.l.b16 %v247
      %v480 = vunpack.c.l.b16 %v248
      %v481 = vunpack.c.l.b16 %v249
      %v482 = vunpack.c.l.b16 %v250
      %v483 = vunpack.c.l.b16 %v251
      %v484 = vunpack.c.l.b16 %v252
      %v485 = vpack.c.b16 %v454, %v453
      %v486 = vpack.c.b16 %v456, %v455
      %v487 = vpack.c.b16 %v458, %v457
      %v488 = vpack.c.b16 %v460, %v459
      %v489 = vpack.c.b16 %v462, %v461
      %v490 = vpack.c.b16 %v464, %v463
      %v491 = vpack.c.b16 %v466, %v465
      %v492 = vpack.c.b16 %v468, %v467
      %v493 = vpack.c.b16 %v470, %v469
      %v494 = vpack.c.b16 %v472, %v471
      %v495 = vpack.c.b16 %v474, %v473
      %v496 = vpack.c.b16 %v476, %v475
      %v497 = vpack.c.b16 %v478, %v477
      %v498 = vpack.c.b16 %v480, %v479
      %v499 = vpack.c.b16 %v482, %v481
      %v500 = vpack.c.b16 %v484, %v483
      %v533 = vunpack.c.l.b16 %v253
      %v534 = vunpack.c.l.b16 %v254
      %v535 = vunpack.c.l.b16 %v255
      %v536 = vunpack.c.l.b16 %v256
      %v537 = vunpack.c.l.b16 %v257
      %v538 = vunpack.c.l.b16 %v258
      %v539 = vunpack.c.l.b16 %v259
      %v540 = vunpack.c.l.b16 %v260
      %v541 = vunpack.c.l.b16 %v261
      %v542 = vunpack.c.l.b16 %v262
      %v543 = vunpack.c.l.b16 %v263
      %v544 = vunpack.c.l.b16 %v264
      %v545 = vunpack.c.l.b16 %v265
      %v546 = vunpack.c.l.b16 %v266
      %v547 = vunpack.c.l.b16 %v267
      %v548 = vunpack.c.l.b16 %v268
      %v549 = vpack.c.b16 %v533, %v533
      %v550 = vpack.c.b16 %v534, %v534
      %v551 = vpack.c.b16 %v535, %v535
      %v552 = vpack.c.b16 %v536, %v536
      %v553 = vpack.c.b16 %v537, %v537
      %v554 = vpack.c.b16 %v538, %v538
      %v555 = vpack.c.b16 %v539, %v539
      %v556 = vpack.c.b16 %v540, %v540
      %v557 = vpack.c.b16 %v541, %v541
      %v558 = vpack.c.b16 %v542, %v542
      %v559 = vpack.c.b16 %v543, %v543
      %v560 = vpack.c.b16 %v544, %v544
      %v561 = vpack.c.b16 %v545, %v545
      %v562 = vpack.c.b16 %v546, %v546
      %v563 = vpack.c.b16 %v547, %v547
      %v564 = vpack.c.b16 %v548, %v548
      %vm565 = vsmask.f32 7424
      %v567 = vshrl.u32 %v485, 16
      %v569 = vshll.u32 %v485, 16
      %v571 = vrot.slane %v569, 1
      %v572 = vor.u32 %v567, %v571
      %v574 = vshll.u32 %v549, 16
      %v576 = vrot.slane %v574, 1
      %v577 = vsel %vm565, %v572, %v576
      %v579 = vshrl.u32 %v486, 16
      %v581 = vshll.u32 %v486, 16
      %v583 = vrot.slane %v581, 1
      %v584 = vor.u32 %v579, %v583
      %v586 = vshll.u32 %v550, 16
      %v588 = vrot.slane %v586, 1
      %v589 = vsel %vm565, %v584, %v588
      %v591 = vshrl.u32 %v487, 16
      %v593 = vshll.u32 %v487, 16
      %v595 = vrot.slane %v593, 1
      %v596 = vor.u32 %v591, %v595
      %v598 = vshll.u32 %v551, 16
      %v600 = vrot.slane %v598, 1
      %v601 = vsel %vm565, %v596, %v600
      %v603 = vshrl.u32 %v488, 16
      %v605 = vshll.u32 %v488, 16
      %v607 = vrot.slane %v605, 1
      %v608 = vor.u32 %v603, %v607
      %v610 = vshll.u32 %v552, 16
      %v612 = vrot.slane %v610, 1
      %v613 = vsel %vm565, %v608, %v612
      %v615 = vshrl.u32 %v489, 16
      %v617 = vshll.u32 %v489, 16
      %v619 = vrot.slane %v617, 1
      %v620 = vor.u32 %v615, %v619
      %v622 = vshll.u32 %v553, 16
      %v624 = vrot.slane %v622, 1
      %v625 = vsel %vm565, %v620, %v624
      %v627 = vshrl.u32 %v490, 16
      %v629 = vshll.u32 %v490, 16
      %v631 = vrot.slane %v629, 1
      %v632 = vor.u32 %v627, %v631
      %v634 = vshll.u32 %v554, 16
      %v636 = vrot.slane %v634, 1
      %v637 = vsel %vm565, %v632, %v636
      %v639 = vshrl.u32 %v491, 16
      %v641 = vshll.u32 %v491, 16
      %v643 = vrot.slane %v641, 1
      %v644 = vor.u32 %v639, %v643
      %v646 = vshll.u32 %v555, 16
      %v648 = vrot.slane %v646, 1
      %v649 = vsel %vm565, %v644, %v648
      %v651 = vshrl.u32 %v492, 16
      %v653 = vshll.u32 %v492, 16
      %v655 = vrot.slane %v653, 1
      %v656 = vor.u32 %v651, %v655
      %v658 = vshll.u32 %v556, 16
      %v660 = vrot.slane %v658, 1
      %v661 = vsel %vm565, %v656, %v660
      %v663 = vshrl.u32 %v493, 16
      %v665 = vshll.u32 %v493, 16
      %v667 = vrot.slane %v665, 1
      %v668 = vor.u32 %v663, %v667
      %v670 = vshll.u32 %v557, 16
      %v672 = vrot.slane %v670, 1
      %v673 = vsel %vm565, %v668, %v672
      %v675 = vshrl.u32 %v494, 16
      %v677 = vshll.u32 %v494, 16
      %v679 = vrot.slane %v677, 1
      %v680 = vor.u32 %v675, %v679
      %v682 = vshll.u32 %v558, 16
      %v684 = vrot.slane %v682, 1
      %v685 = vsel %vm565, %v680, %v684
      %v687 = vshrl.u32 %v495, 16
      %v689 = vshll.u32 %v495, 16
      %v691 = vrot.slane %v689, 1
      %v692 = vor.u32 %v687, %v691
      %v694 = vshll.u32 %v559, 16
      %v696 = vrot.slane %v694, 1
      %v697 = vsel %vm565, %v692, %v696
      %v699 = vshrl.u32 %v496, 16
      %v701 = vshll.u32 %v496, 16
      %v703 = vrot.slane %v701, 1
      %v704 = vor.u32 %v699, %v703
      %v706 = vshll.u32 %v560, 16
      %v708 = vrot.slane %v706, 1
      %v709 = vsel %vm565, %v704, %v708
      %v711 = vshrl.u32 %v497, 16
      %v713 = vshll.u32 %v497, 16
      %v715 = vrot.slane %v713, 1
      %v716 = vor.u32 %v711, %v715
      %v718 = vshll.u32 %v561, 16
      %v720 = vrot.slane %v718, 1
      %v721 = vsel %vm565, %v716, %v720
      %v723 = vshrl.u32 %v498, 16
      %v725 = vshll.u32 %v498, 16
      %v727 = vrot.slane %v725, 1
      %v728 = vor.u32 %v723, %v727
      %v730 = vshll.u32 %v562, 16
      %v732 = vrot.slane %v730, 1
      %v733 = vsel %vm565, %v728, %v732
      %v735 = vshrl.u32 %v499, 16
      %v737 = vshll.u32 %v499, 16
      %v739 = vrot.slane %v737, 1
      %v740 = vor.u32 %v735, %v739
      %v742 = vshll.u32 %v563, 16
      %v744 = vrot.slane %v742, 1
      %v745 = vsel %vm565, %v740, %v744
      %v747 = vshrl.u32 %v500, 16
      %v749 = vshll.u32 %v500, 16
      %v751 = vrot.slane %v749, 1
      %v752 = vor.u32 %v747, %v751
      %v754 = vshll.u32 %v564, 16
      %v756 = vrot.slane %v754, 1
      %v757 = vsel %vm565, %v752, %v756
      %v790 = vunpack.c.l.b16 %v269
      %v791 = vunpack.c.l.b16 %v270
      %v792 = vunpack.c.l.b16 %v271
      %v793 = vunpack.c.l.b16 %v272
      %v794 = vunpack.c.l.b16 %v273
      %v795 = vunpack.c.l.b16 %v274
      %v796 = vunpack.c.l.b16 %v275
      %v797 = vunpack.c.l.b16 %v276
      %v798 = vunpack.c.l.b16 %v277
      %v799 = vunpack.c.l.b16 %v278
      %v800 = vunpack.c.l.b16 %v279
      %v801 = vunpack.c.l.b16 %v280
      %v802 = vunpack.c.l.b16 %v281
      %v803 = vunpack.c.l.b16 %v282
      %v804 = vunpack.c.l.b16 %v283
      %v805 = vunpack.c.l.b16 %v284
      %v806 = vpack.c.b16 %v454, %v790
      %v807 = vpack.c.b16 %v456, %v791
      %v808 = vpack.c.b16 %v458, %v792
      %v809 = vpack.c.b16 %v460, %v793
      %v810 = vpack.c.b16 %v462, %v794
      %v811 = vpack.c.b16 %v464, %v795
      %v812 = vpack.c.b16 %v466, %v796
      %v813 = vpack.c.b16 %v468, %v797
      %v814 = vpack.c.b16 %v470, %v798
      %v815 = vpack.c.b16 %v472, %v799
      %v816 = vpack.c.b16 %v474, %v800
      %v817 = vpack.c.b16 %v476, %v801
      %v818 = vpack.c.b16 %v478, %v802
      %v819 = vpack.c.b16 %v480, %v803
      %v820 = vpack.c.b16 %v482, %v804
      %v821 = vpack.c.b16 %v484, %v805
      %vm822 = vcmask 1046528
      %v823 = vrot.slane %v806, 1
      %v824 = vrot.slane %v549, 1
      %v825 = vsel %vm822, %v823, %v824
      %v826 = vrot.slane %v807, 1
      %v827 = vrot.slane %v550, 1
      %v828 = vsel %vm822, %v826, %v827
      %v829 = vrot.slane %v808, 1
      %v830 = vrot.slane %v551, 1
      %v831 = vsel %vm822, %v829, %v830
      %v832 = vrot.slane %v809, 1
      %v833 = vrot.slane %v552, 1
      %v834 = vsel %vm822, %v832, %v833
      %v835 = vrot.slane %v810, 1
      %v836 = vrot.slane %v553, 1
      %v837 = vsel %vm822, %v835, %v836
      %v838 = vrot.slane %v811, 1
      %v839 = vrot.slane %v554, 1
      %v840 = vsel %vm822, %v838, %v839
      %v841 = vrot.slane %v812, 1
      %v842 = vrot.slane %v555, 1
      %v843 = vsel %vm822, %v841, %v842
      %v844 = vrot.slane %v813, 1
      %v845 = vrot.slane %v556, 1
      %v846 = vsel %vm822, %v844, %v845
      %v847 = vrot.slane %v814, 1
      %v848 = vrot.slane %v557, 1
      %v849 = vsel %vm822, %v847, %v848
      %v850 = vrot.slane %v815, 1
      %v851 = vrot.slane %v558, 1
      %v852 = vsel %vm822, %v850, %v851
      %v853 = vrot.slane %v816, 1
      %v854 = vrot.slane %v559, 1
      %v855 = vsel %vm822, %v853, %v854
      %v856 = vrot.slane %v817, 1
      %v857 = vrot.slane %v560, 1
      %v858 = vsel %vm822, %v856, %v857
      %v859 = vrot.slane %v818, 1
      %v860 = vrot.slane %v561, 1
      %v861 = vsel %vm822, %v859, %v860
      %v862 = vrot.slane %v819, 1
      %v863 = vrot.slane %v562, 1
      %v864 = vsel %vm822, %v862, %v863
      %v865 = vrot.slane %v820, 1
      %v866 = vrot.slane %v563, 1
      %v867 = vsel %vm822, %v865, %v866
      %v868 = vrot.slane %v821, 1
      %v869 = vrot.slane %v564, 1
      %v870 = vsel %vm822, %v868, %v869
      %v919 = vunpack.c.l.b16 %v289
      %v920 = vunpack.c.l.b16 %v290
      %v921 = vunpack.c.l.b16 %v291
      %v922 = vunpack.c.l.b16 %v292
      %v923 = vunpack.c.l.b16 %v293
      %v924 = vunpack.c.l.b16 %v294
      %v925 = vunpack.c.l.b16 %v295
      %v926 = vunpack.c.l.b16 %v296
      %v927 = vunpack.c.l.b16 %v297
      %v928 = vunpack.c.l.b16 %v298
      %v929 = vunpack.c.l.b16 %v299
      %v930 = vunpack.c.l.b16 %v300
      %v931 = vunpack.c.l.b16 %v301
      %v932 = vunpack.c.l.b16 %v302
      %v933 = vunpack.c.l.b16 %v303
      %v934 = vunpack.c.l.b16 %v304
      %v935 = vunpack.c.l.b16 %v305
      %v936 = vunpack.c.l.b16 %v306
      %v937 = vunpack.c.l.b16 %v307
      %v938 = vunpack.c.l.b16 %v308
      %v939 = vunpack.c.l.b16 %v309
      %v940 = vunpack.c.l.b16 %v310
      %v941 = vunpack.c.l.b16 %v311
      %v942 = vunpack.c.l.b16 %v312
      %v943 = vunpack.c.l.b16 %v313
      %v944 = vunpack.c.l.b16 %v314
      %v945 = vunpack.c.l.b16 %v315
      %v946 = vunpack.c.l.b16 %v316
      %v947 = vunpack.c.l.b16 %v317
      %v948 = vunpack.c.l.b16 %v318
      %v949 = vunpack.c.l.b16 %v319
      %v950 = vunpack.c.l.b16 %v320
      %v951 = vpack.c.b16 %v920, %v919
      %v952 = vpack.c.b16 %v922, %v921
      %v953 = vpack.c.b16 %v924, %v923
      %v954 = vpack.c.b16 %v926, %v925
      %v955 = vpack.c.b16 %v928, %v927
      %v956 = vpack.c.b16 %v930, %v929
      %v957 = vpack.c.b16 %v932, %v931
      %v958 = vpack.c.b16 %v934, %v933
      %v959 = vpack.c.b16 %v936, %v935
      %v960 = vpack.c.b16 %v938, %v937
      %v961 = vpack.c.b16 %v940, %v939
      %v962 = vpack.c.b16 %v942, %v941
      %v963 = vpack.c.b16 %v944, %v943
      %v964 = vpack.c.b16 %v946, %v945
      %v965 = vpack.c.b16 %v948, %v947
      %v966 = vpack.c.b16 %v950, %v949
      %v999 = vunpack.c.l.b16 %v321
      %v1000 = vunpack.c.l.b16 %v322
      %v1001 = vunpack.c.l.b16 %v323
      %v1002 = vunpack.c.l.b16 %v324
      %v1003 = vunpack.c.l.b16 %v325
      %v1004 = vunpack.c.l.b16 %v326
      %v1005 = vunpack.c.l.b16 %v327
      %v1006 = vunpack.c.l.b16 %v328
      %v1007 = vunpack.c.l.b16 %v329
      %v1008 = vunpack.c.l.b16 %v330
      %v1009 = vunpack.c.l.b16 %v331
      %v1010 = vunpack.c.l.b16 %v332
      %v1011 = vunpack.c.l.b16 %v333
      %v1012 = vunpack.c.l.b16 %v334
      %v1013 = vunpack.c.l.b16 %v335
      %v1014 = vunpack.c.l.b16 %v336
      %v1015 = vpack.c.b16 %v999, %v999
      %v1016 = vpack.c.b16 %v1000, %v1000
      %v1017 = vpack.c.b16 %v1001, %v1001
      %v1018 = vpack.c.b16 %v1002, %v1002
      %v1019 = vpack.c.b16 %v1003, %v1003
      %v1020 = vpack.c.b16 %v1004, %v1004
      %v1021 = vpack.c.b16 %v1005, %v1005
      %v1022 = vpack.c.b16 %v1006, %v1006
      %v1023 = vpack.c.b16 %v1007, %v1007
      %v1024 = vpack.c.b16 %v1008, %v1008
      %v1025 = vpack.c.b16 %v1009, %v1009
      %v1026 = vpack.c.b16 %v1010, %v1010
      %v1027 = vpack.c.b16 %v1011, %v1011
      %v1028 = vpack.c.b16 %v1012, %v1012
      %v1029 = vpack.c.b16 %v1013, %v1013
      %v1030 = vpack.c.b16 %v1014, %v1014
      %v1032 = vshrl.u32 %v951, 16
      %v1034 = vshll.u32 %v951, 16
      %v1036 = vrot.slane %v1034, 1
      %v1037 = vor.u32 %v1032, %v1036
      %v1039 = vshll.u32 %v1015, 16
      %v1041 = vrot.slane %v1039, 1
      %v1042 = vsel %vm565, %v1037, %v1041
      %v1044 = vshrl.u32 %v952, 16
      %v1046 = vshll.u32 %v952, 16
      %v1048 = vrot.slane %v1046, 1
      %v1049 = vor.u32 %v1044, %v1048
      %v1051 = vshll.u32 %v1016, 16
      %v1053 = vrot.slane %v1051, 1
      %v1054 = vsel %vm565, %v1049, %v1053
      %v1056 = vshrl.u32 %v953, 16
      %v1058 = vshll.u32 %v953, 16
      %v1060 = vrot.slane %v1058, 1
      %v1061 = vor.u32 %v1056, %v1060
      %v1063 = vshll.u32 %v1017, 16
      %v1065 = vrot.slane %v1063, 1
      %v1066 = vsel %vm565, %v1061, %v1065
      %v1068 = vshrl.u32 %v954, 16
      %v1070 = vshll.u32 %v954, 16
      %v1072 = vrot.slane %v1070, 1
      %v1073 = vor.u32 %v1068, %v1072
      %v1075 = vshll.u32 %v1018, 16
      %v1077 = vrot.slane %v1075, 1
      %v1078 = vsel %vm565, %v1073, %v1077
      %v1080 = vshrl.u32 %v955, 16
      %v1082 = vshll.u32 %v955, 16
      %v1084 = vrot.slane %v1082, 1
      %v1085 = vor.u32 %v1080, %v1084
      %v1087 = vshll.u32 %v1019, 16
      %v1089 = vrot.slane %v1087, 1
      %v1090 = vsel %vm565, %v1085, %v1089
      %v1092 = vshrl.u32 %v956, 16
      %v1094 = vshll.u32 %v956, 16
      %v1096 = vrot.slane %v1094, 1
      %v1097 = vor.u32 %v1092, %v1096
      %v1099 = vshll.u32 %v1020, 16
      %v1101 = vrot.slane %v1099, 1
      %v1102 = vsel %vm565, %v1097, %v1101
      %v1104 = vshrl.u32 %v957, 16
      %v1106 = vshll.u32 %v957, 16
      %v1108 = vrot.slane %v1106, 1
      %v1109 = vor.u32 %v1104, %v1108
      %v1111 = vshll.u32 %v1021, 16
      %v1113 = vrot.slane %v1111, 1
      %v1114 = vsel %vm565, %v1109, %v1113
      %v1116 = vshrl.u32 %v958, 16
      %v1118 = vshll.u32 %v958, 16
      %v1120 = vrot.slane %v1118, 1
      %v1121 = vor.u32 %v1116, %v1120
      %v1123 = vshll.u32 %v1022, 16
      %v1125 = vrot.slane %v1123, 1
      %v1126 = vsel %vm565, %v1121, %v1125
      %v1128 = vshrl.u32 %v959, 16
      %v1130 = vshll.u32 %v959, 16
      %v1132 = vrot.slane %v1130, 1
      %v1133 = vor.u32 %v1128, %v1132
      %v1135 = vshll.u32 %v1023, 16
      %v1137 = vrot.slane %v1135, 1
      %v1138 = vsel %vm565, %v1133, %v1137
      %v1140 = vshrl.u32 %v960, 16
      %v1142 = vshll.u32 %v960, 16
      %v1144 = vrot.slane %v1142, 1
      %v1145 = vor.u32 %v1140, %v1144
      %v1147 = vshll.u32 %v1024, 16
      %v1149 = vrot.slane %v1147, 1
      %v1150 = vsel %vm565, %v1145, %v1149
      %v1152 = vshrl.u32 %v961, 16
      %v1154 = vshll.u32 %v961, 16
      %v1156 = vrot.slane %v1154, 1
      %v1157 = vor.u32 %v1152, %v1156
      %v1159 = vshll.u32 %v1025, 16
      %v1161 = vrot.slane %v1159, 1
      %v1162 = vsel %vm565, %v1157, %v1161
      %v1164 = vshrl.u32 %v962, 16
      %v1166 = vshll.u32 %v962, 16
      %v1168 = vrot.slane %v1166, 1
      %v1169 = vor.u32 %v1164, %v1168
      %v1171 = vshll.u32 %v1026, 16
      %v1173 = vrot.slane %v1171, 1
      %v1174 = vsel %vm565, %v1169, %v1173
      %v1176 = vshrl.u32 %v963, 16
      %v1178 = vshll.u32 %v963, 16
      %v1180 = vrot.slane %v1178, 1
      %v1181 = vor.u32 %v1176, %v1180
      %v1183 = vshll.u32 %v1027, 16
      %v1185 = vrot.slane %v1183, 1
      %v1186 = vsel %vm565, %v1181, %v1185
      %v1188 = vshrl.u32 %v964, 16
      %v1190 = vshll.u32 %v964, 16
      %v1192 = vrot.slane %v1190, 1
      %v1193 = vor.u32 %v1188, %v1192
      %v1195 = vshll.u32 %v1028, 16
      %v1197 = vrot.slane %v1195, 1
      %v1198 = vsel %vm565, %v1193, %v1197
      %v1200 = vshrl.u32 %v965, 16
      %v1202 = vshll.u32 %v965, 16
      %v1204 = vrot.slane %v1202, 1
      %v1205 = vor.u32 %v1200, %v1204
      %v1207 = vshll.u32 %v1029, 16
      %v1209 = vrot.slane %v1207, 1
      %v1210 = vsel %vm565, %v1205, %v1209
      %v1212 = vshrl.u32 %v966, 16
      %v1214 = vshll.u32 %v966, 16
      %v1216 = vrot.slane %v1214, 1
      %v1217 = vor.u32 %v1212, %v1216
      %v1219 = vshll.u32 %v1030, 16
      %v1221 = vrot.slane %v1219, 1
      %v1222 = vsel %vm565, %v1217, %v1221
      %v1255 = vunpack.c.l.b16 %v337
      %v1256 = vunpack.c.l.b16 %v338
      %v1257 = vunpack.c.l.b16 %v339
      %v1258 = vunpack.c.l.b16 %v340
      %v1259 = vunpack.c.l.b16 %v341
      %v1260 = vunpack.c.l.b16 %v342
      %v1261 = vunpack.c.l.b16 %v343
      %v1262 = vunpack.c.l.b16 %v344
      %v1263 = vunpack.c.l.b16 %v345
      %v1264 = vunpack.c.l.b16 %v346
      %v1265 = vunpack.c.l.b16 %v347
      %v1266 = vunpack.c.l.b16 %v348
      %v1267 = vunpack.c.l.b16 %v349
      %v1268 = vunpack.c.l.b16 %v350
      %v1269 = vunpack.c.l.b16 %v351
      %v1270 = vunpack.c.l.b16 %v352
      %v1271 = vpack.c.b16 %v920, %v1255
      %v1272 = vpack.c.b16 %v922, %v1256
      %v1273 = vpack.c.b16 %v924, %v1257
      %v1274 = vpack.c.b16 %v926, %v1258
      %v1275 = vpack.c.b16 %v928, %v1259
      %v1276 = vpack.c.b16 %v930, %v1260
      %v1277 = vpack.c.b16 %v932, %v1261
      %v1278 = vpack.c.b16 %v934, %v1262
      %v1279 = vpack.c.b16 %v936, %v1263
      %v1280 = vpack.c.b16 %v938, %v1264
      %v1281 = vpack.c.b16 %v940, %v1265
      %v1282 = vpack.c.b16 %v942, %v1266
      %v1283 = vpack.c.b16 %v944, %v1267
      %v1284 = vpack.c.b16 %v946, %v1268
      %v1285 = vpack.c.b16 %v948, %v1269
      %v1286 = vpack.c.b16 %v950, %v1270
      %v1287 = vrot.slane %v1271, 1
      %v1288 = vrot.slane %v1015, 1
      %v1289 = vsel %vm822, %v1287, %v1288
      %v1290 = vrot.slane %v1272, 1
      %v1291 = vrot.slane %v1016, 1
      %v1292 = vsel %vm822, %v1290, %v1291
      %v1293 = vrot.slane %v1273, 1
      %v1294 = vrot.slane %v1017, 1
      %v1295 = vsel %vm822, %v1293, %v1294
      %v1296 = vrot.slane %v1274, 1
      %v1297 = vrot.slane %v1018, 1
      %v1298 = vsel %vm822, %v1296, %v1297
      %v1299 = vrot.slane %v1275, 1
      %v1300 = vrot.slane %v1019, 1
      %v1301 = vsel %vm822, %v1299, %v1300
      %v1302 = vrot.slane %v1276, 1
      %v1303 = vrot.slane %v1020, 1
      %v1304 = vsel %vm822, %v1302, %v1303
      %v1305 = vrot.slane %v1277, 1
      %v1306 = vrot.slane %v1021, 1
      %v1307 = vsel %vm822, %v1305, %v1306
      %v1308 = vrot.slane %v1278, 1
      %v1309 = vrot.slane %v1022, 1
      %v1310 = vsel %vm822, %v1308, %v1309
      %v1311 = vrot.slane %v1279, 1
      %v1312 = vrot.slane %v1023, 1
      %v1313 = vsel %vm822, %v1311, %v1312
      %v1314 = vrot.slane %v1280, 1
      %v1315 = vrot.slane %v1024, 1
      %v1316 = vsel %vm822, %v1314, %v1315
      %v1317 = vrot.slane %v1281, 1
      %v1318 = vrot.slane %v1025, 1
      %v1319 = vsel %vm822, %v1317, %v1318
      %v1320 = vrot.slane %v1282, 1
      %v1321 = vrot.slane %v1026, 1
      %v1322 = vsel %vm822, %v1320, %v1321
      %v1323 = vrot.slane %v1283, 1
      %v1324 = vrot.slane %v1027, 1
      %v1325 = vsel %vm822, %v1323, %v1324
      %v1326 = vrot.slane %v1284, 1
      %v1327 = vrot.slane %v1028, 1
      %v1328 = vsel %vm822, %v1326, %v1327
      %v1329 = vrot.slane %v1285, 1
      %v1330 = vrot.slane %v1029, 1
      %v1331 = vsel %vm822, %v1329, %v1330
      %v1332 = vrot.slane %v1286, 1
      %v1333 = vrot.slane %v1030, 1
      %v1334 = vsel %vm822, %v1332, %v1333
      %v1383 = vunpack.c.l.b16 %v357
      %v1384 = vunpack.c.l.b16 %v358
      %v1385 = vunpack.c.l.b16 %v359
      %v1386 = vunpack.c.l.b16 %v360
      %v1387 = vunpack.c.l.b16 %v361
      %v1388 = vunpack.c.l.b16 %v362
      %v1389 = vunpack.c.l.b16 %v363
      %v1390 = vunpack.c.l.b16 %v364
      %v1391 = vunpack.c.l.b16 %v365
      %v1392 = vunpack.c.l.b16 %v366
      %v1393 = vunpack.c.l.b16 %v367
      %v1394 = vunpack.c.l.b16 %v368
      %v1395 = vunpack.c.l.b16 %v369
      %v1396 = vunpack.c.l.b16 %v370
      %v1397 = vunpack.c.l.b16 %v371
      %v1398 = vunpack.c.l.b16 %v372
      %v1399 = vunpack.c.l.b16 %v373
      %v1400 = vunpack.c.l.b16 %v374
      %v1401 = vunpack.c.l.b16 %v375
      %v1402 = vunpack.c.l.b16 %v376
      %v1403 = vunpack.c.l.b16 %v377
      %v1404 = vunpack.c.l.b16 %v378
      %v1405 = vunpack.c.l.b16 %v379
      %v1406 = vunpack.c.l.b16 %v380
      %v1407 = vunpack.c.l.b16 %v381
      %v1408 = vunpack.c.l.b16 %v382
      %v1409 = vunpack.c.l.b16 %v383
      %v1410 = vunpack.c.l.b16 %v384
      %v1411 = vunpack.c.l.b16 %v385
      %v1412 = vunpack.c.l.b16 %v386
      %v1413 = vunpack.c.l.b16 %v387
      %v1414 = vunpack.c.l.b16 %v388
      %v1415 = vpack.c.b16 %v1384, %v1383
      %v1416 = vpack.c.b16 %v1386, %v1385
      %v1417 = vpack.c.b16 %v1388, %v1387
      %v1418 = vpack.c.b16 %v1390, %v1389
      %v1419 = vpack.c.b16 %v1392, %v1391
      %v1420 = vpack.c.b16 %v1394, %v1393
      %v1421 = vpack.c.b16 %v1396, %v1395
      %v1422 = vpack.c.b16 %v1398, %v1397
      %v1423 = vpack.c.b16 %v1400, %v1399
      %v1424 = vpack.c.b16 %v1402, %v1401
      %v1425 = vpack.c.b16 %v1404, %v1403
      %v1426 = vpack.c.b16 %v1406, %v1405
      %v1427 = vpack.c.b16 %v1408, %v1407
      %v1428 = vpack.c.b16 %v1410, %v1409
      %v1429 = vpack.c.b16 %v1412, %v1411
      %v1430 = vpack.c.b16 %v1414, %v1413
      %v1463 = vunpack.c.l.b16 %v389
      %v1464 = vunpack.c.l.b16 %v390
      %v1465 = vunpack.c.l.b16 %v391
      %v1466 = vunpack.c.l.b16 %v392
      %v1467 = vunpack.c.l.b16 %v393
      %v1468 = vunpack.c.l.b16 %v394
      %v1469 = vunpack.c.l.b16 %v395
      %v1470 = vunpack.c.l.b16 %v396
      %v1471 = vunpack.c.l.b16 %v397
      %v1472 = vunpack.c.l.b16 %v398
      %v1473 = vunpack.c.l.b16 %v399
      %v1474 = vunpack.c.l.b16 %v400
      %v1475 = vunpack.c.l.b16 %v401
      %v1476 = vunpack.c.l.b16 %v402
      %v1477 = vunpack.c.l.b16 %v403
      %v1478 = vunpack.c.l.b16 %v404
      %v1479 = vpack.c.b16 %v1463, %v1463
      %v1480 = vpack.c.b16 %v1464, %v1464
      %v1481 = vpack.c.b16 %v1465, %v1465
      %v1482 = vpack.c.b16 %v1466, %v1466
      %v1483 = vpack.c.b16 %v1467, %v1467
      %v1484 = vpack.c.b16 %v1468, %v1468
      %v1485 = vpack.c.b16 %v1469, %v1469
      %v1486 = vpack.c.b16 %v1470, %v1470
      %v1487 = vpack.c.b16 %v1471, %v1471
      %v1488 = vpack.c.b16 %v1472, %v1472
      %v1489 = vpack.c.b16 %v1473, %v1473
      %v1490 = vpack.c.b16 %v1474, %v1474
      %v1491 = vpack.c.b16 %v1475, %v1475
      %v1492 = vpack.c.b16 %v1476, %v1476
      %v1493 = vpack.c.b16 %v1477, %v1477
      %v1494 = vpack.c.b16 %v1478, %v1478
      %v1496 = vshrl.u32 %v1415, 16
      %v1498 = vshll.u32 %v1415, 16
      %v1500 = vrot.slane %v1498, 1
      %v1501 = vor.u32 %v1496, %v1500
      %v1503 = vshll.u32 %v1479, 16
      %v1505 = vrot.slane %v1503, 1
      %v1506 = vsel %vm565, %v1501, %v1505
      %v1508 = vshrl.u32 %v1416, 16
      %v1510 = vshll.u32 %v1416, 16
      %v1512 = vrot.slane %v1510, 1
      %v1513 = vor.u32 %v1508, %v1512
      %v1515 = vshll.u32 %v1480, 16
      %v1517 = vrot.slane %v1515, 1
      %v1518 = vsel %vm565, %v1513, %v1517
      %v1520 = vshrl.u32 %v1417, 16
      %v1522 = vshll.u32 %v1417, 16
      %v1524 = vrot.slane %v1522, 1
      %v1525 = vor.u32 %v1520, %v1524
      %v1527 = vshll.u32 %v1481, 16
      %v1529 = vrot.slane %v1527, 1
      %v1530 = vsel %vm565, %v1525, %v1529
      %v1532 = vshrl.u32 %v1418, 16
      %v1534 = vshll.u32 %v1418, 16
      %v1536 = vrot.slane %v1534, 1
      %v1537 = vor.u32 %v1532, %v1536
      %v1539 = vshll.u32 %v1482, 16
      %v1541 = vrot.slane %v1539, 1
      %v1542 = vsel %vm565, %v1537, %v1541
      %v1544 = vshrl.u32 %v1419, 16
      %v1546 = vshll.u32 %v1419, 16
      %v1548 = vrot.slane %v1546, 1
      %v1549 = vor.u32 %v1544, %v1548
      %v1551 = vshll.u32 %v1483, 16
      %v1553 = vrot.slane %v1551, 1
      %v1554 = vsel %vm565, %v1549, %v1553
      %v1556 = vshrl.u32 %v1420, 16
      %v1558 = vshll.u32 %v1420, 16
      %v1560 = vrot.slane %v1558, 1
      %v1561 = vor.u32 %v1556, %v1560
      %v1563 = vshll.u32 %v1484, 16
      %v1565 = vrot.slane %v1563, 1
      %v1566 = vsel %vm565, %v1561, %v1565
      %v1568 = vshrl.u32 %v1421, 16
      %v1570 = vshll.u32 %v1421, 16
      %v1572 = vrot.slane %v1570, 1
      %v1573 = vor.u32 %v1568, %v1572
      %v1575 = vshll.u32 %v1485, 16
      %v1577 = vrot.slane %v1575, 1
      %v1578 = vsel %vm565, %v1573, %v1577
      %v1580 = vshrl.u32 %v1422, 16
      %v1582 = vshll.u32 %v1422, 16
      %v1584 = vrot.slane %v1582, 1
      %v1585 = vor.u32 %v1580, %v1584
      %v1587 = vshll.u32 %v1486, 16
      %v1589 = vrot.slane %v1587, 1
      %v1590 = vsel %vm565, %v1585, %v1589
      %v1592 = vshrl.u32 %v1423, 16
      %v1594 = vshll.u32 %v1423, 16
      %v1596 = vrot.slane %v1594, 1
      %v1597 = vor.u32 %v1592, %v1596
      %v1599 = vshll.u32 %v1487, 16
      %v1601 = vrot.slane %v1599, 1
      %v1602 = vsel %vm565, %v1597, %v1601
      %v1604 = vshrl.u32 %v1424, 16
      %v1606 = vshll.u32 %v1424, 16
      %v1608 = vrot.slane %v1606, 1
      %v1609 = vor.u32 %v1604, %v1608
      %v1611 = vshll.u32 %v1488, 16
      %v1613 = vrot.slane %v1611, 1
      %v1614 = vsel %vm565, %v1609, %v1613
      %v1616 = vshrl.u32 %v1425, 16
      %v1618 = vshll.u32 %v1425, 16
      %v1620 = vrot.slane %v1618, 1
      %v1621 = vor.u32 %v1616, %v1620
      %v1623 = vshll.u32 %v1489, 16
      %v1625 = vrot.slane %v1623, 1
      %v1626 = vsel %vm565, %v1621, %v1625
      %v1628 = vshrl.u32 %v1426, 16
      %v1630 = vshll.u32 %v1426, 16
      %v1632 = vrot.slane %v1630, 1
      %v1633 = vor.u32 %v1628, %v1632
      %v1635 = vshll.u32 %v1490, 16
      %v1637 = vrot.slane %v1635, 1
      %v1638 = vsel %vm565, %v1633, %v1637
      %v1640 = vshrl.u32 %v1427, 16
      %v1642 = vshll.u32 %v1427, 16
      %v1644 = vrot.slane %v1642, 1
      %v1645 = vor.u32 %v1640, %v1644
      %v1647 = vshll.u32 %v1491, 16
      %v1649 = vrot.slane %v1647, 1
      %v1650 = vsel %vm565, %v1645, %v1649
      %v1652 = vshrl.u32 %v1428, 16
      %v1654 = vshll.u32 %v1428, 16
      %v1656 = vrot.slane %v1654, 1
      %v1657 = vor.u32 %v1652, %v1656
      %v1659 = vshll.u32 %v1492, 16
      %v1661 = vrot.slane %v1659, 1
      %v1662 = vsel %vm565, %v1657, %v1661
      %v1664 = vshrl.u32 %v1429, 16
      %v1666 = vshll.u32 %v1429, 16
      %v1668 = vrot.slane %v1666, 1
      %v1669 = vor.u32 %v1664, %v1668
      %v1671 = vshll.u32 %v1493, 16
      %v1673 = vrot.slane %v1671, 1
      %v1674 = vsel %vm565, %v1669, %v1673
      %v1676 = vshrl.u32 %v1430, 16
      %v1678 = vshll.u32 %v1430, 16
      %v1680 = vrot.slane %v1678, 1
      %v1681 = vor.u32 %v1676, %v1680
      %v1683 = vshll.u32 %v1494, 16
      %v1685 = vrot.slane %v1683, 1
      %v1686 = vsel %vm565, %v1681, %v1685
      %v1719 = vunpack.c.l.b16 %v405
      %v1720 = vunpack.c.l.b16 %v406
      %v1721 = vunpack.c.l.b16 %v407
      %v1722 = vunpack.c.l.b16 %v408
      %v1723 = vunpack.c.l.b16 %v409
      %v1724 = vunpack.c.l.b16 %v410
      %v1725 = vunpack.c.l.b16 %v411
      %v1726 = vunpack.c.l.b16 %v412
      %v1727 = vunpack.c.l.b16 %v413
      %v1728 = vunpack.c.l.b16 %v414
      %v1729 = vunpack.c.l.b16 %v415
      %v1730 = vunpack.c.l.b16 %v416
      %v1731 = vunpack.c.l.b16 %v417
      %v1732 = vunpack.c.l.b16 %v418
      %v1733 = vunpack.c.l.b16 %v419
      %v1734 = vunpack.c.l.b16 %v420
      %v1735 = vpack.c.b16 %v1384, %v1719
      %v1736 = vpack.c.b16 %v1386, %v1720
      %v1737 = vpack.c.b16 %v1388, %v1721
      %v1738 = vpack.c.b16 %v1390, %v1722
      %v1739 = vpack.c.b16 %v1392, %v1723
      %v1740 = vpack.c.b16 %v1394, %v1724
      %v1741 = vpack.c.b16 %v1396, %v1725
      %v1742 = vpack.c.b16 %v1398, %v1726
      %v1743 = vpack.c.b16 %v1400, %v1727
      %v1744 = vpack.c.b16 %v1402, %v1728
      %v1745 = vpack.c.b16 %v1404, %v1729
      %v1746 = vpack.c.b16 %v1406, %v1730
      %v1747 = vpack.c.b16 %v1408, %v1731
      %v1748 = vpack.c.b16 %v1410, %v1732
      %v1749 = vpack.c.b16 %v1412, %v1733
      %v1750 = vpack.c.b16 %v1414, %v1734
      %v1751 = vrot.slane %v1735, 1
      %v1752 = vrot.slane %v1479, 1
      %v1753 = vsel %vm822, %v1751, %v1752
      %v1754 = vrot.slane %v1736, 1
      %v1755 = vrot.slane %v1480, 1
      %v1756 = vsel %vm822, %v1754, %v1755
      %v1757 = vrot.slane %v1737, 1
      %v1758 = vrot.slane %v1481, 1
      %v1759 = vsel %vm822, %v1757, %v1758
      %v1760 = vrot.slane %v1738, 1
      %v1761 = vrot.slane %v1482, 1
      %v1762 = vsel %vm822, %v1760, %v1761
      %v1763 = vrot.slane %v1739, 1
      %v1764 = vrot.slane %v1483, 1
      %v1765 = vsel %vm822, %v1763, %v1764
      %v1766 = vrot.slane %v1740, 1
      %v1767 = vrot.slane %v1484, 1
      %v1768 = vsel %vm822, %v1766, %v1767
      %v1769 = vrot.slane %v1741, 1
      %v1770 = vrot.slane %v1485, 1
      %v1771 = vsel %vm822, %v1769, %v1770
      %v1772 = vrot.slane %v1742, 1
      %v1773 = vrot.slane %v1486, 1
      %v1774 = vsel %vm822, %v1772, %v1773
      %v1775 = vrot.slane %v1743, 1
      %v1776 = vrot.slane %v1487, 1
      %v1777 = vsel %vm822, %v1775, %v1776
      %v1778 = vrot.slane %v1744, 1
      %v1779 = vrot.slane %v1488, 1
      %v1780 = vsel %vm822, %v1778, %v1779
      %v1781 = vrot.slane %v1745, 1
      %v1782 = vrot.slane %v1489, 1
      %v1783 = vsel %vm822, %v1781, %v1782
      %v1784 = vrot.slane %v1746, 1
      %v1785 = vrot.slane %v1490, 1
      %v1786 = vsel %vm822, %v1784, %v1785
      %v1787 = vrot.slane %v1747, 1
      %v1788 = vrot.slane %v1491, 1
      %v1789 = vsel %vm822, %v1787, %v1788
      %v1790 = vrot.slane %v1748, 1
      %v1791 = vrot.slane %v1492, 1
      %v1792 = vsel %vm822, %v1790, %v1791
      %v1793 = vrot.slane %v1749, 1
      %v1794 = vrot.slane %v1493, 1
      %v1795 = vsel %vm822, %v1793, %v1794
      %v1796 = vrot.slane %v1750, 1
      %v1797 = vrot.slane %v1494, 1
      %v1798 = vsel %vm822, %v1796, %v1797
      %v1815 = vld [vmem:[%s1] sm:$0xf]
      %v1816 = vld [vmem:[%s1 + $0x4] sm:$0xf]
      %v1817 = vld [vmem:[%s1 + $0x8] sm:$0xf]
      %v1818 = vld [vmem:[%s1 + $0xc] sm:$0xf]
      %v1819 = vld [vmem:[%s1 + $0x10] sm:$0xf]
      %v1820 = vld [vmem:[%s1 + $0x14] sm:$0xf]
      %v1821 = vld [vmem:[%s1 + $0x18] sm:$0xf]
      %v1822 = vld [vmem:[%s1 + $0x1c] sm:$0xf]
      %v1823 = vld [vmem:[%s1 + $0x20] sm:$0xf]
      %v1824 = vld [vmem:[%s1 + $0x24] sm:$0xf]
      %v1825 = vld [vmem:[%s1 + $0x28] sm:$0xf]
      %v1826 = vld [vmem:[%s1 + $0x2c] sm:$0xf]
      %v1827 = vld [vmem:[%s1 + $0x30] sm:$0xf]
      %v1828 = vld [vmem:[%s1 + $0x34] sm:$0xf]
      %v1829 = vld [vmem:[%s1 + $0x38] sm:$0xf]
      %v1830 = vld [vmem:[%s1 + $0x3c] sm:$0xf]
      %v1831 = vld [vmem:[%s1 + $0x40] sm:$0xf]
      %v1832 = vld [vmem:[%s1 + $0x44] sm:$0xf]
      %v1833 = vld [vmem:[%s1 + $0x48] sm:$0xf]
      %v1834 = vld [vmem:[%s1 + $0x4c] sm:$0xf]
      %v1835 = vld [vmem:[%s1 + $0x50] sm:$0xf]
      %v1836 = vld [vmem:[%s1 + $0x54] sm:$0xf]
      %v1837 = vld [vmem:[%s1 + $0x58] sm:$0xf]
      %v1838 = vld [vmem:[%s1 + $0x5c] sm:$0xf]
      %v1839 = vld [vmem:[%s1 + $0x60] sm:$0xf]
      %v1840 = vld [vmem:[%s1 + $0x64] sm:$0xf]
      %v1841 = vld [vmem:[%s1 + $0x68] sm:$0xf]
      %v1842 = vld [vmem:[%s1 + $0x6c] sm:$0xf]
      %v1843 = vld [vmem:[%s1 + $0x70] sm:$0xf]
      %v1844 = vld [vmem:[%s1 + $0x74] sm:$0xf]
      %v1845 = vld [vmem:[%s1 + $0x78] sm:$0xf]
      %v1846 = vld [vmem:[%s1 + $0x7c] sm:$0xf]
      %v1847 = vld [vmem:[%s1 + $0x80] sm:$0xf]
      %v1848 = vld [vmem:[%s1 + $0x84] sm:$0xf]
      %v1849 = vld [vmem:[%s1 + $0x88] sm:$0xf]
      %v1850 = vld [vmem:[%s1 + $0x8c] sm:$0xf]
      %v1851 = vld [vmem:[%s1 + $0x90] sm:$0xf]
      %v1852 = vld [vmem:[%s1 + $0x94] sm:$0xf]
      %v1853 = vld [vmem:[%s1 + $0x98] sm:$0xf]
      %v1854 = vld [vmem:[%s1 + $0x9c] sm:$0xf]
      %v1855 = vld [vmem:[%s1 + $0xa0] sm:$0xf]
      %v1856 = vld [vmem:[%s1 + $0xa4] sm:$0xf]
      %v1857 = vld [vmem:[%s1 + $0xa8] sm:$0xf]
      %v1858 = vld [vmem:[%s1 + $0xac] sm:$0xf]
      %v1859 = vld [vmem:[%s1 + $0xb0] sm:$0xf]
      %v1860 = vld [vmem:[%s1 + $0xb4] sm:$0xf]
      %v1861 = vld [vmem:[%s1 + $0xb8] sm:$0xf]
      %v1862 = vld [vmem:[%s1 + $0xbc] sm:$0xf]
      %v1863 = vld [vmem:[%s1 + $0xc0] sm:$0xf]
      %v1864 = vld [vmem:[%s1 + $0xc4] sm:$0xf]
      %v1865 = vld [vmem:[%s1 + $0xc8] sm:$0xf]
      %v1866 = vld [vmem:[%s1 + $0xcc] sm:$0xf]
      %v1867 = vld [vmem:[%s1 + $0xd0] sm:$0xf]
      %v1868 = vld [vmem:[%s1 + $0xd4] sm:$0xf]
      %v1869 = vld [vmem:[%s1 + $0xd8] sm:$0xf]
      %v1870 = vld [vmem:[%s1 + $0xdc] sm:$0xf]
      %v1871 = vld [vmem:[%s1 + $0xe0] sm:$0xf]
      %v1872 = vld [vmem:[%s1 + $0xe4] sm:$0xf]
      %v1873 = vld [vmem:[%s1 + $0xe8] sm:$0xf]
      %v1874 = vld [vmem:[%s1 + $0xec] sm:$0xf]
      %v1875 = vld [vmem:[%s1 + $0xf0] sm:$0xf]
      %v1876 = vld [vmem:[%s1 + $0xf4] sm:$0xf]
      %v1877 = vld [vmem:[%s1 + $0xf8] sm:$0xf]
      %v1878 = vld [vmem:[%s1 + $0xfc] sm:$0xf]
      %v1879 = vld [vmem:[%s1 + $0x100] sm:$0xf]
      %v1880 = vld [vmem:[%s1 + $0x104] sm:$0xf]
      %v1881 = vld [vmem:[%s1 + $0x108] sm:$0xf]
      %v1882 = vld [vmem:[%s1 + $0x10c] sm:$0xf]
      %v1883 = vld [vmem:[%s1 + $0x110] sm:$0xf]
      %v1884 = vld [vmem:[%s1 + $0x114] sm:$0xf]
      %v1885 = vld [vmem:[%s1 + $0x118] sm:$0xf]
      %v1886 = vld [vmem:[%s1 + $0x11c] sm:$0xf]
      %v1887 = vld [vmem:[%s1 + $0x120] sm:$0xf]
      %v1888 = vld [vmem:[%s1 + $0x124] sm:$0xf]
      %v1889 = vld [vmem:[%s1 + $0x128] sm:$0xf]
      %v1890 = vld [vmem:[%s1 + $0x12c] sm:$0xf]
      %v1891 = vld [vmem:[%s1 + $0x130] sm:$0xf]
      %v1892 = vld [vmem:[%s1 + $0x134] sm:$0xf]
      %v1893 = vld [vmem:[%s1 + $0x138] sm:$0xf]
      %v1894 = vld [vmem:[%s1 + $0x13c] sm:$0xf]
      %v1895 = vld [vmem:[%s1 + $0x140] sm:$0xf]
      %v1896 = vld [vmem:[%s1 + $0x144] sm:$0xf]
      %v1897 = vld [vmem:[%s1 + $0x148] sm:$0xf]
      %v1898 = vld [vmem:[%s1 + $0x14c] sm:$0xf]
      %v1899 = vld [vmem:[%s1 + $0x150] sm:$0xf]
      %v1900 = vld [vmem:[%s1 + $0x154] sm:$0xf]
      %v1901 = vld [vmem:[%s1 + $0x158] sm:$0xf]
      %v1902 = vld [vmem:[%s1 + $0x15c] sm:$0xf]
      %v1903 = vld [vmem:[%s1 + $0x160] sm:$0xf]
      %v1904 = vld [vmem:[%s1 + $0x164] sm:$0xf]
      %v1905 = vld [vmem:[%s1 + $0x168] sm:$0xf]
      %v1906 = vld [vmem:[%s1 + $0x16c] sm:$0xf]
      %v1907 = vld [vmem:[%s1 + $0x170] sm:$0xf]
      %v1908 = vld [vmem:[%s1 + $0x174] sm:$0xf]
      %v1909 = vld [vmem:[%s1 + $0x178] sm:$0xf]
      %v1910 = vld [vmem:[%s1 + $0x17c] sm:$0xf]
      %v1911 = vld [vmem:[%s1 + $0x180] sm:$0xf]
      %v1912 = vld [vmem:[%s1 + $0x184] sm:$0xf]
      %v1913 = vld [vmem:[%s1 + $0x188] sm:$0xf]
      %v1914 = vld [vmem:[%s1 + $0x18c] sm:$0xf]
      %v1915 = vld [vmem:[%s1 + $0x190] sm:$0xf]
      %v1916 = vld [vmem:[%s1 + $0x194] sm:$0xf]
      %v1917 = vld [vmem:[%s1 + $0x198] sm:$0xf]
      %v1918 = vld [vmem:[%s1 + $0x19c] sm:$0xf]
      %v1919 = vld [vmem:[%s1 + $0x1a0] sm:$0xf]
      %v1920 = vld [vmem:[%s1 + $0x1a4] sm:$0xf]
      %v1921 = vld [vmem:[%s1 + $0x1a8] sm:$0xf]
      %v1922 = vld [vmem:[%s1 + $0x1ac] sm:$0xf]
      %v1923 = vld [vmem:[%s1 + $0x1b0] sm:$0xf]
      %v1924 = vld [vmem:[%s1 + $0x1b4] sm:$0xf]
      %v1925 = vld [vmem:[%s1 + $0x1b8] sm:$0xf]
      %v1926 = vld [vmem:[%s1 + $0x1bc] sm:$0xf]
      %v1927 = vld [vmem:[%s1 + $0x1c0] sm:$0xf]
      %v1928 = vld [vmem:[%s1 + $0x1c4] sm:$0xf]
      %v1929 = vld [vmem:[%s1 + $0x1c8] sm:$0xf]
      %v1930 = vld [vmem:[%s1 + $0x1cc] sm:$0xf]
      %v1931 = vld [vmem:[%s1 + $0x1d0] sm:$0xf]
      %v1932 = vld [vmem:[%s1 + $0x1d4] sm:$0xf]
      %v1933 = vld [vmem:[%s1 + $0x1d8] sm:$0xf]
      %v1934 = vld [vmem:[%s1 + $0x1dc] sm:$0xf]
      %v1935 = vld [vmem:[%s1 + $0x1e0] sm:$0xf]
      %v1936 = vld [vmem:[%s1 + $0x1e4] sm:$0xf]
      %v1937 = vld [vmem:[%s1 + $0x1e8] sm:$0xf]
      %v1938 = vld [vmem:[%s1 + $0x1ec] sm:$0xf]
      %v1939 = vld [vmem:[%s1 + $0x1f0] sm:$0xf]
      %v1940 = vld [vmem:[%s1 + $0x1f4] sm:$0xf]
      %v1941 = vld [vmem:[%s1 + $0x1f8] sm:$0xf]
      %v1942 = vld [vmem:[%s1 + $0x1fc] sm:$0xf]
      %v1943 = vld [vmem:[%s1 + $0x200] sm:$0xf]
      %v1944 = vld [vmem:[%s1 + $0x204] sm:$0xf]
      %v1945 = vld [vmem:[%s1 + $0x208] sm:$0xf]
      %v1946 = vld [vmem:[%s1 + $0x20c] sm:$0xf]
      %v1947 = vld [vmem:[%s1 + $0x210] sm:$0xf]
      %v1948 = vld [vmem:[%s1 + $0x214] sm:$0xf]
      %v1949 = vld [vmem:[%s1 + $0x218] sm:$0xf]
      %v1950 = vld [vmem:[%s1 + $0x21c] sm:$0xf]
      %v1951 = vld [vmem:[%s1 + $0x220] sm:$0xf]
      %v1952 = vld [vmem:[%s1 + $0x224] sm:$0xf]
      %v1953 = vld [vmem:[%s1 + $0x228] sm:$0xf]
      %v1954 = vld [vmem:[%s1 + $0x22c] sm:$0xf]
      %v1955 = vld [vmem:[%s1 + $0x230] sm:$0xf]
      %v1956 = vld [vmem:[%s1 + $0x234] sm:$0xf]
      %v1957 = vld [vmem:[%s1 + $0x238] sm:$0xf]
      %v1958 = vld [vmem:[%s1 + $0x23c] sm:$0xf]
      %v2103 = vunpack.c.l.b16 %v1815
      %v2104 = vunpack.c.l.b16 %v1816
      %v2105 = vunpack.c.l.b16 %v1817
      %v2106 = vunpack.c.l.b16 %v1818
      %v2107 = vunpack.c.l.b16 %v1819
      %v2108 = vunpack.c.l.b16 %v1820
      %v2109 = vunpack.c.l.b16 %v1821
      %v2110 = vunpack.c.l.b16 %v1822
      %v2111 = vunpack.c.l.b16 %v1823
      %v2112 = vunpack.c.l.b16 %v1824
      %v2113 = vunpack.c.l.b16 %v1825
      %v2114 = vunpack.c.l.b16 %v1826
      %v2115 = vunpack.c.l.b16 %v1827
      %v2116 = vunpack.c.l.b16 %v1828
      %v2117 = vunpack.c.l.b16 %v1829
      %v2118 = vunpack.c.l.b16 %v1830
      %v2119 = vunpack.c.l.b16 %v1831
      %v2120 = vunpack.c.l.b16 %v1832
      %v2121 = vunpack.c.l.b16 %v1833
      %v2122 = vunpack.c.l.b16 %v1834
      %v2123 = vunpack.c.l.b16 %v1835
      %v2124 = vunpack.c.l.b16 %v1836
      %v2125 = vunpack.c.l.b16 %v1837
      %v2126 = vunpack.c.l.b16 %v1838
      %v2127 = vunpack.c.l.b16 %v1839
      %v2128 = vunpack.c.l.b16 %v1840
      %v2129 = vunpack.c.l.b16 %v1841
      %v2130 = vunpack.c.l.b16 %v1842
      %v2131 = vunpack.c.l.b16 %v1843
      %v2132 = vunpack.c.l.b16 %v1844
      %v2133 = vunpack.c.l.b16 %v1845
      %v2134 = vunpack.c.l.b16 %v1846
      %v2135 = vunpack.c.l.b16 %v1847
      %v2136 = vunpack.c.l.b16 %v1848
      %v2137 = vunpack.c.l.b16 %v1849
      %v2138 = vunpack.c.l.b16 %v1850
      %v2139 = vunpack.c.l.b16 %v1851
      %v2140 = vunpack.c.l.b16 %v1852
      %v2141 = vunpack.c.l.b16 %v1853
      %v2142 = vunpack.c.l.b16 %v1854
      %v2143 = vunpack.c.l.b16 %v1855
      %v2144 = vunpack.c.l.b16 %v1856
      %v2145 = vunpack.c.l.b16 %v1857
      %v2146 = vunpack.c.l.b16 %v1858
      %v2147 = vunpack.c.l.b16 %v1859
      %v2148 = vunpack.c.l.b16 %v1860
      %v2149 = vunpack.c.l.b16 %v1861
      %v2150 = vunpack.c.l.b16 %v1862
      %v2151 = vunpack.c.l.b16 %v1863
      %v2152 = vunpack.c.l.b16 %v1864
      %v2153 = vunpack.c.l.b16 %v1865
      %v2154 = vunpack.c.l.b16 %v1866
      %v2155 = vunpack.c.l.b16 %v1867
      %v2156 = vunpack.c.l.b16 %v1868
      %v2157 = vunpack.c.l.b16 %v1869
      %v2158 = vunpack.c.l.b16 %v1870
      %v2159 = vunpack.c.l.b16 %v1871
      %v2160 = vunpack.c.l.b16 %v1872
      %v2161 = vunpack.c.l.b16 %v1873
      %v2162 = vunpack.c.l.b16 %v1874
      %v2163 = vunpack.c.l.b16 %v1875
      %v2164 = vunpack.c.l.b16 %v1876
      %v2165 = vunpack.c.l.b16 %v1877
      %v2166 = vunpack.c.l.b16 %v1878
      %v2167 = vunpack.c.l.b16 %v1879
      %v2168 = vunpack.c.l.b16 %v1880
      %v2169 = vunpack.c.l.b16 %v1881
      %v2170 = vunpack.c.l.b16 %v1882
      %v2171 = vunpack.c.l.b16 %v1883
      %v2172 = vunpack.c.l.b16 %v1884
      %v2173 = vunpack.c.l.b16 %v1885
      %v2174 = vunpack.c.l.b16 %v1886
      %v2175 = vunpack.c.l.b16 %v1887
      %v2176 = vunpack.c.l.b16 %v1888
      %v2177 = vunpack.c.l.b16 %v1889
      %v2178 = vunpack.c.l.b16 %v1890
      %v2179 = vunpack.c.l.b16 %v1891
      %v2180 = vunpack.c.l.b16 %v1892
      %v2181 = vunpack.c.l.b16 %v1893
      %v2182 = vunpack.c.l.b16 %v1894
      %v2183 = vunpack.c.l.b16 %v1895
      %v2184 = vunpack.c.l.b16 %v1896
      %v2185 = vunpack.c.l.b16 %v1897
      %v2186 = vunpack.c.l.b16 %v1898
      %v2187 = vunpack.c.l.b16 %v1899
      %v2188 = vunpack.c.l.b16 %v1900
      %v2189 = vunpack.c.l.b16 %v1901
      %v2190 = vunpack.c.l.b16 %v1902
      %v2191 = vunpack.c.l.b16 %v1903
      %v2192 = vunpack.c.l.b16 %v1904
      %v2193 = vunpack.c.l.b16 %v1905
      %v2194 = vunpack.c.l.b16 %v1906
      %v2195 = vunpack.c.l.b16 %v1907
      %v2196 = vunpack.c.l.b16 %v1908
      %v2197 = vunpack.c.l.b16 %v1909
      %v2198 = vunpack.c.l.b16 %v1910
      %v2199 = vunpack.c.l.b16 %v1911
      %v2200 = vunpack.c.l.b16 %v1912
      %v2201 = vunpack.c.l.b16 %v1913
      %v2202 = vunpack.c.l.b16 %v1914
      %v2203 = vunpack.c.l.b16 %v1915
      %v2204 = vunpack.c.l.b16 %v1916
      %v2205 = vunpack.c.l.b16 %v1917
      %v2206 = vunpack.c.l.b16 %v1918
      %v2207 = vunpack.c.l.b16 %v1919
      %v2208 = vunpack.c.l.b16 %v1920
      %v2209 = vunpack.c.l.b16 %v1921
      %v2210 = vunpack.c.l.b16 %v1922
      %v2211 = vunpack.c.l.b16 %v1923
      %v2212 = vunpack.c.l.b16 %v1924
      %v2213 = vunpack.c.l.b16 %v1925
      %v2214 = vunpack.c.l.b16 %v1926
      %v2215 = vunpack.c.l.b16 %v1927
      %v2216 = vunpack.c.l.b16 %v1928
      %v2217 = vunpack.c.l.b16 %v1929
      %v2218 = vunpack.c.l.b16 %v1930
      %v2219 = vunpack.c.l.b16 %v1931
      %v2220 = vunpack.c.l.b16 %v1932
      %v2221 = vunpack.c.l.b16 %v1933
      %v2222 = vunpack.c.l.b16 %v1934
      %v2223 = vunpack.c.l.b16 %v1935
      %v2224 = vunpack.c.l.b16 %v1936
      %v2225 = vunpack.c.l.b16 %v1937
      %v2226 = vunpack.c.l.b16 %v1938
      %v2227 = vunpack.c.l.b16 %v1939
      %v2228 = vunpack.c.l.b16 %v1940
      %v2229 = vunpack.c.l.b16 %v1941
      %v2230 = vunpack.c.l.b16 %v1942
      %v2231 = vunpack.c.l.b16 %v1943
      %v2232 = vunpack.c.l.b16 %v1944
      %v2233 = vunpack.c.l.b16 %v1945
      %v2234 = vunpack.c.l.b16 %v1946
      %v2235 = vunpack.c.l.b16 %v1947
      %v2236 = vunpack.c.l.b16 %v1948
      %v2237 = vunpack.c.l.b16 %v1949
      %v2238 = vunpack.c.l.b16 %v1950
      %v2239 = vunpack.c.l.b16 %v1951
      %v2240 = vunpack.c.l.b16 %v1952
      %v2241 = vunpack.c.l.b16 %v1953
      %v2242 = vunpack.c.l.b16 %v1954
      %v2243 = vunpack.c.l.b16 %v1955
      %v2244 = vunpack.c.l.b16 %v1956
      %v2245 = vunpack.c.l.b16 %v1957
      %v2246 = vunpack.c.l.b16 %v1958
      %v2247 = vpack.c.b16 %v2104, %v2103
      %v2248 = vpack.c.b16 %v2106, %v2105
      %v2249 = vpack.c.b16 %v2108, %v2107
      %v2250 = vpack.c.b16 %v2110, %v2109
      %v2251 = vpack.c.b16 %v2112, %v2111
      %v2252 = vpack.c.b16 %v2114, %v2113
      %v2253 = vpack.c.b16 %v2116, %v2115
      %v2254 = vpack.c.b16 %v2118, %v2117
      %v2255 = vpack.c.b16 %v2120, %v2119
      %v2256 = vpack.c.b16 %v2122, %v2121
      %v2257 = vpack.c.b16 %v2124, %v2123
      %v2258 = vpack.c.b16 %v2126, %v2125
      %v2259 = vpack.c.b16 %v2128, %v2127
      %v2260 = vpack.c.b16 %v2130, %v2129
      %v2261 = vpack.c.b16 %v2132, %v2131
      %v2262 = vpack.c.b16 %v2134, %v2133
      %v2263 = vpack.c.b16 %v2136, %v2135
      %v2264 = vpack.c.b16 %v2138, %v2137
      %v2265 = vpack.c.b16 %v2140, %v2139
      %v2266 = vpack.c.b16 %v2142, %v2141
      %v2267 = vpack.c.b16 %v2144, %v2143
      %v2268 = vpack.c.b16 %v2146, %v2145
      %v2269 = vpack.c.b16 %v2148, %v2147
      %v2270 = vpack.c.b16 %v2150, %v2149
      %v2271 = vpack.c.b16 %v2152, %v2151
      %v2272 = vpack.c.b16 %v2154, %v2153
      %v2273 = vpack.c.b16 %v2156, %v2155
      %v2274 = vpack.c.b16 %v2158, %v2157
      %v2275 = vpack.c.b16 %v2160, %v2159
      %v2276 = vpack.c.b16 %v2162, %v2161
      %v2277 = vpack.c.b16 %v2164, %v2163
      %v2278 = vpack.c.b16 %v2166, %v2165
      %v2279 = vpack.c.b16 %v2168, %v2167
      %v2280 = vpack.c.b16 %v2170, %v2169
      %v2281 = vpack.c.b16 %v2172, %v2171
      %v2282 = vpack.c.b16 %v2174, %v2173
      %v2283 = vpack.c.b16 %v2176, %v2175
      %v2284 = vpack.c.b16 %v2178, %v2177
      %v2285 = vpack.c.b16 %v2180, %v2179
      %v2286 = vpack.c.b16 %v2182, %v2181
      %v2287 = vpack.c.b16 %v2184, %v2183
      %v2288 = vpack.c.b16 %v2186, %v2185
      %v2289 = vpack.c.b16 %v2188, %v2187
      %v2290 = vpack.c.b16 %v2190, %v2189
      %v2291 = vpack.c.b16 %v2192, %v2191
      %v2292 = vpack.c.b16 %v2194, %v2193
      %v2293 = vpack.c.b16 %v2196, %v2195
      %v2294 = vpack.c.b16 %v2198, %v2197
      %v2295 = vpack.c.b16 %v2200, %v2199
      %v2296 = vpack.c.b16 %v2202, %v2201
      %v2297 = vpack.c.b16 %v2204, %v2203
      %v2298 = vpack.c.b16 %v2206, %v2205
      %v2299 = vpack.c.b16 %v2208, %v2207
      %v2300 = vpack.c.b16 %v2210, %v2209
      %v2301 = vpack.c.b16 %v2212, %v2211
      %v2302 = vpack.c.b16 %v2214, %v2213
      %v2303 = vpack.c.b16 %v2216, %v2215
      %v2304 = vpack.c.b16 %v2218, %v2217
      %v2305 = vpack.c.b16 %v2220, %v2219
      %v2306 = vpack.c.b16 %v2222, %v2221
      %v2307 = vpack.c.b16 %v2224, %v2223
      %v2308 = vpack.c.b16 %v2226, %v2225
      %v2309 = vpack.c.b16 %v2228, %v2227
      %v2310 = vpack.c.b16 %v2230, %v2229
      %v2311 = vpack.c.b16 %v2232, %v2231
      %v2312 = vpack.c.b16 %v2234, %v2233
      %v2313 = vpack.c.b16 %v2236, %v2235
      %v2314 = vpack.c.b16 %v2238, %v2237
      %v2315 = vpack.c.b16 %v2240, %v2239
      %v2316 = vpack.c.b16 %v2242, %v2241
      %v2317 = vpack.c.b16 %v2244, %v2243
      %v2318 = vpack.c.b16 %v2246, %v2245
      %2391 = vmatprep.subr.bf16.mxu0 0
      %2392 = vmatpush1.bf16.msra.mxu0 %v2254
      %2393 = vmatprep.subr.bf16.mxu0 0
      %2394 = vmatpush1.bf16.msra.mxu0 %v2253
      %2395 = vmatprep.subr.bf16.mxu0 0
      %2396 = vmatpush1.bf16.msra.mxu0 %v2252
      %2397 = vmatprep.subr.bf16.mxu0 0
      %2398 = vmatpush1.bf16.msra.mxu0 %v2251
      %2399 = vmatprep.subr.bf16.mxu0 0
      %2400 = vmatpush1.bf16.msra.mxu0 %v2250
      %2401 = vmatprep.subr.bf16.mxu0 0
      %2402 = vmatpush1.bf16.msra.mxu0 %v2249
      %2403 = vmatprep.subr.bf16.mxu0 0
      %2404 = vmatpush1.bf16.msra.mxu0 %v2248
      %2405 = vmatprep.subr.bf16.mxu0 0
      %2406 = vmatpush1.bf16.msra.mxu0 %v2247
      %2407 = vmatprep.subr.bf16.mxu0 0
      %2408 = vmatpush2.bf16.msra.mxu0 %v2262
      %2409 = vmatprep.subr.bf16.mxu0 0
      %2410 = vmatpush2.bf16.msra.mxu0 %v2261
      %2411 = vmatprep.subr.bf16.mxu0 0
      %2412 = vmatpush2.bf16.msra.mxu0 %v2260
      %2413 = vmatprep.subr.bf16.mxu0 0
      %2414 = vmatpush2.bf16.msra.mxu0 %v2259
      %2415 = vmatprep.subr.bf16.mxu0 0
      %2416 = vmatpush2.bf16.msra.mxu0 %v2258
      %2417 = vmatprep.subr.bf16.mxu0 0
      %2418 = vmatpush2.bf16.msra.mxu0 %v2257
      %2419 = vmatprep.subr.bf16.mxu0 0
      %2420 = vmatpush2.bf16.msra.mxu0 %v2256
      %2421 = vmatprep.subr.bf16.mxu0 0
      %2422 = vmatpush2.bf16.msra.mxu0 %v2255
      %2423 = vmatprep.mubr.bf16.mxu0 %v577
      %2424 = vmatmul.mubr.bf16.gmra.mxu0 %v485
      %v2425 = vpop.f32.mrf.mxu0
      %v2426 = vadd.f32 0.0, %v2425
      %v2427 = vpop.f32.mrf.mxu0
      %v2428 = vpop.f32.mrf.mxu0
      %v2429 = vadd.f32 0.0, %v2428
      %v2430 = vpop.f32.mrf.mxu0
      %2431 = vmatprep.mubr.bf16.mxu0 %v589
      %2432 = vmatmul.mubr.bf16.gmra.mxu0 %v486
      %v2433 = vpop.f32.mrf.mxu0
      %v2434 = vadd.f32 0.0, %v2433
      %v2435 = vpop.f32.mrf.mxu0
      %v2436 = vpop.f32.mrf.mxu0
      %v2437 = vadd.f32 0.0, %v2436
      %v2438 = vpop.f32.mrf.mxu0
      %2439 = vmatprep.mubr.bf16.mxu0 %v601
      %2440 = vmatmul.mubr.bf16.gmra.mxu0 %v487
      %v2441 = vpop.f32.mrf.mxu0
      %v2442 = vadd.f32 0.0, %v2441
      %v2443 = vpop.f32.mrf.mxu0
      %v2444 = vpop.f32.mrf.mxu0
      %v2445 = vadd.f32 0.0, %v2444
      %v2446 = vpop.f32.mrf.mxu0
      %2447 = vmatprep.mubr.bf16.mxu0 %v613
      %2448 = vmatmul.mubr.bf16.gmra.mxu0 %v488
      %v2449 = vpop.f32.mrf.mxu0
      %v2450 = vadd.f32 0.0, %v2449
      %v2451 = vpop.f32.mrf.mxu0
      %v2452 = vpop.f32.mrf.mxu0
      %v2453 = vadd.f32 0.0, %v2452
      %v2454 = vpop.f32.mrf.mxu0
      %2455 = vmatprep.mubr.bf16.mxu0 %v625
      %2456 = vmatmul.mubr.bf16.gmra.mxu0 %v489
      %v2457 = vpop.f32.mrf.mxu0
      %v2458 = vadd.f32 0.0, %v2457
      %v2459 = vpop.f32.mrf.mxu0
      %v2460 = vpop.f32.mrf.mxu0
      %v2461 = vadd.f32 0.0, %v2460
      %v2462 = vpop.f32.mrf.mxu0
      %2463 = vmatprep.mubr.bf16.mxu0 %v637
      %2464 = vmatmul.mubr.bf16.gmra.mxu0 %v490
      %v2465 = vpop.f32.mrf.mxu0
      %v2466 = vadd.f32 0.0, %v2465
      %v2467 = vpop.f32.mrf.mxu0
      %v2468 = vpop.f32.mrf.mxu0
      %v2469 = vadd.f32 0.0, %v2468
      %v2470 = vpop.f32.mrf.mxu0
      %2471 = vmatprep.mubr.bf16.mxu0 %v649
      %2472 = vmatmul.mubr.bf16.gmra.mxu0 %v491
      %v2473 = vpop.f32.mrf.mxu0
      %v2474 = vadd.f32 0.0, %v2473
      %v2475 = vpop.f32.mrf.mxu0
      %v2476 = vpop.f32.mrf.mxu0
      %v2477 = vadd.f32 0.0, %v2476
      %v2478 = vpop.f32.mrf.mxu0
      %2479 = vmatprep.mubr.bf16.mxu0 %v661
      %2480 = vmatmul.mubr.bf16.gmra.mxu0 %v492
      %v2481 = vpop.f32.mrf.mxu0
      %v2482 = vadd.f32 0.0, %v2481
      %v2483 = vpop.f32.mrf.mxu0
      %v2484 = vpop.f32.mrf.mxu0
      %v2485 = vadd.f32 0.0, %v2484
      %v2486 = vpop.f32.mrf.mxu0
      %2487 = vmatprep.mubr.bf16.mxu0 %v673
      %2488 = vmatmul.mubr.bf16.gmra.mxu0 %v493
      %v2489 = vpop.f32.mrf.mxu0
      %v2490 = vadd.f32 0.0, %v2489
      %v2491 = vpop.f32.mrf.mxu0
      %v2492 = vpop.f32.mrf.mxu0
      %v2493 = vadd.f32 0.0, %v2492
      %v2494 = vpop.f32.mrf.mxu0
      %2495 = vmatprep.mubr.bf16.mxu0 %v685
      %2496 = vmatmul.mubr.bf16.gmra.mxu0 %v494
      %v2497 = vpop.f32.mrf.mxu0
      %v2498 = vadd.f32 0.0, %v2497
      %v2499 = vpop.f32.mrf.mxu0
      %v2500 = vpop.f32.mrf.mxu0
      %v2501 = vadd.f32 0.0, %v2500
      %v2502 = vpop.f32.mrf.mxu0
      %2503 = vmatprep.mubr.bf16.mxu0 %v697
      %2504 = vmatmul.mubr.bf16.gmra.mxu0 %v495
      %v2505 = vpop.f32.mrf.mxu0
      %v2506 = vadd.f32 0.0, %v2505
      %v2507 = vpop.f32.mrf.mxu0
      %v2508 = vpop.f32.mrf.mxu0
      %v2509 = vadd.f32 0.0, %v2508
      %v2510 = vpop.f32.mrf.mxu0
      %2511 = vmatprep.mubr.bf16.mxu0 %v709
      %2512 = vmatmul.mubr.bf16.gmra.mxu0 %v496
      %v2513 = vpop.f32.mrf.mxu0
      %v2514 = vadd.f32 0.0, %v2513
      %v2515 = vpop.f32.mrf.mxu0
      %v2516 = vpop.f32.mrf.mxu0
      %v2517 = vadd.f32 0.0, %v2516
      %v2518 = vpop.f32.mrf.mxu0
      %2519 = vmatprep.mubr.bf16.mxu0 %v721
      %2520 = vmatmul.mubr.bf16.gmra.mxu0 %v497
      %v2521 = vpop.f32.mrf.mxu0
      %v2522 = vadd.f32 0.0, %v2521
      %v2523 = vpop.f32.mrf.mxu0
      %v2524 = vpop.f32.mrf.mxu0
      %v2525 = vadd.f32 0.0, %v2524
      %v2526 = vpop.f32.mrf.mxu0
      %2527 = vmatprep.mubr.bf16.mxu0 %v733
      %2528 = vmatmul.mubr.bf16.gmra.mxu0 %v498
      %v2529 = vpop.f32.mrf.mxu0
      %v2530 = vadd.f32 0.0, %v2529
      %v2531 = vpop.f32.mrf.mxu0
      %v2532 = vpop.f32.mrf.mxu0
      %v2533 = vadd.f32 0.0, %v2532
      %v2534 = vpop.f32.mrf.mxu0
      %2535 = vmatprep.mubr.bf16.mxu0 %v745
      %2536 = vmatmul.mubr.bf16.gmra.mxu0 %v499
      %v2537 = vpop.f32.mrf.mxu0
      %v2538 = vadd.f32 0.0, %v2537
      %v2539 = vpop.f32.mrf.mxu0
      %v2540 = vpop.f32.mrf.mxu0
      %v2541 = vadd.f32 0.0, %v2540
      %v2542 = vpop.f32.mrf.mxu0
      %2543 = vmatprep.mubr.bf16.mxu0 %v757
      %2544 = vmatmul.mubr.bf16.gmra.mxu0 %v500
      %v2545 = vpop.f32.mrf.mxu0
      %v2546 = vadd.f32 0.0, %v2545
      %v2547 = vpop.f32.mrf.mxu0
      %v2548 = vpop.f32.mrf.mxu0
      %v2549 = vadd.f32 0.0, %v2548
      %v2550 = vpop.f32.mrf.mxu0
      %2551 = vdwg.mxu0
      %2552 = vmatprep.subr.bf16.mxu0 0
      %2553 = vmatpush1.bf16.msra.mxu0 %v2270
      %2554 = vmatprep.subr.bf16.mxu0 0
      %2555 = vmatpush1.bf16.msra.mxu0 %v2269
      %2556 = vmatprep.subr.bf16.mxu0 0
      %2557 = vmatpush1.bf16.msra.mxu0 %v2268
      %2558 = vmatprep.subr.bf16.mxu0 0
      %2559 = vmatpush1.bf16.msra.mxu0 %v2267
      %2560 = vmatprep.subr.bf16.mxu0 0
      %2561 = vmatpush1.bf16.msra.mxu0 %v2266
      %2562 = vmatprep.subr.bf16.mxu0 0
      %2563 = vmatpush1.bf16.msra.mxu0 %v2265
      %2564 = vmatprep.subr.bf16.mxu0 0
      %2565 = vmatpush1.bf16.msra.mxu0 %v2264
      %2566 = vmatprep.subr.bf16.mxu0 0
      %2567 = vmatpush1.bf16.msra.mxu0 %v2263
      %2568 = vmatprep.subr.bf16.mxu0 0
      %2569 = vmatpush2.bf16.msra.mxu0 %v2278
      %2570 = vmatprep.subr.bf16.mxu0 0
      %2571 = vmatpush2.bf16.msra.mxu0 %v2277
      %2572 = vmatprep.subr.bf16.mxu0 0
      %2573 = vmatpush2.bf16.msra.mxu0 %v2276
      %2574 = vmatprep.subr.bf16.mxu0 0
      %2575 = vmatpush2.bf16.msra.mxu0 %v2275
      %2576 = vmatprep.subr.bf16.mxu0 0
      %2577 = vmatpush2.bf16.msra.mxu0 %v2274
      %2578 = vmatprep.subr.bf16.mxu0 0
      %2579 = vmatpush2.bf16.msra.mxu0 %v2273
      %2580 = vmatprep.subr.bf16.mxu0 0
      %2581 = vmatpush2.bf16.msra.mxu0 %v2272
      %2582 = vmatprep.subr.bf16.mxu0 0
      %2583 = vmatpush2.bf16.msra.mxu0 %v2271
      %2584 = vmatprep.mubr.bf16.mxu0 %v951
      %2585 = vmatmul.mubr.bf16.gmra.mxu0 %v825
      %v2586 = vpop.f32.mrf.mxu0
      %v2587 = vadd.f32 %v2426, %v2586
      %v2588 = vpop.f32.mrf.mxu0
      %v2589 = vpop.f32.mrf.mxu0
      %v2590 = vadd.f32 %v2429, %v2589
      %v2591 = vpop.f32.mrf.mxu0
      %2592 = vmatprep.mubr.bf16.mxu0 %v952
      %2593 = vmatmul.mubr.bf16.gmra.mxu0 %v828
      %v2594 = vpop.f32.mrf.mxu0
      %v2595 = vadd.f32 %v2434, %v2594
      %v2596 = vpop.f32.mrf.mxu0
      %v2597 = vpop.f32.mrf.mxu0
      %v2598 = vadd.f32 %v2437, %v2597
      %v2599 = vpop.f32.mrf.mxu0
      %2600 = vmatprep.mubr.bf16.mxu0 %v953
      %2601 = vmatmul.mubr.bf16.gmra.mxu0 %v831
      %v2602 = vpop.f32.mrf.mxu0
      %v2603 = vadd.f32 %v2442, %v2602
      %v2604 = vpop.f32.mrf.mxu0
      %v2605 = vpop.f32.mrf.mxu0
      %v2606 = vadd.f32 %v2445, %v2605
      %v2607 = vpop.f32.mrf.mxu0
      %2608 = vmatprep.mubr.bf16.mxu0 %v954
      %2609 = vmatmul.mubr.bf16.gmra.mxu0 %v834
      %v2610 = vpop.f32.mrf.mxu0
      %v2611 = vadd.f32 %v2450, %v2610
      %v2612 = vpop.f32.mrf.mxu0
      %v2613 = vpop.f32.mrf.mxu0
      %v2614 = vadd.f32 %v2453, %v2613
      %v2615 = vpop.f32.mrf.mxu0
      %2616 = vmatprep.mubr.bf16.mxu0 %v955
      %2617 = vmatmul.mubr.bf16.gmra.mxu0 %v837
      %v2618 = vpop.f32.mrf.mxu0
      %v2619 = vadd.f32 %v2458, %v2618
      %v2620 = vpop.f32.mrf.mxu0
      %v2621 = vpop.f32.mrf.mxu0
      %v2622 = vadd.f32 %v2461, %v2621
      %v2623 = vpop.f32.mrf.mxu0
      %2624 = vmatprep.mubr.bf16.mxu0 %v956
      %2625 = vmatmul.mubr.bf16.gmra.mxu0 %v840
      %v2626 = vpop.f32.mrf.mxu0
      %v2627 = vadd.f32 %v2466, %v2626
      %v2628 = vpop.f32.mrf.mxu0
      %v2629 = vpop.f32.mrf.mxu0
      %v2630 = vadd.f32 %v2469, %v2629
      %v2631 = vpop.f32.mrf.mxu0
      %2632 = vmatprep.mubr.bf16.mxu0 %v957
      %2633 = vmatmul.mubr.bf16.gmra.mxu0 %v843
      %v2634 = vpop.f32.mrf.mxu0
      %v2635 = vadd.f32 %v2474, %v2634
      %v2636 = vpop.f32.mrf.mxu0
      %v2637 = vpop.f32.mrf.mxu0
      %v2638 = vadd.f32 %v2477, %v2637
      %v2639 = vpop.f32.mrf.mxu0
      %2640 = vmatprep.mubr.bf16.mxu0 %v958
      %2641 = vmatmul.mubr.bf16.gmra.mxu0 %v846
      %v2642 = vpop.f32.mrf.mxu0
      %v2643 = vadd.f32 %v2482, %v2642
      %v2644 = vpop.f32.mrf.mxu0
      %v2645 = vpop.f32.mrf.mxu0
      %v2646 = vadd.f32 %v2485, %v2645
      %v2647 = vpop.f32.mrf.mxu0
      %2648 = vmatprep.mubr.bf16.mxu0 %v959
      %2649 = vmatmul.mubr.bf16.gmra.mxu0 %v849
      %v2650 = vpop.f32.mrf.mxu0
      %v2651 = vadd.f32 %v2490, %v2650
      %v2652 = vpop.f32.mrf.mxu0
      %v2653 = vpop.f32.mrf.mxu0
      %v2654 = vadd.f32 %v2493, %v2653
      %v2655 = vpop.f32.mrf.mxu0
      %2656 = vmatprep.mubr.bf16.mxu0 %v960
      %2657 = vmatmul.mubr.bf16.gmra.mxu0 %v852
      %v2658 = vpop.f32.mrf.mxu0
      %v2659 = vadd.f32 %v2498, %v2658
      %v2660 = vpop.f32.mrf.mxu0
      %v2661 = vpop.f32.mrf.mxu0
      %v2662 = vadd.f32 %v2501, %v2661
      %v2663 = vpop.f32.mrf.mxu0
      %2664 = vmatprep.mubr.bf16.mxu0 %v961
      %2665 = vmatmul.mubr.bf16.gmra.mxu0 %v855
      %v2666 = vpop.f32.mrf.mxu0
      %v2667 = vadd.f32 %v2506, %v2666
      %v2668 = vpop.f32.mrf.mxu0
      %v2669 = vpop.f32.mrf.mxu0
      %v2670 = vadd.f32 %v2509, %v2669
      %v2671 = vpop.f32.mrf.mxu0
      %2672 = vmatprep.mubr.bf16.mxu0 %v962
      %2673 = vmatmul.mubr.bf16.gmra.mxu0 %v858
      %v2674 = vpop.f32.mrf.mxu0
      %v2675 = vadd.f32 %v2514, %v2674
      %v2676 = vpop.f32.mrf.mxu0
      %v2677 = vpop.f32.mrf.mxu0
      %v2678 = vadd.f32 %v2517, %v2677
      %v2679 = vpop.f32.mrf.mxu0
      %2680 = vmatprep.mubr.bf16.mxu0 %v963
      %2681 = vmatmul.mubr.bf16.gmra.mxu0 %v861
      %v2682 = vpop.f32.mrf.mxu0
      %v2683 = vadd.f32 %v2522, %v2682
      %v2684 = vpop.f32.mrf.mxu0
      %v2685 = vpop.f32.mrf.mxu0
      %v2686 = vadd.f32 %v2525, %v2685
      %v2687 = vpop.f32.mrf.mxu0
      %2688 = vmatprep.mubr.bf16.mxu0 %v964
      %2689 = vmatmul.mubr.bf16.gmra.mxu0 %v864
      %v2690 = vpop.f32.mrf.mxu0
      %v2691 = vadd.f32 %v2530, %v2690
      %v2692 = vpop.f32.mrf.mxu0
      %v2693 = vpop.f32.mrf.mxu0
      %v2694 = vadd.f32 %v2533, %v2693
      %v2695 = vpop.f32.mrf.mxu0
      %2696 = vmatprep.mubr.bf16.mxu0 %v965
      %2697 = vmatmul.mubr.bf16.gmra.mxu0 %v867
      %v2698 = vpop.f32.mrf.mxu0
      %v2699 = vadd.f32 %v2538, %v2698
      %v2700 = vpop.f32.mrf.mxu0
      %v2701 = vpop.f32.mrf.mxu0
      %v2702 = vadd.f32 %v2541, %v2701
      %v2703 = vpop.f32.mrf.mxu0
      %2704 = vmatprep.mubr.bf16.mxu0 %v966
      %2705 = vmatmul.mubr.bf16.gmra.mxu0 %v870
      %v2706 = vpop.f32.mrf.mxu0
      %v2707 = vadd.f32 %v2546, %v2706
      %v2708 = vpop.f32.mrf.mxu0
      %v2709 = vpop.f32.mrf.mxu0
      %v2710 = vadd.f32 %v2549, %v2709
      %v2711 = vpop.f32.mrf.mxu0
      %2712 = vdwg.mxu0
      %2713 = vmatprep.subr.bf16.mxu0 0
      %2714 = vmatpush1.bf16.msra.mxu0 %v2286
      %2715 = vmatprep.subr.bf16.mxu0 0
      %2716 = vmatpush1.bf16.msra.mxu0 %v2285
      %2717 = vmatprep.subr.bf16.mxu0 0
      %2718 = vmatpush1.bf16.msra.mxu0 %v2284
      %2719 = vmatprep.subr.bf16.mxu0 0
      %2720 = vmatpush1.bf16.msra.mxu0 %v2283
      %2721 = vmatprep.subr.bf16.mxu0 0
      %2722 = vmatpush1.bf16.msra.mxu0 %v2282
      %2723 = vmatprep.subr.bf16.mxu0 0
      %2724 = vmatpush1.bf16.msra.mxu0 %v2281
      %2725 = vmatprep.subr.bf16.mxu0 0
      %2726 = vmatpush1.bf16.msra.mxu0 %v2280
      %2727 = vmatprep.subr.bf16.mxu0 0
      %2728 = vmatpush1.bf16.msra.mxu0 %v2279
      %2729 = vmatprep.subr.bf16.mxu0 0
      %2730 = vmatpush2.bf16.msra.mxu0 %v2294
      %2731 = vmatprep.subr.bf16.mxu0 0
      %2732 = vmatpush2.bf16.msra.mxu0 %v2293
      %2733 = vmatprep.subr.bf16.mxu0 0
      %2734 = vmatpush2.bf16.msra.mxu0 %v2292
      %2735 = vmatprep.subr.bf16.mxu0 0
      %2736 = vmatpush2.bf16.msra.mxu0 %v2291
      %2737 = vmatprep.subr.bf16.mxu0 0
      %2738 = vmatpush2.bf16.msra.mxu0 %v2290
      %2739 = vmatprep.subr.bf16.mxu0 0
      %2740 = vmatpush2.bf16.msra.mxu0 %v2289
      %2741 = vmatprep.subr.bf16.mxu0 0
      %2742 = vmatpush2.bf16.msra.mxu0 %v2288
      %2743 = vmatprep.subr.bf16.mxu0 0
      %2744 = vmatpush2.bf16.msra.mxu0 %v2287
      %2745 = vmatprep.mubr.bf16.mxu0 %v1289
      %2746 = vmatmul.mubr.bf16.gmra.mxu0 %v1042
      %v2747 = vpop.f32.mrf.mxu0
      %v2748 = vadd.f32 %v2587, %v2747
      %v2749 = vpop.f32.mrf.mxu0
      %v2750 = vpop.f32.mrf.mxu0
      %v2751 = vadd.f32 %v2590, %v2750
      %v2752 = vpop.f32.mrf.mxu0
      %2753 = vmatprep.mubr.bf16.mxu0 %v1292
      %2754 = vmatmul.mubr.bf16.gmra.mxu0 %v1054
      %v2755 = vpop.f32.mrf.mxu0
      %v2756 = vadd.f32 %v2595, %v2755
      %v2757 = vpop.f32.mrf.mxu0
      %v2758 = vpop.f32.mrf.mxu0
      %v2759 = vadd.f32 %v2598, %v2758
      %v2760 = vpop.f32.mrf.mxu0
      %2761 = vmatprep.mubr.bf16.mxu0 %v1295
      %2762 = vmatmul.mubr.bf16.gmra.mxu0 %v1066
      %v2763 = vpop.f32.mrf.mxu0
      %v2764 = vadd.f32 %v2603, %v2763
      %v2765 = vpop.f32.mrf.mxu0
      %v2766 = vpop.f32.mrf.mxu0
      %v2767 = vadd.f32 %v2606, %v2766
      %v2768 = vpop.f32.mrf.mxu0
      %2769 = vmatprep.mubr.bf16.mxu0 %v1298
      %2770 = vmatmul.mubr.bf16.gmra.mxu0 %v1078
      %v2771 = vpop.f32.mrf.mxu0
      %v2772 = vadd.f32 %v2611, %v2771
      %v2773 = vpop.f32.mrf.mxu0
      %v2774 = vpop.f32.mrf.mxu0
      %v2775 = vadd.f32 %v2614, %v2774
      %v2776 = vpop.f32.mrf.mxu0
      %2777 = vmatprep.mubr.bf16.mxu0 %v1301
      %2778 = vmatmul.mubr.bf16.gmra.mxu0 %v1090
      %v2779 = vpop.f32.mrf.mxu0
      %v2780 = vadd.f32 %v2619, %v2779
      %v2781 = vpop.f32.mrf.mxu0
      %v2782 = vpop.f32.mrf.mxu0
      %v2783 = vadd.f32 %v2622, %v2782
      %v2784 = vpop.f32.mrf.mxu0
      %2785 = vmatprep.mubr.bf16.mxu0 %v1304
      %2786 = vmatmul.mubr.bf16.gmra.mxu0 %v1102
      %v2787 = vpop.f32.mrf.mxu0
      %v2788 = vadd.f32 %v2627, %v2787
      %v2789 = vpop.f32.mrf.mxu0
      %v2790 = vpop.f32.mrf.mxu0
      %v2791 = vadd.f32 %v2630, %v2790
      %v2792 = vpop.f32.mrf.mxu0
      %2793 = vmatprep.mubr.bf16.mxu0 %v1307
      %2794 = vmatmul.mubr.bf16.gmra.mxu0 %v1114
      %v2795 = vpop.f32.mrf.mxu0
      %v2796 = vadd.f32 %v2635, %v2795
      %v2797 = vpop.f32.mrf.mxu0
      %v2798 = vpop.f32.mrf.mxu0
      %v2799 = vadd.f32 %v2638, %v2798
      %v2800 = vpop.f32.mrf.mxu0
      %2801 = vmatprep.mubr.bf16.mxu0 %v1310
      %2802 = vmatmul.mubr.bf16.gmra.mxu0 %v1126
      %v2803 = vpop.f32.mrf.mxu0
      %v2804 = vadd.f32 %v2643, %v2803
      %v2805 = vpop.f32.mrf.mxu0
      %v2806 = vpop.f32.mrf.mxu0
      %v2807 = vadd.f32 %v2646, %v2806
      %v2808 = vpop.f32.mrf.mxu0
      %2809 = vmatprep.mubr.bf16.mxu0 %v1313
      %2810 = vmatmul.mubr.bf16.gmra.mxu0 %v1138
      %v2811 = vpop.f32.mrf.mxu0
      %v2812 = vadd.f32 %v2651, %v2811
      %v2813 = vpop.f32.mrf.mxu0
      %v2814 = vpop.f32.mrf.mxu0
      %v2815 = vadd.f32 %v2654, %v2814
      %v2816 = vpop.f32.mrf.mxu0
      %2817 = vmatprep.mubr.bf16.mxu0 %v1316
      %2818 = vmatmul.mubr.bf16.gmra.mxu0 %v1150
      %v2819 = vpop.f32.mrf.mxu0
      %v2820 = vadd.f32 %v2659, %v2819
      %v2821 = vpop.f32.mrf.mxu0
      %v2822 = vpop.f32.mrf.mxu0
      %v2823 = vadd.f32 %v2662, %v2822
      %v2824 = vpop.f32.mrf.mxu0
      %2825 = vmatprep.mubr.bf16.mxu0 %v1319
      %2826 = vmatmul.mubr.bf16.gmra.mxu0 %v1162
      %v2827 = vpop.f32.mrf.mxu0
      %v2828 = vadd.f32 %v2667, %v2827
      %v2829 = vpop.f32.mrf.mxu0
      %v2830 = vpop.f32.mrf.mxu0
      %v2831 = vadd.f32 %v2670, %v2830
      %v2832 = vpop.f32.mrf.mxu0
      %2833 = vmatprep.mubr.bf16.mxu0 %v1322
      %2834 = vmatmul.mubr.bf16.gmra.mxu0 %v1174
      %v2835 = vpop.f32.mrf.mxu0
      %v2836 = vadd.f32 %v2675, %v2835
      %v2837 = vpop.f32.mrf.mxu0
      %v2838 = vpop.f32.mrf.mxu0
      %v2839 = vadd.f32 %v2678, %v2838
      %v2840 = vpop.f32.mrf.mxu0
      %2841 = vmatprep.mubr.bf16.mxu0 %v1325
      %2842 = vmatmul.mubr.bf16.gmra.mxu0 %v1186
      %v2843 = vpop.f32.mrf.mxu0
      %v2844 = vadd.f32 %v2683, %v2843
      %v2845 = vpop.f32.mrf.mxu0
      %v2846 = vpop.f32.mrf.mxu0
      %v2847 = vadd.f32 %v2686, %v2846
      %v2848 = vpop.f32.mrf.mxu0
      %2849 = vmatprep.mubr.bf16.mxu0 %v1328
      %2850 = vmatmul.mubr.bf16.gmra.mxu0 %v1198
      %v2851 = vpop.f32.mrf.mxu0
      %v2852 = vadd.f32 %v2691, %v2851
      %v2853 = vpop.f32.mrf.mxu0
      %v2854 = vpop.f32.mrf.mxu0
      %v2855 = vadd.f32 %v2694, %v2854
      %v2856 = vpop.f32.mrf.mxu0
      %2857 = vmatprep.mubr.bf16.mxu0 %v1331
      %2858 = vmatmul.mubr.bf16.gmra.mxu0 %v1210
      %v2859 = vpop.f32.mrf.mxu0
      %v2860 = vadd.f32 %v2699, %v2859
      %v2861 = vpop.f32.mrf.mxu0
      %v2862 = vpop.f32.mrf.mxu0
      %v2863 = vadd.f32 %v2702, %v2862
      %v2864 = vpop.f32.mrf.mxu0
      %2865 = vmatprep.mubr.bf16.mxu0 %v1334
      %2866 = vmatmul.mubr.bf16.gmra.mxu0 %v1222
      %v2867 = vpop.f32.mrf.mxu0
      %v2868 = vadd.f32 %v2707, %v2867
      %v2869 = vpop.f32.mrf.mxu0
      %v2870 = vpop.f32.mrf.mxu0
      %v2871 = vadd.f32 %v2710, %v2870
      %v2872 = vpop.f32.mrf.mxu0
      %2873 = vdwg.mxu0
      %2874 = vmatprep.subr.bf16.mxu0 0
      %2875 = vmatpush1.bf16.msra.mxu0 %v2302
      %2876 = vmatprep.subr.bf16.mxu0 0
      %2877 = vmatpush1.bf16.msra.mxu0 %v2301
      %2878 = vmatprep.subr.bf16.mxu0 0
      %2879 = vmatpush1.bf16.msra.mxu0 %v2300
      %2880 = vmatprep.subr.bf16.mxu0 0
      %2881 = vmatpush1.bf16.msra.mxu0 %v2299
      %2882 = vmatprep.subr.bf16.mxu0 0
      %2883 = vmatpush1.bf16.msra.mxu0 %v2298
      %2884 = vmatprep.subr.bf16.mxu0 0
      %2885 = vmatpush1.bf16.msra.mxu0 %v2297
      %2886 = vmatprep.subr.bf16.mxu0 0
      %2887 = vmatpush1.bf16.msra.mxu0 %v2296
      %2888 = vmatprep.subr.bf16.mxu0 0
      %2889 = vmatpush1.bf16.msra.mxu0 %v2295
      %2890 = vmatprep.subr.bf16.mxu0 0
      %2891 = vmatpush2.bf16.msra.mxu0 %v2310
      %2892 = vmatprep.subr.bf16.mxu0 0
      %2893 = vmatpush2.bf16.msra.mxu0 %v2309
      %2894 = vmatprep.subr.bf16.mxu0 0
      %2895 = vmatpush2.bf16.msra.mxu0 %v2308
      %2896 = vmatprep.subr.bf16.mxu0 0
      %2897 = vmatpush2.bf16.msra.mxu0 %v2307
      %2898 = vmatprep.subr.bf16.mxu0 0
      %2899 = vmatpush2.bf16.msra.mxu0 %v2306
      %2900 = vmatprep.subr.bf16.mxu0 0
      %2901 = vmatpush2.bf16.msra.mxu0 %v2305
      %2902 = vmatprep.subr.bf16.mxu0 0
      %2903 = vmatpush2.bf16.msra.mxu0 %v2304
      %2904 = vmatprep.subr.bf16.mxu0 0
      %2905 = vmatpush2.bf16.msra.mxu0 %v2303
      %2906 = vmatprep.mubr.bf16.mxu0 %v1506
      %2907 = vmatmul.mubr.bf16.gmra.mxu0 %v1415
      %v2908 = vpop.f32.mrf.mxu0
      %v2909 = vadd.f32 %v2748, %v2908
      %v2910 = vpop.f32.mrf.mxu0
      %v2911 = vpop.f32.mrf.mxu0
      %v2912 = vadd.f32 %v2751, %v2911
      %v2913 = vpop.f32.mrf.mxu0
      %2914 = vmatprep.mubr.bf16.mxu0 %v1518
      %2915 = vmatmul.mubr.bf16.gmra.mxu0 %v1416
      %v2916 = vpop.f32.mrf.mxu0
      %v2917 = vadd.f32 %v2756, %v2916
      %v2918 = vpop.f32.mrf.mxu0
      %v2919 = vpop.f32.mrf.mxu0
      %v2920 = vadd.f32 %v2759, %v2919
      %v2921 = vpop.f32.mrf.mxu0
      %2922 = vmatprep.mubr.bf16.mxu0 %v1530
      %2923 = vmatmul.mubr.bf16.gmra.mxu0 %v1417
      %v2924 = vpop.f32.mrf.mxu0
      %v2925 = vadd.f32 %v2764, %v2924
      %v2926 = vpop.f32.mrf.mxu0
      %v2927 = vpop.f32.mrf.mxu0
      %v2928 = vadd.f32 %v2767, %v2927
      %v2929 = vpop.f32.mrf.mxu0
      %2930 = vmatprep.mubr.bf16.mxu0 %v1542
      %2931 = vmatmul.mubr.bf16.gmra.mxu0 %v1418
      %v2932 = vpop.f32.mrf.mxu0
      %v2933 = vadd.f32 %v2772, %v2932
      %v2934 = vpop.f32.mrf.mxu0
      %v2935 = vpop.f32.mrf.mxu0
      %v2936 = vadd.f32 %v2775, %v2935
      %v2937 = vpop.f32.mrf.mxu0
      %2938 = vmatprep.mubr.bf16.mxu0 %v1554
      %2939 = vmatmul.mubr.bf16.gmra.mxu0 %v1419
      %v2940 = vpop.f32.mrf.mxu0
      %v2941 = vadd.f32 %v2780, %v2940
      %v2942 = vpop.f32.mrf.mxu0
      %v2943 = vpop.f32.mrf.mxu0
      %v2944 = vadd.f32 %v2783, %v2943
      %v2945 = vpop.f32.mrf.mxu0
      %2946 = vmatprep.mubr.bf16.mxu0 %v1566
      %2947 = vmatmul.mubr.bf16.gmra.mxu0 %v1420
      %v2948 = vpop.f32.mrf.mxu0
      %v2949 = vadd.f32 %v2788, %v2948
      %v2950 = vpop.f32.mrf.mxu0
      %v2951 = vpop.f32.mrf.mxu0
      %v2952 = vadd.f32 %v2791, %v2951
      %v2953 = vpop.f32.mrf.mxu0
      %2954 = vmatprep.mubr.bf16.mxu0 %v1578
      %2955 = vmatmul.mubr.bf16.gmra.mxu0 %v1421
      %v2956 = vpop.f32.mrf.mxu0
      %v2957 = vadd.f32 %v2796, %v2956
      %v2958 = vpop.f32.mrf.mxu0
      %v2959 = vpop.f32.mrf.mxu0
      %v2960 = vadd.f32 %v2799, %v2959
      %v2961 = vpop.f32.mrf.mxu0
      %2962 = vmatprep.mubr.bf16.mxu0 %v1590
      %2963 = vmatmul.mubr.bf16.gmra.mxu0 %v1422
      %v2964 = vpop.f32.mrf.mxu0
      %v2965 = vadd.f32 %v2804, %v2964
      %v2966 = vpop.f32.mrf.mxu0
      %v2967 = vpop.f32.mrf.mxu0
      %v2968 = vadd.f32 %v2807, %v2967
      %v2969 = vpop.f32.mrf.mxu0
      %2970 = vmatprep.mubr.bf16.mxu0 %v1602
      %2971 = vmatmul.mubr.bf16.gmra.mxu0 %v1423
      %v2972 = vpop.f32.mrf.mxu0
      %v2973 = vadd.f32 %v2812, %v2972
      %v2974 = vpop.f32.mrf.mxu0
      %v2975 = vpop.f32.mrf.mxu0
      %v2976 = vadd.f32 %v2815, %v2975
      %v2977 = vpop.f32.mrf.mxu0
      %2978 = vmatprep.mubr.bf16.mxu0 %v1614
      %2979 = vmatmul.mubr.bf16.gmra.mxu0 %v1424
      %v2980 = vpop.f32.mrf.mxu0
      %v2981 = vadd.f32 %v2820, %v2980
      %v2982 = vpop.f32.mrf.mxu0
      %v2983 = vpop.f32.mrf.mxu0
      %v2984 = vadd.f32 %v2823, %v2983
      %v2985 = vpop.f32.mrf.mxu0
      %2986 = vmatprep.mubr.bf16.mxu0 %v1626
      %2987 = vmatmul.mubr.bf16.gmra.mxu0 %v1425
      %v2988 = vpop.f32.mrf.mxu0
      %v2989 = vadd.f32 %v2828, %v2988
      %v2990 = vpop.f32.mrf.mxu0
      %v2991 = vpop.f32.mrf.mxu0
      %v2992 = vadd.f32 %v2831, %v2991
      %v2993 = vpop.f32.mrf.mxu0
      %2994 = vmatprep.mubr.bf16.mxu0 %v1638
      %2995 = vmatmul.mubr.bf16.gmra.mxu0 %v1426
      %v2996 = vpop.f32.mrf.mxu0
      %v2997 = vadd.f32 %v2836, %v2996
      %v2998 = vpop.f32.mrf.mxu0
      %v2999 = vpop.f32.mrf.mxu0
      %v3000 = vadd.f32 %v2839, %v2999
      %v3001 = vpop.f32.mrf.mxu0
      %3002 = vmatprep.mubr.bf16.mxu0 %v1650
      %3003 = vmatmul.mubr.bf16.gmra.mxu0 %v1427
      %v3004 = vpop.f32.mrf.mxu0
      %v3005 = vadd.f32 %v2844, %v3004
      %v3006 = vpop.f32.mrf.mxu0
      %v3007 = vpop.f32.mrf.mxu0
      %v3008 = vadd.f32 %v2847, %v3007
      %v3009 = vpop.f32.mrf.mxu0
      %3010 = vmatprep.mubr.bf16.mxu0 %v1662
      %3011 = vmatmul.mubr.bf16.gmra.mxu0 %v1428
      %v3012 = vpop.f32.mrf.mxu0
      %v3013 = vadd.f32 %v2852, %v3012
      %v3014 = vpop.f32.mrf.mxu0
      %v3015 = vpop.f32.mrf.mxu0
      %v3016 = vadd.f32 %v2855, %v3015
      %v3017 = vpop.f32.mrf.mxu0
      %3018 = vmatprep.mubr.bf16.mxu0 %v1674
      %3019 = vmatmul.mubr.bf16.gmra.mxu0 %v1429
      %v3020 = vpop.f32.mrf.mxu0
      %v3021 = vadd.f32 %v2860, %v3020
      %v3022 = vpop.f32.mrf.mxu0
      %v3023 = vpop.f32.mrf.mxu0
      %v3024 = vadd.f32 %v2863, %v3023
      %v3025 = vpop.f32.mrf.mxu0
      %3026 = vmatprep.mubr.bf16.mxu0 %v1686
      %3027 = vmatmul.mubr.bf16.gmra.mxu0 %v1430
      %v3028 = vpop.f32.mrf.mxu0
      %v3029 = vadd.f32 %v2868, %v3028
      %v3030 = vpop.f32.mrf.mxu0
      %v3031 = vpop.f32.mrf.mxu0
      %v3032 = vadd.f32 %v2871, %v3031
      %v3033 = vpop.f32.mrf.mxu0
      %3034 = vdwg.mxu0
      %3035 = vmatprep.subr.bf16.mxu0 0
      %3036 = vmatpush1.bf16.msra.mxu0 %v2318
      %3037 = vmatprep.subr.bf16.mxu0 0
      %3038 = vmatpush1.bf16.msra.mxu0 %v2317
      %3039 = vmatprep.subr.bf16.mxu0 0
      %3040 = vmatpush1.bf16.msra.mxu0 %v2316
      %3041 = vmatprep.subr.bf16.mxu0 0
      %3042 = vmatpush1.bf16.msra.mxu0 %v2315
      %3043 = vmatprep.subr.bf16.mxu0 0
      %3044 = vmatpush1.bf16.msra.mxu0 %v2314
      %3045 = vmatprep.subr.bf16.mxu0 0
      %3046 = vmatpush1.bf16.msra.mxu0 %v2313
      %3047 = vmatprep.subr.bf16.mxu0 0
      %3048 = vmatpush1.bf16.msra.mxu0 %v2312
      %3049 = vmatprep.subr.bf16.mxu0 0
      %3050 = vmatpush1.bf16.msra.mxu0 %v2311
      %3051 = vmatprep.subr.bf16.mxu0 0
      %3052 = vmatpush2.bf16.msra.mxu0 0
      %3053 = vmatprep.subr.bf16.mxu0 0
      %3054 = vmatpush2.bf16.msra.mxu0 0
      %3055 = vmatprep.subr.bf16.mxu0 0
      %3056 = vmatpush2.bf16.msra.mxu0 0
      %3057 = vmatprep.subr.bf16.mxu0 0
      %3058 = vmatpush2.bf16.msra.mxu0 0
      %3059 = vmatprep.subr.bf16.mxu0 0
      %3060 = vmatpush2.bf16.msra.mxu0 0
      %3061 = vmatprep.subr.bf16.mxu0 0
      %3062 = vmatpush2.bf16.msra.mxu0 0
      %3063 = vmatprep.subr.bf16.mxu0 0
      %3064 = vmatpush2.bf16.msra.mxu0 0
      %3065 = vmatprep.subr.bf16.mxu0 0
      %3066 = vmatpush2.bf16.msra.mxu0 0
      %3067 = vmatprep.mubr.bf16.mxu0 0
      %3068 = vmatmul.mubr.bf16.gmra.mxu0 %v1753
      %v3069 = vpop.f32.mrf.mxu0
      %v3070 = vadd.f32 %v2909, %v3069
      %v3071 = vpop.f32.mrf.mxu0
      %v3072 = vpop.f32.mrf.mxu0
      %v3073 = vadd.f32 %v2912, %v3072
      %v3074 = vpop.f32.mrf.mxu0
      %3075 = vmatprep.mubr.bf16.mxu0 0
      %3076 = vmatmul.mubr.bf16.gmra.mxu0 %v1756
      %v3077 = vpop.f32.mrf.mxu0
      %v3078 = vadd.f32 %v2917, %v3077
      %v3079 = vpop.f32.mrf.mxu0
      %v3080 = vpop.f32.mrf.mxu0
      %v3081 = vadd.f32 %v2920, %v3080
      %v3082 = vpop.f32.mrf.mxu0
      %3083 = vmatprep.mubr.bf16.mxu0 0
      %3084 = vmatmul.mubr.bf16.gmra.mxu0 %v1759
      %v3085 = vpop.f32.mrf.mxu0
      %v3086 = vadd.f32 %v2925, %v3085
      %v3087 = vpop.f32.mrf.mxu0
      %v3088 = vpop.f32.mrf.mxu0
      %v3089 = vadd.f32 %v2928, %v3088
      %v3090 = vpop.f32.mrf.mxu0
      %3091 = vmatprep.mubr.bf16.mxu0 0
      %3092 = vmatmul.mubr.bf16.gmra.mxu0 %v1762
      %v3093 = vpop.f32.mrf.mxu0
      %v3094 = vadd.f32 %v2933, %v3093
      %v3095 = vpop.f32.mrf.mxu0
      %v3096 = vpop.f32.mrf.mxu0
      %v3097 = vadd.f32 %v2936, %v3096
      %v3098 = vpop.f32.mrf.mxu0
      %3099 = vmatprep.mubr.bf16.mxu0 0
      %3100 = vmatmul.mubr.bf16.gmra.mxu0 %v1765
      %v3101 = vpop.f32.mrf.mxu0
      %v3102 = vadd.f32 %v2941, %v3101
      %v3103 = vpop.f32.mrf.mxu0
      %v3104 = vpop.f32.mrf.mxu0
      %v3105 = vadd.f32 %v2944, %v3104
      %v3106 = vpop.f32.mrf.mxu0
      %3107 = vmatprep.mubr.bf16.mxu0 0
      %3108 = vmatmul.mubr.bf16.gmra.mxu0 %v1768
      %v3109 = vpop.f32.mrf.mxu0
      %v3110 = vadd.f32 %v2949, %v3109
      %v3111 = vpop.f32.mrf.mxu0
      %v3112 = vpop.f32.mrf.mxu0
      %v3113 = vadd.f32 %v2952, %v3112
      %v3114 = vpop.f32.mrf.mxu0
      %3115 = vmatprep.mubr.bf16.mxu0 0
      %3116 = vmatmul.mubr.bf16.gmra.mxu0 %v1771
      %v3117 = vpop.f32.mrf.mxu0
      %v3118 = vadd.f32 %v2957, %v3117
      %v3119 = vpop.f32.mrf.mxu0
      %v3120 = vpop.f32.mrf.mxu0
      %v3121 = vadd.f32 %v2960, %v3120
      %v3122 = vpop.f32.mrf.mxu0
      %3123 = vmatprep.mubr.bf16.mxu0 0
      %3124 = vmatmul.mubr.bf16.gmra.mxu0 %v1774
      %v3125 = vpop.f32.mrf.mxu0
      %v3126 = vadd.f32 %v2965, %v3125
      %v3127 = vpop.f32.mrf.mxu0
      %v3128 = vpop.f32.mrf.mxu0
      %v3129 = vadd.f32 %v2968, %v3128
      %v3130 = vpop.f32.mrf.mxu0
      %3131 = vmatprep.mubr.bf16.mxu0 0
      %3132 = vmatmul.mubr.bf16.gmra.mxu0 %v1777
      %v3133 = vpop.f32.mrf.mxu0
      %v3134 = vadd.f32 %v2973, %v3133
      %v3135 = vpop.f32.mrf.mxu0
      %v3136 = vpop.f32.mrf.mxu0
      %v3137 = vadd.f32 %v2976, %v3136
      %v3138 = vpop.f32.mrf.mxu0
      %3139 = vmatprep.mubr.bf16.mxu0 0
      %3140 = vmatmul.mubr.bf16.gmra.mxu0 %v1780
      %v3141 = vpop.f32.mrf.mxu0
      %v3142 = vadd.f32 %v2981, %v3141
      %v3143 = vpop.f32.mrf.mxu0
      %v3144 = vpop.f32.mrf.mxu0
      %v3145 = vadd.f32 %v2984, %v3144
      %v3146 = vpop.f32.mrf.mxu0
      %3147 = vmatprep.mubr.bf16.mxu0 0
      %3148 = vmatmul.mubr.bf16.gmra.mxu0 %v1783
      %v3149 = vpop.f32.mrf.mxu0
      %v3150 = vadd.f32 %v2989, %v3149
      %v3151 = vpop.f32.mrf.mxu0
      %v3152 = vpop.f32.mrf.mxu0
      %v3153 = vadd.f32 %v2992, %v3152
      %v3154 = vpop.f32.mrf.mxu0
      %3155 = vmatprep.mubr.bf16.mxu0 0
      %3156 = vmatmul.mubr.bf16.gmra.mxu0 %v1786
      %v3157 = vpop.f32.mrf.mxu0
      %v3158 = vadd.f32 %v2997, %v3157
      %v3159 = vpop.f32.mrf.mxu0
      %v3160 = vpop.f32.mrf.mxu0
      %v3161 = vadd.f32 %v3000, %v3160
      %v3162 = vpop.f32.mrf.mxu0
      %3163 = vmatprep.mubr.bf16.mxu0 0
      %3164 = vmatmul.mubr.bf16.gmra.mxu0 %v1789
      %v3165 = vpop.f32.mrf.mxu0
      %v3166 = vadd.f32 %v3005, %v3165
      %v3167 = vpop.f32.mrf.mxu0
      %v3168 = vpop.f32.mrf.mxu0
      %v3169 = vadd.f32 %v3008, %v3168
      %v3170 = vpop.f32.mrf.mxu0
      %3171 = vmatprep.mubr.bf16.mxu0 0
      %3172 = vmatmul.mubr.bf16.gmra.mxu0 %v1792
      %v3173 = vpop.f32.mrf.mxu0
      %v3174 = vadd.f32 %v3013, %v3173
      %v3175 = vpop.f32.mrf.mxu0
      %v3176 = vpop.f32.mrf.mxu0
      %v3177 = vadd.f32 %v3016, %v3176
      %v3178 = vpop.f32.mrf.mxu0
      %3179 = vmatprep.mubr.bf16.mxu0 0
      %3180 = vmatmul.mubr.bf16.gmra.mxu0 %v1795
      %v3181 = vpop.f32.mrf.mxu0
      %v3182 = vadd.f32 %v3021, %v3181
      %v3183 = vpop.f32.mrf.mxu0
      %v3184 = vpop.f32.mrf.mxu0
      %v3185 = vadd.f32 %v3024, %v3184
      %v3186 = vpop.f32.mrf.mxu0
      %3187 = vmatprep.mubr.bf16.mxu0 0
      %3188 = vmatmul.mubr.bf16.gmra.mxu0 %v1798
      %v3189 = vpop.f32.mrf.mxu0
      %v3190 = vadd.f32 %v3029, %v3189
      %v3191 = vpop.f32.mrf.mxu0
      %v3192 = vpop.f32.mrf.mxu0
      %v3193 = vadd.f32 %v3032, %v3192
      %v3194 = vpop.f32.mrf.mxu0
      %3195 = vdwg.mxu0
      %v3196 = vld [vmem:[%s2] sm:$0x1]
      %v3198 = vlaneseq
      %v3199 = vshrl.u32 %v3198, 7
      %v3200 = vsub.s32 0, %v3199
      %v3201 = vrot.slane %v3196, %v3200
      %v3203 = vmul.f32 %v3070, %v3201
      %v3204 = vmul.f32 %v3073, %v3201
      %v3205 = vmul.f32 %v3078, %v3201
      %v3206 = vmul.f32 %v3081, %v3201
      %v3207 = vmul.f32 %v3086, %v3201
      %v3208 = vmul.f32 %v3089, %v3201
      %v3209 = vmul.f32 %v3094, %v3201
      %v3210 = vmul.f32 %v3097, %v3201
      %v3211 = vmul.f32 %v3102, %v3201
      %v3212 = vmul.f32 %v3105, %v3201
      %v3213 = vmul.f32 %v3110, %v3201
      %v3214 = vmul.f32 %v3113, %v3201
      %v3215 = vmul.f32 %v3118, %v3201
      %v3216 = vmul.f32 %v3121, %v3201
      %v3217 = vmul.f32 %v3126, %v3201
      %v3218 = vmul.f32 %v3129, %v3201
      %v3219 = vmul.f32 %v3134, %v3201
      %v3220 = vmul.f32 %v3137, %v3201
      %v3221 = vmul.f32 %v3142, %v3201
      %v3222 = vmul.f32 %v3145, %v3201
      %v3223 = vmul.f32 %v3150, %v3201
      %v3224 = vmul.f32 %v3153, %v3201
      %v3225 = vmul.f32 %v3158, %v3201
      %v3226 = vmul.f32 %v3161, %v3201
      %v3227 = vmul.f32 %v3166, %v3201
      %v3228 = vmul.f32 %v3169, %v3201
      %v3229 = vmul.f32 %v3174, %v3201
      %v3230 = vmul.f32 %v3177, %v3201
      %v3231 = vmul.f32 %v3182, %v3201
      %v3232 = vmul.f32 %v3185, %v3201
      %v3233 = vmul.f32 %v3190, %v3201
      %v3234 = vmul.f32 %v3193, %v3201
      %v3235 = vld [vmem:[%s3] sm:$0x1]
      %v3237 = vlaneseq
      %v3238 = vshrl.u32 %v3237, 7
      %v3239 = vsub.s32 0, %v3238
      %v3240 = vrot.slane %v3235, %v3239
      %v3242 = vadd.f32 %v3203, %v3240
      %v3243 = vadd.f32 %v3204, %v3240
      %v3244 = vadd.f32 %v3205, %v3240
      %v3245 = vadd.f32 %v3206, %v3240
      %v3246 = vadd.f32 %v3207, %v3240
      %v3247 = vadd.f32 %v3208, %v3240
      %v3248 = vadd.f32 %v3209, %v3240
      %v3249 = vadd.f32 %v3210, %v3240
      %v3250 = vadd.f32 %v3211, %v3240
      %v3251 = vadd.f32 %v3212, %v3240
      %v3252 = vadd.f32 %v3213, %v3240
      %v3253 = vadd.f32 %v3214, %v3240
      %v3254 = vadd.f32 %v3215, %v3240
      %v3255 = vadd.f32 %v3216, %v3240
      %v3256 = vadd.f32 %v3217, %v3240
      %v3257 = vadd.f32 %v3218, %v3240
      %v3258 = vadd.f32 %v3219, %v3240
      %v3259 = vadd.f32 %v3220, %v3240
      %v3260 = vadd.f32 %v3221, %v3240
      %v3261 = vadd.f32 %v3222, %v3240
      %v3262 = vadd.f32 %v3223, %v3240
      %v3263 = vadd.f32 %v3224, %v3240
      %v3264 = vadd.f32 %v3225, %v3240
      %v3265 = vadd.f32 %v3226, %v3240
      %v3266 = vadd.f32 %v3227, %v3240
      %v3267 = vadd.f32 %v3228, %v3240
      %v3268 = vadd.f32 %v3229, %v3240
      %v3269 = vadd.f32 %v3230, %v3240
      %v3270 = vadd.f32 %v3231, %v3240
      %v3271 = vadd.f32 %v3232, %v3240
      %v3272 = vadd.f32 %v3233, %v3240
      %v3273 = vadd.f32 %v3234, %v3240
      %v3274 = vmax.f32 %v3242, 0.0
      %v3275 = vmax.f32 %v3243, 0.0
      %v3276 = vmax.f32 %v3244, 0.0
      %v3277 = vmax.f32 %v3245, 0.0
      %v3278 = vmax.f32 %v3246, 0.0
      %v3279 = vmax.f32 %v3247, 0.0
      %v3280 = vmax.f32 %v3248, 0.0
      %v3281 = vmax.f32 %v3249, 0.0
      %v3282 = vmax.f32 %v3250, 0.0
      %v3283 = vmax.f32 %v3251, 0.0
      %v3284 = vmax.f32 %v3252, 0.0
      %v3285 = vmax.f32 %v3253, 0.0
      %v3286 = vmax.f32 %v3254, 0.0
      %v3287 = vmax.f32 %v3255, 0.0
      %v3288 = vmax.f32 %v3256, 0.0
      %v3289 = vmax.f32 %v3257, 0.0
      %v3290 = vmax.f32 %v3258, 0.0
      %v3291 = vmax.f32 %v3259, 0.0
      %v3292 = vmax.f32 %v3260, 0.0
      %v3293 = vmax.f32 %v3261, 0.0
      %v3294 = vmax.f32 %v3262, 0.0
      %v3295 = vmax.f32 %v3263, 0.0
      %v3296 = vmax.f32 %v3264, 0.0
      %v3297 = vmax.f32 %v3265, 0.0
      %v3298 = vmax.f32 %v3266, 0.0
      %v3299 = vmax.f32 %v3267, 0.0
      %v3300 = vmax.f32 %v3268, 0.0
      %v3301 = vmax.f32 %v3269, 0.0
      %v3302 = vmax.f32 %v3270, 0.0
      %v3303 = vmax.f32 %v3271, 0.0
      %v3304 = vmax.f32 %v3272, 0.0
      %v3305 = vmax.f32 %v3273, 0.0
      %v3306 = vpack.c.bf16 %v3275, %v3274
      %v3307 = vpack.c.bf16 %v3277, %v3276
      %v3308 = vpack.c.bf16 %v3279, %v3278
      %v3309 = vpack.c.bf16 %v3281, %v3280
      %v3310 = vpack.c.bf16 %v3283, %v3282
      %v3311 = vpack.c.bf16 %v3285, %v3284
      %v3312 = vpack.c.bf16 %v3287, %v3286
      %v3313 = vpack.c.bf16 %v3289, %v3288
      %v3314 = vpack.c.bf16 %v3291, %v3290
      %v3315 = vpack.c.bf16 %v3293, %v3292
      %v3316 = vpack.c.bf16 %v3295, %v3294
      %v3317 = vpack.c.bf16 %v3297, %v3296
      %v3318 = vpack.c.bf16 %v3299, %v3298
      %v3319 = vpack.c.bf16 %v3301, %v3300
      %v3320 = vpack.c.bf16 %v3303, %v3302
      %v3321 = vpack.c.bf16 %v3305, %v3304
      %v3338 = vunpack.c.l.b16 %v3306
      %v3339 = vunpack.c.h.b16 %v3306
      %v3340 = vunpack.c.l.b16 %v3307
      %v3341 = vunpack.c.h.b16 %v3307
      %v3342 = vunpack.c.l.b16 %v3308
      %v3343 = vunpack.c.h.b16 %v3308
      %v3344 = vunpack.c.l.b16 %v3309
      %v3345 = vunpack.c.h.b16 %v3309
      %v3346 = vunpack.c.l.b16 %v3310
      %v3347 = vunpack.c.h.b16 %v3310
      %v3348 = vunpack.c.l.b16 %v3311
      %v3349 = vunpack.c.h.b16 %v3311
      %v3350 = vunpack.c.l.b16 %v3312
      %v3351 = vunpack.c.h.b16 %v3312
      %v3352 = vunpack.c.l.b16 %v3313
      %v3353 = vunpack.c.h.b16 %v3313
      %v3354 = vunpack.c.l.b16 %v3314
      %v3355 = vunpack.c.h.b16 %v3314
      %v3356 = vunpack.c.l.b16 %v3315
      %v3357 = vunpack.c.h.b16 %v3315
      %v3358 = vunpack.c.l.b16 %v3316
      %v3359 = vunpack.c.h.b16 %v3316
      %v3360 = vunpack.c.l.b16 %v3317
      %v3361 = vunpack.c.h.b16 %v3317
      %v3362 = vunpack.c.l.b16 %v3318
      %v3363 = vunpack.c.h.b16 %v3318
      %v3364 = vunpack.c.l.b16 %v3319
      %v3365 = vunpack.c.h.b16 %v3319
      %v3366 = vunpack.c.l.b16 %v3320
      %v3367 = vunpack.c.h.b16 %v3320
      %v3368 = vunpack.c.l.b16 %v3321
      %v3369 = vunpack.c.h.b16 %v3321
      %v3370 = vpack.c.b16 %v3338, %v3338
      %v3371 = vpack.c.b16 %v3339, %v3339
      %v3372 = vpack.c.b16 %v3340, %v3340
      %v3373 = vpack.c.b16 %v3341, %v3341
      %v3374 = vpack.c.b16 %v3342, %v3342
      %v3375 = vpack.c.b16 %v3343, %v3343
      %v3376 = vpack.c.b16 %v3344, %v3344
      %v3377 = vpack.c.b16 %v3345, %v3345
      %v3378 = vpack.c.b16 %v3346, %v3346
      %v3379 = vpack.c.b16 %v3347, %v3347
      %v3380 = vpack.c.b16 %v3348, %v3348
      %v3381 = vpack.c.b16 %v3349, %v3349
      %v3382 = vpack.c.b16 %v3350, %v3350
      %v3383 = vpack.c.b16 %v3351, %v3351
      %v3384 = vpack.c.b16 %v3352, %v3352
      %v3385 = vpack.c.b16 %v3353, %v3353
      %v3386 = vpack.c.b16 %v3354, %v3354
      %v3387 = vpack.c.b16 %v3355, %v3355
      %v3388 = vpack.c.b16 %v3356, %v3356
      %v3389 = vpack.c.b16 %v3357, %v3357
      %v3390 = vpack.c.b16 %v3358, %v3358
      %v3391 = vpack.c.b16 %v3359, %v3359
      %v3392 = vpack.c.b16 %v3360, %v3360
      %v3393 = vpack.c.b16 %v3361, %v3361
      %v3394 = vpack.c.b16 %v3362, %v3362
      %v3395 = vpack.c.b16 %v3363, %v3363
      %v3396 = vpack.c.b16 %v3364, %v3364
      %v3397 = vpack.c.b16 %v3365, %v3365
      %v3398 = vpack.c.b16 %v3366, %v3366
      %v3399 = vpack.c.b16 %v3367, %v3367
      %v3400 = vpack.c.b16 %v3368, %v3368
      %v3401 = vpack.c.b16 %v3369, %v3369
      %3434 = vst [vmem:[%s213] sm:$0xf] %v3370
      %3435 = vst [vmem:[%s213 + $0x4] sm:$0xf] %v3371
      %3436 = vst [vmem:[%s213 + $0x8] sm:$0xf] %v3372
      %3437 = vst [vmem:[%s213 + $0xc] sm:$0xf] %v3373
      %3438 = vst [vmem:[%s213 + $0x10] sm:$0xf] %v3374
      %3439 = vst [vmem:[%s213 + $0x14] sm:$0xf] %v3375
      %3440 = vst [vmem:[%s213 + $0x18] sm:$0xf] %v3376
      %3441 = vst [vmem:[%s213 + $0x1c] sm:$0xf] %v3377
      %3442 = vst [vmem:[%s213 + $0x20] sm:$0xf] %v3378
      %3443 = vst [vmem:[%s213 + $0x24] sm:$0xf] %v3379
      %3444 = vst [vmem:[%s213 + $0x28] sm:$0xf] %v3380
      %3445 = vst [vmem:[%s213 + $0x2c] sm:$0xf] %v3381
      %3446 = vst [vmem:[%s213 + $0x30] sm:$0xf] %v3382
      %3447 = vst [vmem:[%s213 + $0x34] sm:$0xf] %v3383
      %3448 = vst [vmem:[%s213 + $0x38] sm:$0xf] %v3384
      %3449 = vst [vmem:[%s213 + $0x3c] sm:$0xf] %v3385
      %3450 = vst [vmem:[%s213 + $0x40] sm:$0xf] %v3386
      %3451 = vst [vmem:[%s213 + $0x44] sm:$0xf] %v3387
      %3452 = vst [vmem:[%s213 + $0x48] sm:$0xf] %v3388
      %3453 = vst [vmem:[%s213 + $0x4c] sm:$0xf] %v3389
      %3454 = vst [vmem:[%s213 + $0x50] sm:$0xf] %v3390
      %3455 = vst [vmem:[%s213 + $0x54] sm:$0xf] %v3391
      %3456 = vst [vmem:[%s213 + $0x58] sm:$0xf] %v3392
      %3457 = vst [vmem:[%s213 + $0x5c] sm:$0xf] %v3393
      %3458 = vst [vmem:[%s213 + $0x60] sm:$0xf] %v3394
      %3459 = vst [vmem:[%s213 + $0x64] sm:$0xf] %v3395
      %3460 = vst [vmem:[%s213 + $0x68] sm:$0xf] %v3396
      %3461 = vst [vmem:[%s213 + $0x6c] sm:$0xf] %v3397
      %3462 = vst [vmem:[%s213 + $0x70] sm:$0xf] %v3398
      %3463 = vst [vmem:[%s213 + $0x74] sm:$0xf] %v3399
      %3464 = vst [vmem:[%s213 + $0x78] sm:$0xf] %v3400
      %3465 = vst [vmem:[%s213 + $0x7c] sm:$0xf] %v3401
      %s3466 = sadd.s32 %s19, %s20
      %s3467 = smul.u32 32, %s3466
      %p3468 = scmp.lt.s32.totalorder %s3467, 63
      %s3469 = scalar_select %p3468, %s3467, 63
      %s3470 = smul.addr %s3469, 4
      %s3471 = scalar_lea.vmem %s4, %s3470
      // Predicated region
      $region37: #{air_bottleneck_forward.7} parent=35 // pred_check
        %p3472 = pneg %p136
      $region38: #{air_bottleneck_forward.7} parent=35 // pred_check_branch
        %3474 = sbr.rel (%p3472) target = $region40
      $region39: #{air_bottleneck_forward.7} parent=35 // pred_region
        %s3475 = sadd.s32 %s19, %s20
        %s3476 = smul.u32 32, %s3475
      $region40: #{air_bottleneck_forward.7} parent=35 // pred_fallthru
        _
    $region36: #{air_bottleneck_forward.7} parent=5 // pred_fallthru
      _
    %p3477 = scmp.le.s32.totalorder 2, %s10
    // Predicated region
    $region41: #{air_bottleneck_forward.7} parent=5 // pred_check
      %p3478 = pneg %p3477
    $region42: #{air_bottleneck_forward.7} parent=5 // pred_check_branch
      %3480 = sbr.rel (%p3478) target = $region44
    $region43: #{air_bottleneck_forward.7} parent=5 // pred_region
      %s3481 = ssub.s32 %s10, 2
      // Predicated region
      $region45: #{air_bottleneck_forward.7} parent=43 // pred_check
        %p3482 = pneg %p142
      $region46: #{air_bottleneck_forward.7} parent=43 // pred_check_branch
        %3484 = sbr.rel (%p3482) target = $region48
      $region47: #{air_bottleneck_forward.7} parent=43 // pred_region
        %s3485 = sadd.s32 %s21, %s22
        %s3486 = smul.u32 32, %s3485
        %p3487 = scmp.lt.s32.totalorder %s3486, 63
        %s3488 = scalar_select %p3487, %s3486, 63
        %s3489 = smul.addr %s3488, 4
        %s3490 = scalar_lea.vmem %s4, %s3489
      $region48: #{air_bottleneck_forward.7} parent=43 // pred_fallthru
        _
    $region44: #{air_bottleneck_forward.7} parent=5 // pred_fallthru
      _
  $region6: #{air_bottleneck_forward.7} parent=0 // loop_footer
    %s14 = sadd.s32 1, %s10
  $region7: #{air_bottleneck_forward.7} parent=0 // loop_footer_branch
    %9 = sbr.rel target = $region3
  $region8: #{air_bottleneck_forward.7} parent=0 // loop_exit
    _

</llo_original>
